<compile_context>
chip_gen: v7x
topology: tpu7x:2x2x1
jax: 0.10.0
libtpu: 0.0.40
codegen_flags: <defaults>
</compile_context>

<pallas_src>
import jax
import jax.numpy as jnp
from jax import lax
from jax.experimental import pallas as pl
from jax.experimental.pallas import tpu as pltpu

LANE = 128


def _round_up(x, m):
    return ((x + m - 1) // m) * m


def _act(y, activ):
    if activ == "relu":
        return jnp.maximum(y, 0.0)
    if activ == "sigmoid":
        return jax.nn.sigmoid(y)
    if activ == "tanh":
        return jnp.tanh(y)
    raise ValueError(f"{activ} activation is not implemented in this kernel")


# --------------------------- fused residual block ---------------------------

def _make_block_kernel(*, H, W, Cp, TH, d, activ, cdtype):
    TH2 = TH + 2 * d          # rows of the conv1 output needed by conv2 (halo)
    TH4 = TH + 4 * d          # rows of padded input needed by conv1

    def kernel(xp_hbm, w1_ref, s1_ref, b1_ref, w2_ref, s2_ref, b2_ref,
               o_ref, xwin, dma_sem):
        n = pl.program_id(0)
        h = pl.program_id(1)
        r0 = h * TH           # first output row of this tile (image coords)

        # Fetch the haloed input window: image rows [r0-2d, r0+TH+2d), i.e.
        # padded rows [r0, r0+TH+4d); columns carry conv1's W padding.
        cp = pltpu.make_async_copy(xp_hbm.at[n, pl.ds(r0, TH4)], xwin, dma_sem)
        cp.start()
        cp.wait()

        def conv3x3(src, w_ref, s_ref, b_ref, rows):
            # src[kh*d + i, kw*d + c, :] is input pixel (i, c) under tap
            # (kh, kw).  Stack the 9 taps on the contraction axis and run a
            # single lane-dense MXU matmul:  (rows*W, 9*Cp) x (9*Cp, Cp).
            taps = [src[kh * d:kh * d + rows, kw * d:kw * d + W, :]
                    for kh in range(3) for kw in range(3)]
            lhs = jnp.concatenate(taps, axis=-1).reshape(rows * W, 9 * Cp)
            acc = jnp.dot(lhs, w_ref[...], preferred_element_type=jnp.float32)
            # Folded eval-mode BN + activation (f32).
            return _act(acc * s_ref[...] + b_ref[...], activ)

        # conv1 + bn1 + act over the TH+2d rows conv2 needs (halo recompute).
        y1 = conv3x3(xwin, w1_ref, s1_ref, b1_ref, TH2)        # (TH2*W, Cp) f32
        # Rows of y1 that fall outside the image are conv2's zero padding.
        flat = lax.broadcasted_iota(jnp.int32, (TH2 * W, 1), 0)
        lo = jnp.maximum(d - r0, 0) * W
        hi = (H - r0 + d) * W
        y1 = jnp.where((flat >= lo) & (flat < hi), y1, 0.0)
        y1 = y1.reshape(TH2, W, Cp).astype(cdtype)
        y1 = jnp.pad(y1, ((0, 0), (d, d), (0, 0)))             # conv2 W padding

        # conv2 + bn2 + act on the TH output rows.
        y2 = conv3x3(y1, w2_ref, s2_ref, b2_ref, TH).reshape(TH, W, Cp)

        # Residual add: the skip tile is already resident in the x window.
        skip = xwin[2 * d:2 * d + TH, d:d + W, :].astype(jnp.float32)
        o_ref[0] = (skip + y2).astype(o_ref.dtype)

    return kernel


def _pick_tile_h(H, W, Cp, d, itemsize, lhs_budget_bytes=4 << 20):
    """Largest divisor of H whose stacked conv1 LHS stays under the budget."""
    best = 1
    for th in range(1, H + 1):
        if H % th:
            continue
        if (th + 2 * d) * W * 9 * Cp * itemsize <= lhs_budget_bytes:
            best = th
    return best


def fused_res_block(x_nhwc, p, *, dilation, activ, tile_h=None):
    """One basicResBlock (two fused conv+BN+act stages + residual add)."""
    N, H, W, Cp = x_nhwc.shape
    d = dilation
    cdtype = x_nhwc.dtype
    if tile_h is None:
        tile_h = _pick_tile_h(H, W, Cp, d, jnp.dtype(cdtype).itemsize)
    assert H % tile_h == 0, f"tile_h={tile_h} must divide H={H}"
    TH = tile_h
    nH = H // TH
    TH4, Wp = TH + 4 * d, W + 2 * d

    # Spatial zero padding once per block (halo + conv padding).
    xp = jnp.pad(x_nhwc, ((0, 0), (2 * d, 2 * d), (d, d), (0, 0)))

    kernel = _make_block_kernel(H=H, W=W, Cp=Cp, TH=TH, d=d,
                                activ=activ, cdtype=cdtype)

    wspec = pl.BlockSpec((9 * Cp, Cp), lambda n, h: (0, 0))   # resident weights
    vspec = pl.BlockSpec((1, Cp), lambda n, h: (0, 0))        # resident BN vecs

    return pl.pallas_call(
        kernel,
        out_shape=jax.ShapeDtypeStruct((N, H, W, Cp), cdtype),
        grid=(N, nH),
        in_specs=[
            pl.BlockSpec(memory_space=pl.ANY),   # padded input stays in HBM
            wspec, vspec, vspec,                 # conv1 weight + folded BN1
            wspec, vspec, vspec,                 # conv2 weight + folded BN2
        ],
        out_specs=pl.BlockSpec((1, TH, W, Cp), lambda n, h: (n, h, 0, 0)),
        scratch_shapes=[
            pltpu.VMEM((TH4, Wp, Cp), cdtype),   # haloed input row-window
            pltpu.SemaphoreType.DMA,
        ],
        compiler_params=pltpu.CompilerParams(
            dimension_semantics=("parallel", "parallel"),
            vmem_limit_bytes=64 * 1024 * 1024,
        ),
    )(xp, p["w1"], p["s1"], p["b1"], p["w2"], p["s2"], p["b2"])


def res_layer(x_nchw, block_params, *, dilation=1, activ="relu", tile_h=None):
    """resLayer forward: numblocks x basicResBlock (NCHW in / NCHW out)."""
    N, C, H, W = x_nchw.shape
    Cp = block_params[0]["w1"].shape[-1]
    cdtype = block_params[0]["w1"].dtype
    x = jnp.transpose(x_nchw, (0, 2, 3, 1))                     # NHWC
    x = jnp.pad(x, ((0, 0), (0, 0), (0, 0), (0, Cp - C))).astype(cdtype)
    for p in block_params:
        x = fused_res_block(x, p, dilation=dilation, activ=activ, tile_h=tile_h)
    return jnp.transpose(x[..., :C].astype(x_nchw.dtype), (0, 3, 1, 2))


# ----------------------- parameter packing / synthesis -----------------------

def _fold_bn(gamma, beta, mean, var, eps=1e-5):
    scale = gamma / jnp.sqrt(var + eps)
    return scale, beta - mean * scale


def _pack_conv(w_oihw, Cp, dtype):
    co, ci, kh, kw = w_oihw.shape
    assert (kh, kw) == (3, 3)
    w = jnp.transpose(w_oihw, (2, 3, 1, 0)).reshape(9, ci, co)   # tap-major
    w = jnp.pad(w, ((0, 0), (0, Cp - ci), (0, Cp - co)))
    return w.reshape(9 * Cp, Cp).astype(dtype)


def _pack_vec(v, Cp):
    return jnp.pad(v, (0, Cp - v.shape[0])).reshape(1, Cp).astype(jnp.float32)


def prepare_block_params(raw_blocks, c_in, c_out, compute_dtype=jnp.bfloat16,
                         eps=1e-5):
    assert c_in == c_out, "residual add requires in_ == out_"
    Cp = _round_up(max(c_out, 1), LANE)
    packed = []
    for p in raw_blocks:
        s1, b1 = _fold_bn(*p["bn1"], eps=eps)
        s2, b2 = _fold_bn(*p["bn2"], eps=eps)
        packed.append(dict(
            w1=_pack_conv(p["w1"], Cp, compute_dtype),
            s1=_pack_vec(s1, Cp), b1=_pack_vec(b1, Cp),
            w2=_pack_conv(p["w2"], Cp, compute_dtype),
            s2=_pack_vec(s2, Cp), b2=_pack_vec(b2, Cp),
        ))
    return packed


def _init_bn(key, c):
    k1, k2, k3, k4 = jax.random.split(key, 4)
    gamma = jax.random.uniform(k1, (c,), jnp.float32, 0.5, 1.5)
    beta = 0.1 * jax.random.normal(k2, (c,), jnp.float32)
    mean = 0.1 * jax.random.normal(k3, (c,), jnp.float32)
    var = jax.random.uniform(k4, (c,), jnp.float32, 0.5, 1.5)
    return gamma, beta, mean, var


def init_res_layer_params(key, c_in, c_out, numblocks):
    assert numblocks > 0
    raw = []
    for _ in range(numblocks):
        key, k1, k2, k3, k4 = jax.random.split(key, 5)
        raw.append(dict(
            w1=0.1 * jax.random.normal(k1, (c_out, c_in, 3, 3), jnp.float32),
            bn1=_init_bn(k2, c_out),
            w2=0.1 * jax.random.normal(k3, (c_out, c_out, 3, 3), jnp.float32),
            bn2=_init_bn(k4, c_out),
        ))
    return raw


# ---------------- pure-JAX reference (for correctness check) ----------------

def _ref_conv(x, w, dilation):
    d = dilation
    return lax.conv_general_dilated(
        x, w, window_strides=(1, 1), padding=[(d, d), (d, d)],
        rhs_dilation=(d, d), dimension_numbers=("NCHW", "OIHW", "NCHW"))


def res_layer_ref(x_nchw, raw_blocks, *, dilation=1,
                  compute_dtype=jnp.float32, eps=1e-5):
    """Eval-mode reference. `compute_dtype` mirrors the kernel's operand
    rounding (bf16 casts) so low-precision runs can be compared tightly."""
    cast = lambda a: a.astype(compute_dtype).astype(jnp.float32)

    def bn(x, params):
        gamma, beta, mean, var = params
        y = (x - mean[None, :, None, None]) / jnp.sqrt(var + eps)[None, :, None, None]
        return y * gamma[None, :, None, None] + beta[None, :, None, None]

    x = cast(x_nchw)
    for p in raw_blocks:
        y = jnp.maximum(bn(_ref_conv(x, cast(p["w1"]), dilation), p["bn1"]), 0.0)
        y = cast(y)
        y = jnp.maximum(bn(_ref_conv(y, cast(p["w2"]), dilation), p["bn2"]), 0.0)
        x = cast(x + y)
    return x


if __name__ == "__main__":
    key = jax.random.PRNGKey(0)
    k_x, k_p = jax.random.split(key)

    N, C, H, W = 2, 8, 16, 16          # in_ == out_ required by the residual add
    numblocks, dilation = 2, 1
    tile_h = 8                         # 2 row tiles per image -> exercises halos

    x = jax.random.normal(k_x, (N, C, H, W), jnp.float32)
    raw = init_res_layer_params(k_p, C, C, numblocks)

    # f32 operands: strict check against the pure-JAX reference.
    p32 = prepare_block_params(raw, C, C, compute_dtype=jnp.float32)
    out32 = jax.block_until_ready(
        res_layer(x, p32, dilation=dilation, activ="relu", tile_h=tile_h))
    ref32 = res_layer_ref(x, raw, dilation=dilation, compute_dtype=jnp.float32)
    assert out32.shape == (N, C, H, W)
    assert jnp.allclose(out32, ref32, atol=2e-4, rtol=2e-4), "f32 mismatch vs reference"

    # bf16 operands (fast path): reference mirrors the bf16 rounding points.
    p16 = prepare_block_params(raw, C, C, compute_dtype=jnp.bfloat16)
    out16 = jax.block_until_ready(
        res_layer(x, p16, dilation=dilation, activ="relu", tile_h=tile_h))
    ref16 = res_layer_ref(x, raw, dilation=dilation, compute_dtype=jnp.bfloat16)
    assert jnp.allclose(out16, ref16, atol=1e-2, rtol=1e-2), "bf16 mismatch vs reference"

    print("KERNEL_OK")
</pallas_src>

<mosaic_0001>
module attributes {stable_mosaic.version = 11 : i64} {
  func.func @kernel(%arg0: i32, %arg1: i32, %arg2: memref<2x20x18x128xf32, #tpu.memory_space<any>>, %arg3: memref<1152x128xf32, #tpu.memory_space<vmem>>, %arg4: memref<1x128xf32, #tpu.memory_space<vmem>>, %arg5: memref<1x128xf32, #tpu.memory_space<vmem>>, %arg6: memref<1152x128xf32, #tpu.memory_space<vmem>>, %arg7: memref<1x128xf32, #tpu.memory_space<vmem>>, %arg8: memref<1x128xf32, #tpu.memory_space<vmem>>, %arg9: memref<1x8x16x128xf32, #tpu.memory_space<vmem>>, %arg10: memref<12x18x128xf32, #tpu.memory_space<vmem>>, %arg11: memref<!tpu.dma_semaphore, #tpu.memory_space<semaphore_mem>>) attributes {dimension_semantics = [#tpu.dimension_semantics<parallel>, #tpu.dimension_semantics<parallel>], iteration_bounds = array<i64: 2, 2>, scalar_prefetch = 0 : i64, scratch_operands = 2 : i64, tpu.core_type = #tpu.core_type<tc>, window_params = [{}, {pipeline_mode = #tpu.pipeline_mode<synchronous>, transform_indices = @transform_1, window_bounds = array<i64: 1152, 128>}, {pipeline_mode = #tpu.pipeline_mode<synchronous>, transform_indices = @transform_2, window_bounds = array<i64: 1, 128>}, {pipeline_mode = #tpu.pipeline_mode<synchronous>, transform_indices = @transform_3, window_bounds = array<i64: 1, 128>}, {pipeline_mode = #tpu.pipeline_mode<synchronous>, transform_indices = @transform_4, window_bounds = array<i64: 1152, 128>}, {pipeline_mode = #tpu.pipeline_mode<synchronous>, transform_indices = @transform_5, window_bounds = array<i64: 1, 128>}, {pipeline_mode = #tpu.pipeline_mode<synchronous>, transform_indices = @transform_6, window_bounds = array<i64: 1, 128>}, {transform_indices = @transform_7, window_bounds = array<i64: 1, 8, 16, 128>}]} {
    %c8_i32 = arith.constant 8 : i32
    %0 = arith.muli %arg1, %c8_i32 : i32
    %c0_i32 = arith.constant 0 : i32
    %c0_i32_0 = arith.constant 0 : i32
    %1 = tpu.memref_slice %arg2[%arg0, %0, %c0_i32, %c0_i32_0] : memref<2x20x18x128xf32, #tpu.memory_space<any>> -> memref<1x12x18x128xf32, #tpu.memory_space<any>>
    %2 = tpu.memref_squeeze %1 : memref<1x12x18x128xf32, #tpu.memory_space<any>> -> memref<12x18x128xf32, #tpu.memory_space<any>>
    tpu.enqueue_dma source(%2 : memref<12x18x128xf32, #tpu.memory_space<any>>) target(%arg10 : memref<12x18x128xf32, #tpu.memory_space<vmem>>) target_semaphore(%arg11 : memref<!tpu.dma_semaphore, #tpu.memory_space<semaphore_mem>>)
    %c0_i32_1 = arith.constant 0 : i32
    %c0_i32_2 = arith.constant 0 : i32
    %3 = tpu.memref_slice %arg2[%arg0, %0, %c0_i32_1, %c0_i32_2] : memref<2x20x18x128xf32, #tpu.memory_space<any>> -> memref<1x12x18x128xf32, #tpu.memory_space<any>>
    %4 = tpu.memref_squeeze %3 : memref<1x12x18x128xf32, #tpu.memory_space<any>> -> memref<12x18x128xf32, #tpu.memory_space<any>>
    tpu.wait_dma2 semaphore(%arg11 : memref<!tpu.dma_semaphore, #tpu.memory_space<semaphore_mem>>) src(%4 : memref<12x18x128xf32, #tpu.memory_space<any>>) dst(%arg10 : memref<12x18x128xf32, #tpu.memory_space<vmem>>)
    %c0 = arith.constant 0 : index
    %c0_3 = arith.constant 0 : index
    %c0_4 = arith.constant 0 : index
    %5 = vector.load %arg10[%c0, %c0_3, %c0_4] : memref<12x18x128xf32, #tpu.memory_space<vmem>>, vector<10x16x128xf32>
    %c0_5 = arith.constant 0 : index
    %c1 = arith.constant 1 : index
    %c0_6 = arith.constant 0 : index
    %6 = vector.load %arg10[%c0_5, %c1, %c0_6] : memref<12x18x128xf32, #tpu.memory_space<vmem>>, vector<10x16x128xf32>
    %c0_7 = arith.constant 0 : index
    %c2 = arith.constant 2 : index
    %c0_8 = arith.constant 0 : index
    %7 = vector.load %arg10[%c0_7, %c2, %c0_8] : memref<12x18x128xf32, #tpu.memory_space<vmem>>, vector<10x16x128xf32>
    %c1_9 = arith.constant 1 : index
    %c0_10 = arith.constant 0 : index
    %c0_11 = arith.constant 0 : index
    %8 = vector.load %arg10[%c1_9, %c0_10, %c0_11] : memref<12x18x128xf32, #tpu.memory_space<vmem>>, vector<10x16x128xf32>
    %c1_12 = arith.constant 1 : index
    %c1_13 = arith.constant 1 : index
    %c0_14 = arith.constant 0 : index
    %9 = vector.load %arg10[%c1_12, %c1_13, %c0_14] : memref<12x18x128xf32, #tpu.memory_space<vmem>>, vector<10x16x128xf32>
    %c1_15 = arith.constant 1 : index
    %c2_16 = arith.constant 2 : index
    %c0_17 = arith.constant 0 : index
    %10 = vector.load %arg10[%c1_15, %c2_16, %c0_17] : memref<12x18x128xf32, #tpu.memory_space<vmem>>, vector<10x16x128xf32>
    %c2_18 = arith.constant 2 : index
    %c0_19 = arith.constant 0 : index
    %c0_20 = arith.constant 0 : index
    %11 = vector.load %arg10[%c2_18, %c0_19, %c0_20] : memref<12x18x128xf32, #tpu.memory_space<vmem>>, vector<10x16x128xf32>
    %c2_21 = arith.constant 2 : index
    %c1_22 = arith.constant 1 : index
    %c0_23 = arith.constant 0 : index
    %12 = vector.load %arg10[%c2_21, %c1_22, %c0_23] : memref<12x18x128xf32, #tpu.memory_space<vmem>>, vector<10x16x128xf32>
    %c2_24 = arith.constant 2 : index
    %c2_25 = arith.constant 2 : index
    %c0_26 = arith.constant 0 : index
    %13 = vector.load %arg10[%c2_24, %c2_25, %c0_26] : memref<12x18x128xf32, #tpu.memory_space<vmem>>, vector<10x16x128xf32>
    %14 = tpu.concatenate %5, %6, %7, %8, %9, %10, %11, %12, %13 in 2 : vector<10x16x128xf32>, vector<10x16x128xf32>, vector<10x16x128xf32>, vector<10x16x128xf32>, vector<10x16x128xf32>, vector<10x16x128xf32>, vector<10x16x128xf32>, vector<10x16x128xf32>, vector<10x16x128xf32> -> vector<10x16x1152xf32>
    %15 = vector.shape_cast %14 : vector<10x16x1152xf32> to vector<160x1152xf32>
    %c0_27 = arith.constant 0 : index
    %c0_28 = arith.constant 0 : index
    %16 = vector.load %arg3[%c0_27, %c0_28] : memref<1152x128xf32, #tpu.memory_space<vmem>>, vector<1152x128xf32>
    %cst = arith.constant dense<0.000000e+00> : vector<160x128xf32>
    %17 = tpu.matmul %15, %16, %cst {dimension_numbers = #tpu.dot_dimension_numbers<[1], [0], [0], [1], [0, 0, 1, 1], [], []>} : vector<160x1152xf32>, vector<1152x128xf32>, vector<160x128xf32> -> vector<160x128xf32>
    %c0_29 = arith.constant 0 : index
    %c0_30 = arith.constant 0 : index
    %18 = vector.load %arg4[%c0_29, %c0_30] : memref<1x128xf32, #tpu.memory_space<vmem>>, vector<1x128xf32>
    %19 = vector.broadcast %18 : vector<1x128xf32> to vector<160x128xf32>
    %20 = arith.mulf %17, %19 : vector<160x128xf32>
    %c0_31 = arith.constant 0 : index
    %c0_32 = arith.constant 0 : index
    %21 = vector.load %arg5[%c0_31, %c0_32] : memref<1x128xf32, #tpu.memory_space<vmem>>, vector<1x128xf32>
    %22 = vector.broadcast %21 : vector<1x128xf32> to vector<160x128xf32>
    %23 = arith.addf %20, %22 : vector<160x128xf32>
    %cst_33 = arith.constant 0.000000e+00 : f32
    %24 = vector.broadcast %cst_33 : f32 to vector<160x128xf32>
    %25 = arith.maximumf %23, %24 : vector<160x128xf32>
    %26 = tpu.iota {dimensions = array<i32: 0>} : vector<160x1xi32>
    %c1_i32 = arith.constant 1 : i32
    %27 = arith.subi %c1_i32, %0 : i32
    %c0_i32_34 = arith.constant 0 : i32
    %28 = arith.maxsi %27, %c0_i32_34 : i32
    %c16_i32 = arith.constant 16 : i32
    %29 = arith.muli %28, %c16_i32 : i32
    %c16_i32_35 = arith.constant 16 : i32
    %30 = arith.subi %c16_i32_35, %0 : i32
    %c1_i32_36 = arith.constant 1 : i32
    %31 = arith.addi %30, %c1_i32_36 : i32
    %c16_i32_37 = arith.constant 16 : i32
    %32 = arith.muli %31, %c16_i32_37 : i32
    %33 = vector.broadcast %29 : i32 to vector<160x1xi32>
    %34 = arith.cmpi sge, %26, %33 : vector<160x1xi32>
    %35 = vector.broadcast %32 : i32 to vector<160x1xi32>
    %36 = arith.cmpi slt, %26, %35 : vector<160x1xi32>
    %37 = arith.andi %34, %36 : vector<160x1xi1>
    %cst_38 = arith.constant 0.000000e+00 : f32
    %38 = vector.shape_cast %37 : vector<160x1xi1> to vector<160x1xi1>
    %39 = vector.broadcast %38 : vector<160x1xi1> to vector<160x128xi1>
    %40 = vector.broadcast %cst_38 : f32 to vector<160x128xf32>
    %41 = arith.select %39, %25, %40 : vector<160x128xi1>, vector<160x128xf32>
    %42 = vector.shape_cast %41 : vector<160x128xf32> to vector<10x16x128xf32>
    %c0_i32_39 = arith.constant 0 : i32
    %43 = arith.sitofp %c0_i32_39 : i32 to f32
    %44 = vector.broadcast %43 : f32 to vector<10x1x128xf32>
    %45 = tpu.concatenate %44, %42 in 1 : vector<10x1x128xf32>, vector<10x16x128xf32> -> vector<10x17x128xf32>
    %46 = vector.broadcast %43 : f32 to vector<10x1x128xf32>
    %47 = tpu.concatenate %45, %46 in 1 : vector<10x17x128xf32>, vector<10x1x128xf32> -> vector<10x18x128xf32>
    %48 = vector.extract_strided_slice %47 {offsets = [0, 0, 0], sizes = [8, 16, 128], strides = [1, 1, 1]} : vector<10x18x128xf32> to vector<8x16x128xf32>
    %49 = vector.extract_strided_slice %47 {offsets = [0, 1, 0], sizes = [8, 16, 128], strides = [1, 1, 1]} : vector<10x18x128xf32> to vector<8x16x128xf32>
    %50 = vector.extract_strided_slice %47 {offsets = [0, 2, 0], sizes = [8, 16, 128], strides = [1, 1, 1]} : vector<10x18x128xf32> to vector<8x16x128xf32>
    %51 = vector.extract_strided_slice %47 {offsets = [1, 0, 0], sizes = [8, 16, 128], strides = [1, 1, 1]} : vector<10x18x128xf32> to vector<8x16x128xf32>
    %52 = vector.extract_strided_slice %47 {offsets = [1, 1, 0], sizes = [8, 16, 128], strides = [1, 1, 1]} : vector<10x18x128xf32> to vector<8x16x128xf32>
    %53 = vector.extract_strided_slice %47 {offsets = [1, 2, 0], sizes = [8, 16, 128], strides = [1, 1, 1]} : vector<10x18x128xf32> to vector<8x16x128xf32>
    %54 = vector.extract_strided_slice %47 {offsets = [2, 0, 0], sizes = [8, 16, 128], strides = [1, 1, 1]} : vector<10x18x128xf32> to vector<8x16x128xf32>
    %55 = vector.extract_strided_slice %47 {offsets = [2, 1, 0], sizes = [8, 16, 128], strides = [1, 1, 1]} : vector<10x18x128xf32> to vector<8x16x128xf32>
    %56 = vector.extract_strided_slice %47 {offsets = [2, 2, 0], sizes = [8, 16, 128], strides = [1, 1, 1]} : vector<10x18x128xf32> to vector<8x16x128xf32>
    %57 = tpu.concatenate %48, %49, %50, %51, %52, %53, %54, %55, %56 in 2 : vector<8x16x128xf32>, vector<8x16x128xf32>, vector<8x16x128xf32>, vector<8x16x128xf32>, vector<8x16x128xf32>, vector<8x16x128xf32>, vector<8x16x128xf32>, vector<8x16x128xf32>, vector<8x16x128xf32> -> vector<8x16x1152xf32>
    %58 = vector.shape_cast %57 : vector<8x16x1152xf32> to vector<128x1152xf32>
    %c0_40 = arith.constant 0 : index
    %c0_41 = arith.constant 0 : index
    %59 = vector.load %arg6[%c0_40, %c0_41] : memref<1152x128xf32, #tpu.memory_space<vmem>>, vector<1152x128xf32>
    %cst_42 = arith.constant dense<0.000000e+00> : vector<128x128xf32>
    %60 = tpu.matmul %58, %59, %cst_42 {dimension_numbers = #tpu.dot_dimension_numbers<[1], [0], [0], [1], [0, 0, 1, 1], [], []>} : vector<128x1152xf32>, vector<1152x128xf32>, vector<128x128xf32> -> vector<128x128xf32>
    %c0_43 = arith.constant 0 : index
    %c0_44 = arith.constant 0 : index
    %61 = vector.load %arg7[%c0_43, %c0_44] : memref<1x128xf32, #tpu.memory_space<vmem>>, vector<1x128xf32>
    %62 = vector.broadcast %61 : vector<1x128xf32> to vector<128x128xf32>
    %63 = arith.mulf %60, %62 : vector<128x128xf32>
    %c0_45 = arith.constant 0 : index
    %c0_46 = arith.constant 0 : index
    %64 = vector.load %arg8[%c0_45, %c0_46] : memref<1x128xf32, #tpu.memory_space<vmem>>, vector<1x128xf32>
    %65 = vector.broadcast %64 : vector<1x128xf32> to vector<128x128xf32>
    %66 = arith.addf %63, %65 : vector<128x128xf32>
    %cst_47 = arith.constant 0.000000e+00 : f32
    %67 = vector.broadcast %cst_47 : f32 to vector<128x128xf32>
    %68 = arith.maximumf %66, %67 : vector<128x128xf32>
    %69 = vector.shape_cast %68 : vector<128x128xf32> to vector<8x16x128xf32>
    %c2_48 = arith.constant 2 : index
    %c1_49 = arith.constant 1 : index
    %c0_50 = arith.constant 0 : index
    %70 = vector.load %arg10[%c2_48, %c1_49, %c0_50] : memref<12x18x128xf32, #tpu.memory_space<vmem>>, vector<8x16x128xf32>
    %71 = arith.addf %70, %69 : vector<8x16x128xf32>
    %c0_51 = arith.constant 0 : index
    %c0_52 = arith.constant 0 : index
    %c0_53 = arith.constant 0 : index
    %c0_54 = arith.constant 0 : index
    %72 = vector.load %arg9[%c0_51, %c0_52, %c0_53, %c0_54] : memref<1x8x16x128xf32, #tpu.memory_space<vmem>>, vector<1x8x16x128xf32>
    %73 = vector.shape_cast %72 : vector<1x8x16x128xf32> to vector<8x16x128xf32>
    %74 = vector.shape_cast %71 : vector<8x16x128xf32> to vector<1x8x16x128xf32>
    tpu.vector_store %arg9[%c0_51, %c0_52, %c0_53, %c0_54], %74 {strides = array<i32>} : memref<1x8x16x128xf32, #tpu.memory_space<vmem>>, vector<1x8x16x128xf32>,
    return
  }
  func.func @transform_1(%arg0: i32, %arg1: i32) -> (i32, i32) {
    %c0_i32 = arith.constant 0 : i32
    %c0_i32_0 = arith.constant 0 : i32
    %c0_i32_1 = arith.constant 0 : i32
    return %c0_i32, %c0_i32_0 : i32, i32
  }
  func.func @transform_2(%arg0: i32, %arg1: i32) -> (i32, i32) {
    %c0_i32 = arith.constant 0 : i32
    %c0_i32_0 = arith.constant 0 : i32
    %c0_i32_1 = arith.constant 0 : i32
    return %c0_i32, %c0_i32_0 : i32, i32
  }
  func.func @transform_3(%arg0: i32, %arg1: i32) -> (i32, i32) {
    %c0_i32 = arith.constant 0 : i32
    %c0_i32_0 = arith.constant 0 : i32
    %c0_i32_1 = arith.constant 0 : i32
    return %c0_i32, %c0_i32_0 : i32, i32
  }
  func.func @transform_4(%arg0: i32, %arg1: i32) -> (i32, i32) {
    %c0_i32 = arith.constant 0 : i32
    %c0_i32_0 = arith.constant 0 : i32
    %c0_i32_1 = arith.constant 0 : i32
    return %c0_i32, %c0_i32_0 : i32, i32
  }
  func.func @transform_5(%arg0: i32, %arg1: i32) -> (i32, i32) {
    %c0_i32 = arith.constant 0 : i32
    %c0_i32_0 = arith.constant 0 : i32
    %c0_i32_1 = arith.constant 0 : i32
    return %c0_i32, %c0_i32_0 : i32, i32
  }
  func.func @transform_6(%arg0: i32, %arg1: i32) -> (i32, i32) {
    %c0_i32 = arith.constant 0 : i32
    %c0_i32_0 = arith.constant 0 : i32
    %c0_i32_1 = arith.constant 0 : i32
    return %c0_i32, %c0_i32_0 : i32, i32
  }
  func.func @transform_7(%arg0: i32, %arg1: i32) -> (i32, i32, i32, i32) {
    %c0_i32 = arith.constant 0 : i32
    %c0_i32_0 = arith.constant 0 : i32
    %c0_i32_1 = arith.constant 0 : i32
    return %arg0, %arg1, %c0_i32, %c0_i32_0 : i32, i32, i32, i32
  }
}

</mosaic_0001>

<llo_original>
// kernel: tpu_custom_call.1
$region0: #{tpu_custom_call.1}
  #allocation0 [shape = 'u32[]', space=smem, size = 0x4, offset = 0x4, fixed_abs, tag = 'smem constant byte address 0x4 - core index']
  #allocation1 [shape = 'u32[144,128]{1,0:T(1,128)}', space=vmem, size = 0x12000, scoped, tag = 'internal scratch']
  #allocation2 [shape = 'f32[12,18,128]{2,1,0:T(8,128)}', space=vmem, size = 0x24000, scoped, tag = 'scratch operand']
  #allocation3 [shape = 's32[1]{0}', space=sflag, size = 0x4, scoped, tag = 'scratch operand']
  #allocation16 [shape = 's32[]', space=sflag, size = 0x4, offset = 0, fixed_abs, tag = 'sflag constant byte address 0x0 - dummy sync flag']
  %s0 = inlined_call_operand.hbm [shape: f32[2,20,18,128], index: 0, kind: input, shape index: {}]
  %s1 = inlined_call_operand.hbm [shape: f32[1152,128], index: 1, kind: input, shape index: {}]
  %s2 = inlined_call_operand.hbm [shape: f32[1,128], index: 2, kind: input, shape index: {}]
  %s3 = inlined_call_operand.hbm [shape: f32[1,128], index: 3, kind: input, shape index: {}]
  %s4 = inlined_call_operand.hbm [shape: f32[1152,128], index: 4, kind: input, shape index: {}]
  %s5 = inlined_call_operand.hbm [shape: f32[1,128], index: 5, kind: input, shape index: {}]
  %s6 = inlined_call_operand.hbm [shape: f32[1,128], index: 6, kind: input, shape index: {}]
  %s7 = inlined_call_operand.hbm [shape: f32[2,16,16,128], index: 7, kind: output, shape index: {}]
  %s8 = sld [smem:[#allocation0]]
  $region81: #{tpu_custom_call.1} parent=0
    _
  %s10 = ssub.s32 1, %s8
  %s11 = scalar_select 0, %s10, %s8
  $region1: #{tpu_custom_call.1} parent=0
    #allocation4 [shape = 'u8[589824]{0}', space=vmem, size = 0x90000, scoped, tag = 'input window, operand 1, single buffered']
    #allocation5 [shape = 's32[2]{0}', space=sflag, size = 0x8, scoped, tag = 'scoped memory for tpu_custom_call.1']
    #allocation6 [shape = 's32[2]{0}', space=sflag, size = 0x8, scoped, tag = 'scoped memory for tpu_custom_call.1']
    #allocation7 [shape = 'u8[512]{0}', space=vmem, size = 0x400, scoped, tag = 'input window, operand 2, single buffered']
    #allocation8 [shape = 's32[1]{0}', space=sflag, size = 0x4, scoped, tag = 'scoped memory for tpu_custom_call.1']
    #allocation9 [shape = 'u8[512]{0}', space=vmem, size = 0x400, scoped, tag = 'input window, operand 3, single buffered']
    #allocation10 [shape = 'u8[589824]{0}', space=vmem, size = 0x90000, scoped, tag = 'input window, operand 4, single buffered']
    #allocation11 [shape = 's32[1]{0}', space=sflag, size = 0x4, scoped, tag = 'scoped memory for tpu_custom_call.1']
    #allocation12 [shape = 'u8[512]{0}', space=vmem, size = 0x400, scoped, tag = 'input window, operand 5, single buffered']
    #allocation13 [shape = 'u8[512]{0}', space=vmem, size = 0x400, scoped, tag = 'input window, operand 6, single buffered']
    #allocation14 [shape = 's32[1]{0}', space=sflag, size = 0x4, scoped, tag = 'scoped memory for tpu_custom_call.1']
    #allocation15 [shape = 'u8[131072]{0}', space=vmem, size = 0x20000, scoped, tag = 'output window, operand 0']
    %12 = vsyncpa [#allocation5], 0
    %13 = vsyncpa [#allocation8], 0
    %14 = vsyncpa [#allocation11], 0
    %15 = vsyncpa [#allocation14], 0
    %16 = vsyncpa [#allocation6], 0
    %s17 = scalar_lea.sflag [#allocation6], 1
    %18 = vsyncpa %s17, 0
    loop: start=0, step=1, limit=6
    $region2: #{tpu_custom_call.1} parent=1 // loop_pre_header
      _
    $region3: #{tpu_custom_call.1} parent=1 // loop_header
      %s20 = sphi 0, %s24
      %p21 = scmp.ge.s32.totalorder %s20, 6
      %s27 = sphi 0, %s39
      %s28 = sphi 0, %s35
      %s29 = sphi 0, %s27
      %s30 = sphi 0, %s28
      %s31 = sphi 0, %s29
      %s32 = sphi 0, %s30
      %s40 = sphi 0, %s40
      %s42 = sphi 0, %s40
      %s43 = sphi 0, %s42
      %s57 = sphi 0, %s43
      %s61 = sphi 0, %s61
      %s63 = sphi 0, %s61
      %s64 = sphi 0, %s63
      %s78 = sphi 0, %s64
      %s82 = sphi 0, %s82
      %s84 = sphi 0, %s82
      %s85 = sphi 0, %s84
      %s99 = sphi 0, %s85
      %s103 = sphi 0, %s103
      %s105 = sphi 0, %s103
      %s106 = sphi 0, %s105
      %s120 = sphi 0, %s106
      %s124 = sphi 0, %s124
      %s126 = sphi 0, %s124
      %s127 = sphi 0, %s126
      %s141 = sphi 0, %s127
      %s145 = sphi 0, %s145
      %s147 = sphi 0, %s145
      %s148 = sphi 0, %s147
      %s162 = sphi 0, %s148
      %s170 = sphi 0, %s172
      %s173 = sphi 0, %s170
      %s174 = sphi 0, %s173
      %s190 = sphi 0, %s174
    $region4: #{tpu_custom_call.1} parent=1 // loop_header_branch
      %23 = sbr.rel (%p21) target = $region8
    $region5: #{tpu_custom_call.1} parent=1 // loop_body
      %s25 = ssub.s32 %s20, 1
      %s26 = ssub.s32 %s20, 2
      %s33 = sadd.s32 1, %s28
      %p34 = scmp.ge.s32.totalorder %s33, 2
      %s35 = scalar_select %p34, 0, %s33
      %s36 = sadd.s32 1, %s27
      %s37 = scalar_select %p34, %s36, %s27
      %p38 = scmp.ge.s32.totalorder %s37, 2
      %s39 = scalar_select %p38, 0, %s37
      %s41 = sadd.s32 %s40, 1
      %p44 = scmp.eq.s32.totalorder %s20, 3
      %p45 = scmp.ne.s32.totalorder %s40, %s42
      %p46 = scmp.eq.s32.totalorder %s20, 0
      %p47 = por %p45, %p46
      %p48 = scmp.ne.s32.totalorder %s40, %s42
      %p49 = scmp.eq.s32.totalorder %s25, 3
      %p50 = por %p48, %p49
      %p51 = scmp.ne.s32.totalorder %s42, %s43
      %p52 = scmp.eq.s32.totalorder %s25, 0
      %p53 = por %p51, %p52
      %p54 = scmp.ne.s32.totalorder %s42, %s43
      %p55 = scmp.eq.s32.totalorder %s26, 3
      %p56 = por %p54, %p55
      %p58 = scmp.ne.s32.totalorder %s43, %s57
      %p59 = scmp.eq.s32.totalorder %s26, 0
      %p60 = por %p58, %p59
      %s62 = sadd.s32 %s61, 1
      %p65 = scmp.eq.s32.totalorder %s20, 3
      %p66 = scmp.ne.s32.totalorder %s61, %s63
      %p67 = scmp.eq.s32.totalorder %s20, 0
      %p68 = por %p66, %p67
      %p69 = scmp.ne.s32.totalorder %s61, %s63
      %p70 = scmp.eq.s32.totalorder %s25, 3
      %p71 = por %p69, %p70
      %p72 = scmp.ne.s32.totalorder %s63, %s64
      %p73 = scmp.eq.s32.totalorder %s25, 0
      %p74 = por %p72, %p73
      %p75 = scmp.ne.s32.totalorder %s63, %s64
      %p76 = scmp.eq.s32.totalorder %s26, 3
      %p77 = por %p75, %p76
      %p79 = scmp.ne.s32.totalorder %s64, %s78
      %p80 = scmp.eq.s32.totalorder %s26, 0
      %p81 = por %p79, %p80
      %s83 = sadd.s32 %s82, 1
      %p86 = scmp.eq.s32.totalorder %s20, 3
      %p87 = scmp.ne.s32.totalorder %s82, %s84
      %p88 = scmp.eq.s32.totalorder %s20, 0
      %p89 = por %p87, %p88
      %p90 = scmp.ne.s32.totalorder %s82, %s84
      %p91 = scmp.eq.s32.totalorder %s25, 3
      %p92 = por %p90, %p91
      %p93 = scmp.ne.s32.totalorder %s84, %s85
      %p94 = scmp.eq.s32.totalorder %s25, 0
      %p95 = por %p93, %p94
      %p96 = scmp.ne.s32.totalorder %s84, %s85
      %p97 = scmp.eq.s32.totalorder %s26, 3
      %p98 = por %p96, %p97
      %p100 = scmp.ne.s32.totalorder %s85, %s99
      %p101 = scmp.eq.s32.totalorder %s26, 0
      %p102 = por %p100, %p101
      %s104 = sadd.s32 %s103, 1
      %p107 = scmp.eq.s32.totalorder %s20, 3
      %p108 = scmp.ne.s32.totalorder %s103, %s105
      %p109 = scmp.eq.s32.totalorder %s20, 0
      %p110 = por %p108, %p109
      %p111 = scmp.ne.s32.totalorder %s103, %s105
      %p112 = scmp.eq.s32.totalorder %s25, 3
      %p113 = por %p111, %p112
      %p114 = scmp.ne.s32.totalorder %s105, %s106
      %p115 = scmp.eq.s32.totalorder %s25, 0
      %p116 = por %p114, %p115
      %p117 = scmp.ne.s32.totalorder %s105, %s106
      %p118 = scmp.eq.s32.totalorder %s26, 3
      %p119 = por %p117, %p118
      %p121 = scmp.ne.s32.totalorder %s106, %s120
      %p122 = scmp.eq.s32.totalorder %s26, 0
      %p123 = por %p121, %p122
      %s125 = sadd.s32 %s124, 1
      %p128 = scmp.eq.s32.totalorder %s20, 3
      %p129 = scmp.ne.s32.totalorder %s124, %s126
      %p130 = scmp.eq.s32.totalorder %s20, 0
      %p131 = por %p129, %p130
      %p132 = scmp.ne.s32.totalorder %s124, %s126
      %p133 = scmp.eq.s32.totalorder %s25, 3
      %p134 = por %p132, %p133
      %p135 = scmp.ne.s32.totalorder %s126, %s127
      %p136 = scmp.eq.s32.totalorder %s25, 0
      %p137 = por %p135, %p136
      %p138 = scmp.ne.s32.totalorder %s126, %s127
      %p139 = scmp.eq.s32.totalorder %s26, 3
      %p140 = por %p138, %p139
      %p142 = scmp.ne.s32.totalorder %s127, %s141
      %p143 = scmp.eq.s32.totalorder %s26, 0
      %p144 = por %p142, %p143
      %s146 = sadd.s32 %s145, 1
      %p149 = scmp.eq.s32.totalorder %s20, 3
      %p150 = scmp.ne.s32.totalorder %s145, %s147
      %p151 = scmp.eq.s32.totalorder %s20, 0
      %p152 = por %p150, %p151
      %p153 = scmp.ne.s32.totalorder %s145, %s147
      %p154 = scmp.eq.s32.totalorder %s25, 3
      %p155 = por %p153, %p154
      %p156 = scmp.ne.s32.totalorder %s147, %s148
      %p157 = scmp.eq.s32.totalorder %s25, 0
      %p158 = por %p156, %p157
      %p159 = scmp.ne.s32.totalorder %s147, %s148
      %p160 = scmp.eq.s32.totalorder %s26, 3
      %p161 = por %p159, %p160
      %p163 = scmp.ne.s32.totalorder %s148, %s162
      %p164 = scmp.eq.s32.totalorder %s26, 0
      %p165 = por %p163, %p164
      %s166 = ssub.s32 %s27, %s39
      %s167 = ssub.s32 %s28, %s35
      %s168 = sor.u32 %s166, %s167
      %p169 = scmp.eq.s32.totalorder %s168, 0
      %s171 = sadd.s32 %s170, 1
      %s172 = scalar_select %p169, %s170, %s171
      %p175 = pneg %p169
      %p176 = scmp.eq.s32.totalorder %s20, 3
      %p177 = por %p175, %p176
      %p178 = scmp.ne.s32.totalorder %s170, %s173
      %p179 = scmp.eq.s32.totalorder %s20, 0
      %p180 = por %p178, %p179
      %p181 = scmp.ne.s32.totalorder %s170, %s173
      %p182 = scmp.eq.s32.totalorder %s25, 3
      %p183 = por %p181, %p182
      %p184 = scmp.ne.s32.totalorder %s173, %s174
      %p185 = scmp.eq.s32.totalorder %s25, 0
      %p186 = por %p184, %p185
      %p187 = scmp.ne.s32.totalorder %s173, %s174
      %p188 = scmp.eq.s32.totalorder %s26, 3
      %p189 = por %p187, %p188
      %p191 = scmp.ne.s32.totalorder %s174, %s190
      %p192 = scmp.eq.s32.totalorder %s26, 0
      %p193 = por %p191, %p192
      %p194 = scmp.le.s32.totalorder 1, %s20
      %p195 = scmp.lt.s32.totalorder %s20, 5
      %p196 = pnand %p194, %p195
      %p197 = pneg %p196
      // Predicated region
      $region9: #{tpu_custom_call.1} parent=5 // pred_check
        _
      $region10: #{tpu_custom_call.1} parent=5 // pred_check_branch
        %199 = sbr.rel (%p196) target = $region12
      $region11: #{tpu_custom_call.1} parent=5 // pred_region
        %s200 = ssub.s32 %s20, 1
        // Predicated region
        $region13: #{tpu_custom_call.1} parent=11 // pred_check
          %p201 = pneg %p53
        $region14: #{tpu_custom_call.1} parent=11 // pred_check_branch
          %203 = sbr.rel (%p201) target = $region16
        $region15: #{tpu_custom_call.1} parent=11 // pred_region
          %s205 = ssub.s32 18432, 18432
          %206 = vsyncadd [#allocation5], %s205
          %s207 = sshll.u32 [#allocation4], 4
          %s208 = int_to_ptr.vmem [resolvable:$true] %s207
          %213 = dma.hbm_to_vmem [thread:$0]  %s1, 18432, %s208, [#allocation5], 128, 128, 8
        $region16: #{tpu_custom_call.1} parent=11 // pred_fallthru
          _
        // Predicated region
        $region17: #{tpu_custom_call.1} parent=11 // pred_check
          %p214 = pneg %p74
        $region18: #{tpu_custom_call.1} parent=11 // pred_check_branch
          %216 = sbr.rel (%p214) target = $region20
        $region19: #{tpu_custom_call.1} parent=11 // pred_region
          %s218 = ssub.s32 16, 16
          %219 = vsyncadd [#allocation8], %s218
          %s221 = sshll.u32 [#allocation7], 4
          %s222 = int_to_ptr.vmem [resolvable:$true] %s221
          %224 = dma.hbm_to_vmem [thread:$0]  %s2, 16, %s222, [#allocation8]
        $region20: #{tpu_custom_call.1} parent=11 // pred_fallthru
          _
        // Predicated region
        $region21: #{tpu_custom_call.1} parent=11 // pred_check
          %p225 = pneg %p95
        $region22: #{tpu_custom_call.1} parent=11 // pred_check_branch
          %227 = sbr.rel (%p225) target = $region24
        $region23: #{tpu_custom_call.1} parent=11 // pred_region
          %s229 = ssub.s32 16, 16
          %230 = vsyncadd [#allocation8], %s229
          %s232 = sshll.u32 [#allocation9], 4
          %s233 = int_to_ptr.vmem [resolvable:$true] %s232
          %235 = dma.hbm_to_vmem [thread:$0]  %s3, 16, %s233, [#allocation8]
        $region24: #{tpu_custom_call.1} parent=11 // pred_fallthru
          _
        // Predicated region
        $region25: #{tpu_custom_call.1} parent=11 // pred_check
          %p236 = pneg %p116
        $region26: #{tpu_custom_call.1} parent=11 // pred_check_branch
          %238 = sbr.rel (%p236) target = $region28
        $region27: #{tpu_custom_call.1} parent=11 // pred_region
          %s240 = ssub.s32 18432, 18432
          %241 = vsyncadd [#allocation11], %s240
          %s242 = sshll.u32 [#allocation10], 4
          %s243 = int_to_ptr.vmem [resolvable:$true] %s242
          %248 = dma.hbm_to_vmem [thread:$0]  %s4, 18432, %s243, [#allocation11], 128, 128, 8
        $region28: #{tpu_custom_call.1} parent=11 // pred_fallthru
          _
        // Predicated region
        $region29: #{tpu_custom_call.1} parent=11 // pred_check
          %p249 = pneg %p137
        $region30: #{tpu_custom_call.1} parent=11 // pred_check_branch
          %251 = sbr.rel (%p249) target = $region32
        $region31: #{tpu_custom_call.1} parent=11 // pred_region
          %s253 = ssub.s32 16, 16
          %254 = vsyncadd [#allocation11], %s253
          %s256 = sshll.u32 [#allocation12], 4
          %s257 = int_to_ptr.vmem [resolvable:$true] %s256
          %259 = dma.hbm_to_vmem [thread:$0]  %s5, 16, %s257, [#allocation11]
        $region32: #{tpu_custom_call.1} parent=11 // pred_fallthru
          _
        // Predicated region
        $region33: #{tpu_custom_call.1} parent=11 // pred_check
          %p260 = pneg %p158
        $region34: #{tpu_custom_call.1} parent=11 // pred_check_branch
          %262 = sbr.rel (%p260) target = $region36
        $region35: #{tpu_custom_call.1} parent=11 // pred_region
          %s264 = ssub.s32 16, 16
          %265 = vsyncadd [#allocation14], %s264
          %s267 = sshll.u32 [#allocation13], 4
          %s268 = int_to_ptr.vmem [resolvable:$true] %s267
          %270 = dma.hbm_to_vmem [thread:$0]  %s6, 16, %s268, [#allocation14]
        $region36: #{tpu_custom_call.1} parent=11 // pred_fallthru
          _
      $region12: #{tpu_custom_call.1} parent=5 // pred_fallthru
        _
      %p271 = scmp.lt.s32.totalorder %s20, 4
      // Predicated region
      $region37: #{tpu_custom_call.1} parent=5 // pred_check
        %p272 = pneg %p271
      $region38: #{tpu_custom_call.1} parent=5 // pred_check_branch
        %274 = sbr.rel (%p272) target = $region40
      $region39: #{tpu_custom_call.1} parent=5 // pred_region
        _
      $region40: #{tpu_custom_call.1} parent=5 // pred_fallthru
        _
      %p275 = scmp.le.s32.totalorder 1, %s20
      %p276 = scmp.lt.s32.totalorder %s20, 5
      %p277 = pnand %p275, %p276
      %p278 = pneg %p277
      // Predicated region
      $region41: #{tpu_custom_call.1} parent=5 // pred_check
        _
      $region42: #{tpu_custom_call.1} parent=5 // pred_check_branch
        %280 = sbr.rel (%p277) target = $region44
      $region43: #{tpu_custom_call.1} parent=5 // pred_region
        %s281 = ssub.s32 %s20, 1
        // Predicated region
        $region45: #{tpu_custom_call.1} parent=43 // pred_check
          %p282 = pneg %p53
        $region46: #{tpu_custom_call.1} parent=43 // pred_check_branch
          %284 = sbr.rel (%p282) target = $region48
        $region47: #{tpu_custom_call.1} parent=43 // pred_region
          %285 = dma.done [#allocation5], 18432
        $region48: #{tpu_custom_call.1} parent=43 // pred_fallthru
          _
        // Predicated region
        $region49: #{tpu_custom_call.1} parent=43 // pred_check
          %p286 = pneg %p74
        $region50: #{tpu_custom_call.1} parent=43 // pred_check_branch
          %288 = sbr.rel (%p286) target = $region52
        $region51: #{tpu_custom_call.1} parent=43 // pred_region
          %289 = dma.done [#allocation8], 16
        $region52: #{tpu_custom_call.1} parent=43 // pred_fallthru
          _
        // Predicated region
        $region53: #{tpu_custom_call.1} parent=43 // pred_check
          %p290 = pneg %p95
        $region54: #{tpu_custom_call.1} parent=43 // pred_check_branch
          %292 = sbr.rel (%p290) target = $region56
        $region55: #{tpu_custom_call.1} parent=43 // pred_region
          %293 = dma.done [#allocation8], 16
        $region56: #{tpu_custom_call.1} parent=43 // pred_fallthru
          _
        // Predicated region
        $region57: #{tpu_custom_call.1} parent=43 // pred_check
          %p294 = pneg %p116
        $region58: #{tpu_custom_call.1} parent=43 // pred_check_branch
          %296 = sbr.rel (%p294) target = $region60
        $region59: #{tpu_custom_call.1} parent=43 // pred_region
          %297 = dma.done [#allocation11], 18432
        $region60: #{tpu_custom_call.1} parent=43 // pred_fallthru
          _
        // Predicated region
        $region61: #{tpu_custom_call.1} parent=43 // pred_check
          %p298 = pneg %p137
        $region62: #{tpu_custom_call.1} parent=43 // pred_check_branch
          %300 = sbr.rel (%p298) target = $region64
        $region63: #{tpu_custom_call.1} parent=43 // pred_region
          %301 = dma.done [#allocation11], 16
        $region64: #{tpu_custom_call.1} parent=43 // pred_fallthru
          _
        // Predicated region
        $region65: #{tpu_custom_call.1} parent=43 // pred_check
          %p302 = pneg %p158
        $region66: #{tpu_custom_call.1} parent=43 // pred_check_branch
          %304 = sbr.rel (%p302) target = $region68
        $region67: #{tpu_custom_call.1} parent=43 // pred_region
          %305 = dma.done [#allocation14], 16
        $region68: #{tpu_custom_call.1} parent=43 // pred_fallthru
          _
        %p306 = pneg %p53
        %p307 = pneg %p50
        %p308 = pneg %p74
        %p309 = pneg %p71
        %p310 = pneg %p95
        %p311 = pneg %p92
        %p312 = pneg %p116
        %p313 = pneg %p113
        %p314 = pneg %p137
        %p315 = pneg %p134
        %p316 = pneg %p158
        %p317 = pneg %p155
        %p318 = pneg %p186
        %p319 = pneg %p183
        %s320 = sand.u32 %s173, 1
        %s321 = scalar_lea.sflag [#allocation6], %s320
        %s322 = sand.u32 %s173, 1
        %s323 = smul.addr %s322, 128
        %s324 = scalar_lea.vmem [#allocation15], %s323
        %s325 = smul.u32 8, %s30
        %s326 = smul.u32 %s30, 8
        %s327 = smul.u32 %s326, 24
        %s328 = smul.u32 %s29, 480
        %s329 = sadd.s32 %s327, %s328
        %s330 = smul.addr %s329, 16
        %s331 = scalar_lea.hbm %s0, %s330
        %s333 = sshll.u32 [#allocation2], 4
        %s334 = int_to_ptr.vmem [resolvable:$true] %s333
        %336 = dma.hbm_to_vmem [thread:$0]  %s331, 3456, %s334, [#allocation3], 384, 384, 18
        %s337 = smul.u32 12, 18
        %s338 = smul.u32 %s337, 1
        %s339 = sshll.u32 %s338, 4
        %340 = dma.done [#allocation3], %s339
        %v341 = vld [vmem:[#allocation2] sm:$0xff]
        %v342 = vld [vmem:[#allocation2 + $0x8] sm:$0xff]
        %v343 = vld [vmem:[#allocation2 + $0x18] sm:$0xff]
        %v344 = vld [vmem:[#allocation2 + $0x20] sm:$0xff]
        %v345 = vld [vmem:[#allocation2 + $0x30] sm:$0xff]
        %v346 = vld [vmem:[#allocation2 + $0x38] sm:$0xff]
        %v347 = vld [vmem:[#allocation2 + $0x48] sm:$0xff]
        %v348 = vld [vmem:[#allocation2 + $0x50] sm:$0xff]
        %v349 = vld [vmem:[#allocation2 + $0x60] sm:$0xff]
        %v350 = vld [vmem:[#allocation2 + $0x68] sm:$0xff]
        %v351 = vld [vmem:[#allocation2 + $0x78] sm:$0xff]
        %v352 = vld [vmem:[#allocation2 + $0x80] sm:$0xff]
        %v353 = vld [vmem:[#allocation2 + $0x90] sm:$0xff]
        %v354 = vld [vmem:[#allocation2 + $0x98] sm:$0xff]
        %v355 = vld [vmem:[#allocation2 + $0xa8] sm:$0xff]
        %v356 = vld [vmem:[#allocation2 + $0xb0] sm:$0xff]
        %v357 = vld [vmem:[#allocation2 + $0xc0] sm:$0xff]
        %v358 = vld [vmem:[#allocation2 + $0xc8] sm:$0xff]
        %v359 = vld [vmem:[#allocation2 + $0xd8] sm:$0xff]
        %v360 = vld [vmem:[#allocation2 + $0xe0] sm:$0xff]
        %v361 = vld [vmem:[#allocation2 + $0x1] sm:$0xff]
        %v362 = vld [vmem:[#allocation2 + $0x9] sm:$0xff]
        %v363 = vld [vmem:[#allocation2 + $0x19] sm:$0xff]
        %v364 = vld [vmem:[#allocation2 + $0x21] sm:$0xff]
        %v365 = vld [vmem:[#allocation2 + $0x31] sm:$0xff]
        %v366 = vld [vmem:[#allocation2 + $0x39] sm:$0xff]
        %v367 = vld [vmem:[#allocation2 + $0x49] sm:$0xff]
        %v368 = vld [vmem:[#allocation2 + $0x51] sm:$0xff]
        %v369 = vld [vmem:[#allocation2 + $0x61] sm:$0xff]
        %v370 = vld [vmem:[#allocation2 + $0x69] sm:$0xff]
        %v371 = vld [vmem:[#allocation2 + $0x79] sm:$0xff]
        %v372 = vld [vmem:[#allocation2 + $0x81] sm:$0xff]
        %v373 = vld [vmem:[#allocation2 + $0x91] sm:$0xff]
        %v374 = vld [vmem:[#allocation2 + $0x99] sm:$0xff]
        %v375 = vld [vmem:[#allocation2 + $0xa9] sm:$0xff]
        %v376 = vld [vmem:[#allocation2 + $0xb1] sm:$0xff]
        %v377 = vld [vmem:[#allocation2 + $0xc1] sm:$0xff]
        %v378 = vld [vmem:[#allocation2 + $0xc9] sm:$0xff]
        %v379 = vld [vmem:[#allocation2 + $0xd9] sm:$0xff]
        %v380 = vld [vmem:[#allocation2 + $0xe1] sm:$0xff]
        %v381 = vld [vmem:[#allocation2 + $0x2] sm:$0xff]
        %v382 = vld [vmem:[#allocation2 + $0xa] sm:$0xff]
        %v383 = vld [vmem:[#allocation2 + $0x1a] sm:$0xff]
        %v384 = vld [vmem:[#allocation2 + $0x22] sm:$0xff]
        %v385 = vld [vmem:[#allocation2 + $0x32] sm:$0xff]
        %v386 = vld [vmem:[#allocation2 + $0x3a] sm:$0xff]
        %v387 = vld [vmem:[#allocation2 + $0x4a] sm:$0xff]
        %v388 = vld [vmem:[#allocation2 + $0x52] sm:$0xff]
        %v389 = vld [vmem:[#allocation2 + $0x62] sm:$0xff]
        %v390 = vld [vmem:[#allocation2 + $0x6a] sm:$0xff]
        %v391 = vld [vmem:[#allocation2 + $0x7a] sm:$0xff]
        %v392 = vld [vmem:[#allocation2 + $0x82] sm:$0xff]
        %v393 = vld [vmem:[#allocation2 + $0x92] sm:$0xff]
        %v394 = vld [vmem:[#allocation2 + $0x9a] sm:$0xff]
        %v395 = vld [vmem:[#allocation2 + $0xaa] sm:$0xff]
        %v396 = vld [vmem:[#allocation2 + $0xb2] sm:$0xff]
        %v397 = vld [vmem:[#allocation2 + $0xc2] sm:$0xff]
        %v398 = vld [vmem:[#allocation2 + $0xca] sm:$0xff]
        %v399 = vld [vmem:[#allocation2 + $0xda] sm:$0xff]
        %v400 = vld [vmem:[#allocation2 + $0xe2] sm:$0xff]
        %s401 = scalar_lea.vmem [#allocation2], 24
        %v402 = vld [vmem:[%s401] sm:$0xff]
        %v403 = vld [vmem:[%s401 + $0x8] sm:$0xff]
        %v404 = vld [vmem:[%s401 + $0x18] sm:$0xff]
        %v405 = vld [vmem:[%s401 + $0x20] sm:$0xff]
        %v406 = vld [vmem:[%s401 + $0x30] sm:$0xff]
        %v407 = vld [vmem:[%s401 + $0x38] sm:$0xff]
        %v408 = vld [vmem:[%s401 + $0x48] sm:$0xff]
        %v409 = vld [vmem:[%s401 + $0x50] sm:$0xff]
        %v410 = vld [vmem:[%s401 + $0x60] sm:$0xff]
        %v411 = vld [vmem:[%s401 + $0x68] sm:$0xff]
        %v412 = vld [vmem:[%s401 + $0x78] sm:$0xff]
        %v413 = vld [vmem:[%s401 + $0x80] sm:$0xff]
        %v414 = vld [vmem:[%s401 + $0x90] sm:$0xff]
        %v415 = vld [vmem:[%s401 + $0x98] sm:$0xff]
        %v416 = vld [vmem:[%s401 + $0xa8] sm:$0xff]
        %v417 = vld [vmem:[%s401 + $0xb0] sm:$0xff]
        %v418 = vld [vmem:[%s401 + $0xc0] sm:$0xff]
        %v419 = vld [vmem:[%s401 + $0xc8] sm:$0xff]
        %v420 = vld [vmem:[%s401 + $0xd8] sm:$0xff]
        %v421 = vld [vmem:[%s401 + $0xe0] sm:$0xff]
        %v422 = vld [vmem:[%s401 + $0x1] sm:$0xff]
        %v423 = vld [vmem:[%s401 + $0x9] sm:$0xff]
        %v424 = vld [vmem:[%s401 + $0x19] sm:$0xff]
        %v425 = vld [vmem:[%s401 + $0x21] sm:$0xff]
        %v426 = vld [vmem:[%s401 + $0x31] sm:$0xff]
        %v427 = vld [vmem:[%s401 + $0x39] sm:$0xff]
        %v428 = vld [vmem:[%s401 + $0x49] sm:$0xff]
        %v429 = vld [vmem:[%s401 + $0x51] sm:$0xff]
        %v430 = vld [vmem:[%s401 + $0x61] sm:$0xff]
        %v431 = vld [vmem:[%s401 + $0x69] sm:$0xff]
        %v432 = vld [vmem:[%s401 + $0x79] sm:$0xff]
        %v433 = vld [vmem:[%s401 + $0x81] sm:$0xff]
        %v434 = vld [vmem:[%s401 + $0x91] sm:$0xff]
        %v435 = vld [vmem:[%s401 + $0x99] sm:$0xff]
        %v436 = vld [vmem:[%s401 + $0xa9] sm:$0xff]
        %v437 = vld [vmem:[%s401 + $0xb1] sm:$0xff]
        %v438 = vld [vmem:[%s401 + $0xc1] sm:$0xff]
        %v439 = vld [vmem:[%s401 + $0xc9] sm:$0xff]
        %v440 = vld [vmem:[%s401 + $0xd9] sm:$0xff]
        %v441 = vld [vmem:[%s401 + $0xe1] sm:$0xff]
        %v442 = vld [vmem:[%s401 + $0x2] sm:$0xff]
        %v443 = vld [vmem:[%s401 + $0xa] sm:$0xff]
        %v444 = vld [vmem:[%s401 + $0x1a] sm:$0xff]
        %v445 = vld [vmem:[%s401 + $0x22] sm:$0xff]
        %v446 = vld [vmem:[%s401 + $0x32] sm:$0xff]
        %v447 = vld [vmem:[%s401 + $0x3a] sm:$0xff]
        %v448 = vld [vmem:[%s401 + $0x4a] sm:$0xff]
        %v449 = vld [vmem:[%s401 + $0x52] sm:$0xff]
        %v450 = vld [vmem:[%s401 + $0x62] sm:$0xff]
        %v451 = vld [vmem:[%s401 + $0x6a] sm:$0xff]
        %v452 = vld [vmem:[%s401 + $0x7a] sm:$0xff]
        %v453 = vld [vmem:[%s401 + $0x82] sm:$0xff]
        %v454 = vld [vmem:[%s401 + $0x92] sm:$0xff]
        %v455 = vld [vmem:[%s401 + $0x9a] sm:$0xff]
        %v456 = vld [vmem:[%s401 + $0xaa] sm:$0xff]
        %v457 = vld [vmem:[%s401 + $0xb2] sm:$0xff]
        %v458 = vld [vmem:[%s401 + $0xc2] sm:$0xff]
        %v459 = vld [vmem:[%s401 + $0xca] sm:$0xff]
        %v460 = vld [vmem:[%s401 + $0xda] sm:$0xff]
        %v461 = vld [vmem:[%s401 + $0xe2] sm:$0xff]
        %s462 = scalar_lea.vmem [#allocation2], 48
        %v463 = vld [vmem:[%s462] sm:$0xff]
        %v464 = vld [vmem:[%s462 + $0x8] sm:$0xff]
        %v465 = vld [vmem:[%s462 + $0x18] sm:$0xff]
        %v466 = vld [vmem:[%s462 + $0x20] sm:$0xff]
        %v467 = vld [vmem:[%s462 + $0x30] sm:$0xff]
        %v468 = vld [vmem:[%s462 + $0x38] sm:$0xff]
        %v469 = vld [vmem:[%s462 + $0x48] sm:$0xff]
        %v470 = vld [vmem:[%s462 + $0x50] sm:$0xff]
        %v471 = vld [vmem:[%s462 + $0x60] sm:$0xff]
        %v472 = vld [vmem:[%s462 + $0x68] sm:$0xff]
        %v473 = vld [vmem:[%s462 + $0x78] sm:$0xff]
        %v474 = vld [vmem:[%s462 + $0x80] sm:$0xff]
        %v475 = vld [vmem:[%s462 + $0x90] sm:$0xff]
        %v476 = vld [vmem:[%s462 + $0x98] sm:$0xff]
        %v477 = vld [vmem:[%s462 + $0xa8] sm:$0xff]
        %v478 = vld [vmem:[%s462 + $0xb0] sm:$0xff]
        %v479 = vld [vmem:[%s462 + $0xc0] sm:$0xff]
        %v480 = vld [vmem:[%s462 + $0xc8] sm:$0xff]
        %v481 = vld [vmem:[%s462 + $0xd8] sm:$0xff]
        %v482 = vld [vmem:[%s462 + $0xe0] sm:$0xff]
        %v483 = vld [vmem:[%s462 + $0x1] sm:$0xff]
        %v484 = vld [vmem:[%s462 + $0x9] sm:$0xff]
        %v485 = vld [vmem:[%s462 + $0x19] sm:$0xff]
        %v486 = vld [vmem:[%s462 + $0x21] sm:$0xff]
        %v487 = vld [vmem:[%s462 + $0x31] sm:$0xff]
        %v488 = vld [vmem:[%s462 + $0x39] sm:$0xff]
        %v489 = vld [vmem:[%s462 + $0x49] sm:$0xff]
        %v490 = vld [vmem:[%s462 + $0x51] sm:$0xff]
        %v491 = vld [vmem:[%s462 + $0x61] sm:$0xff]
        %v492 = vld [vmem:[%s462 + $0x69] sm:$0xff]
        %v493 = vld [vmem:[%s462 + $0x79] sm:$0xff]
        %v494 = vld [vmem:[%s462 + $0x81] sm:$0xff]
        %v495 = vld [vmem:[%s462 + $0x91] sm:$0xff]
        %v496 = vld [vmem:[%s462 + $0x99] sm:$0xff]
        %v497 = vld [vmem:[%s462 + $0xa9] sm:$0xff]
        %v498 = vld [vmem:[%s462 + $0xb1] sm:$0xff]
        %v499 = vld [vmem:[%s462 + $0xc1] sm:$0xff]
        %v500 = vld [vmem:[%s462 + $0xc9] sm:$0xff]
        %v501 = vld [vmem:[%s462 + $0xd9] sm:$0xff]
        %v502 = vld [vmem:[%s462 + $0xe1] sm:$0xff]
        %v503 = vld [vmem:[%s462 + $0x2] sm:$0xff]
        %v504 = vld [vmem:[%s462 + $0xa] sm:$0xff]
        %v505 = vld [vmem:[%s462 + $0x1a] sm:$0xff]
        %v506 = vld [vmem:[%s462 + $0x22] sm:$0xff]
        %v507 = vld [vmem:[%s462 + $0x32] sm:$0xff]
        %v508 = vld [vmem:[%s462 + $0x3a] sm:$0xff]
        %v509 = vld [vmem:[%s462 + $0x4a] sm:$0xff]
        %v510 = vld [vmem:[%s462 + $0x52] sm:$0xff]
        %v511 = vld [vmem:[%s462 + $0x62] sm:$0xff]
        %v512 = vld [vmem:[%s462 + $0x6a] sm:$0xff]
        %v513 = vld [vmem:[%s462 + $0x7a] sm:$0xff]
        %v514 = vld [vmem:[%s462 + $0x82] sm:$0xff]
        %v515 = vld [vmem:[%s462 + $0x92] sm:$0xff]
        %v516 = vld [vmem:[%s462 + $0x9a] sm:$0xff]
        %v517 = vld [vmem:[%s462 + $0xaa] sm:$0xff]
        %v518 = vld [vmem:[%s462 + $0xb2] sm:$0xff]
        %v519 = vld [vmem:[%s462 + $0xc2] sm:$0xff]
        %v520 = vld [vmem:[%s462 + $0xca] sm:$0xff]
        %v521 = vld [vmem:[%s462 + $0xda] sm:$0xff]
        %v522 = vld [vmem:[%s462 + $0xe2] sm:$0xff]
        %v523 = vld [vmem:[#allocation4] sm:$0xff]
        %v524 = vld [vmem:[#allocation4 + $0x8] sm:$0xff]
        %v525 = vld [vmem:[#allocation4 + $0x10] sm:$0xff]
        %v526 = vld [vmem:[#allocation4 + $0x18] sm:$0xff]
        %v527 = vld [vmem:[#allocation4 + $0x20] sm:$0xff]
        %v528 = vld [vmem:[#allocation4 + $0x28] sm:$0xff]
        %v529 = vld [vmem:[#allocation4 + $0x30] sm:$0xff]
        %v530 = vld [vmem:[#allocation4 + $0x38] sm:$0xff]
        %v531 = vld [vmem:[#allocation4 + $0x40] sm:$0xff]
        %v532 = vld [vmem:[#allocation4 + $0x48] sm:$0xff]
        %v533 = vld [vmem:[#allocation4 + $0x50] sm:$0xff]
        %v534 = vld [vmem:[#allocation4 + $0x58] sm:$0xff]
        %v535 = vld [vmem:[#allocation4 + $0x60] sm:$0xff]
        %v536 = vld [vmem:[#allocation4 + $0x68] sm:$0xff]
        %v537 = vld [vmem:[#allocation4 + $0x70] sm:$0xff]
        %v538 = vld [vmem:[#allocation4 + $0x78] sm:$0xff]
        %v539 = vld [vmem:[#allocation4 + $0x80] sm:$0xff]
        %v540 = vld [vmem:[#allocation4 + $0x88] sm:$0xff]
        %v541 = vld [vmem:[#allocation4 + $0x90] sm:$0xff]
        %v542 = vld [vmem:[#allocation4 + $0x98] sm:$0xff]
        %v543 = vld [vmem:[#allocation4 + $0xa0] sm:$0xff]
        %v544 = vld [vmem:[#allocation4 + $0xa8] sm:$0xff]
        %v545 = vld [vmem:[#allocation4 + $0xb0] sm:$0xff]
        %v546 = vld [vmem:[#allocation4 + $0xb8] sm:$0xff]
        %v547 = vld [vmem:[#allocation4 + $0xc0] sm:$0xff]
        %v548 = vld [vmem:[#allocation4 + $0xc8] sm:$0xff]
        %v549 = vld [vmem:[#allocation4 + $0xd0] sm:$0xff]
        %v550 = vld [vmem:[#allocation4 + $0xd8] sm:$0xff]
        %v551 = vld [vmem:[#allocation4 + $0xe0] sm:$0xff]
        %v552 = vld [vmem:[#allocation4 + $0xe8] sm:$0xff]
        %v553 = vld [vmem:[#allocation4 + $0xf0] sm:$0xff]
        %v554 = vld [vmem:[#allocation4 + $0xf8] sm:$0xff]
        %v555 = vld [vmem:[#allocation4 + $0x100] sm:$0xff]
        %v556 = vld [vmem:[#allocation4 + $0x108] sm:$0xff]
        %v557 = vld [vmem:[#allocation4 + $0x110] sm:$0xff]
        %v558 = vld [vmem:[#allocation4 + $0x118] sm:$0xff]
        %v559 = vld [vmem:[#allocation4 + $0x120] sm:$0xff]
        %v560 = vld [vmem:[#allocation4 + $0x128] sm:$0xff]
        %v561 = vld [vmem:[#allocation4 + $0x130] sm:$0xff]
        %v562 = vld [vmem:[#allocation4 + $0x138] sm:$0xff]
        %v563 = vld [vmem:[#allocation4 + $0x140] sm:$0xff]
        %v564 = vld [vmem:[#allocation4 + $0x148] sm:$0xff]
        %v565 = vld [vmem:[#allocation4 + $0x150] sm:$0xff]
        %v566 = vld [vmem:[#allocation4 + $0x158] sm:$0xff]
        %v567 = vld [vmem:[#allocation4 + $0x160] sm:$0xff]
        %v568 = vld [vmem:[#allocation4 + $0x168] sm:$0xff]
        %v569 = vld [vmem:[#allocation4 + $0x170] sm:$0xff]
        %v570 = vld [vmem:[#allocation4 + $0x178] sm:$0xff]
        %v571 = vld [vmem:[#allocation4 + $0x180] sm:$0xff]
        %v572 = vld [vmem:[#allocation4 + $0x188] sm:$0xff]
        %v573 = vld [vmem:[#allocation4 + $0x190] sm:$0xff]
        %v574 = vld [vmem:[#allocation4 + $0x198] sm:$0xff]
        %v575 = vld [vmem:[#allocation4 + $0x1a0] sm:$0xff]
        %v576 = vld [vmem:[#allocation4 + $0x1a8] sm:$0xff]
        %v577 = vld [vmem:[#allocation4 + $0x1b0] sm:$0xff]
        %v578 = vld [vmem:[#allocation4 + $0x1b8] sm:$0xff]
        %v579 = vld [vmem:[#allocation4 + $0x1c0] sm:$0xff]
        %v580 = vld [vmem:[#allocation4 + $0x1c8] sm:$0xff]
        %v581 = vld [vmem:[#allocation4 + $0x1d0] sm:$0xff]
        %v582 = vld [vmem:[#allocation4 + $0x1d8] sm:$0xff]
        %v583 = vld [vmem:[#allocation4 + $0x1e0] sm:$0xff]
        %v584 = vld [vmem:[#allocation4 + $0x1e8] sm:$0xff]
        %v585 = vld [vmem:[#allocation4 + $0x1f0] sm:$0xff]
        %v586 = vld [vmem:[#allocation4 + $0x1f8] sm:$0xff]
        %v587 = vld [vmem:[#allocation4 + $0x200] sm:$0xff]
        %v588 = vld [vmem:[#allocation4 + $0x208] sm:$0xff]
        %v589 = vld [vmem:[#allocation4 + $0x210] sm:$0xff]
        %v590 = vld [vmem:[#allocation4 + $0x218] sm:$0xff]
        %v591 = vld [vmem:[#allocation4 + $0x220] sm:$0xff]
        %v592 = vld [vmem:[#allocation4 + $0x228] sm:$0xff]
        %v593 = vld [vmem:[#allocation4 + $0x230] sm:$0xff]
        %v594 = vld [vmem:[#allocation4 + $0x238] sm:$0xff]
        %v595 = vld [vmem:[#allocation4 + $0x240] sm:$0xff]
        %v596 = vld [vmem:[#allocation4 + $0x248] sm:$0xff]
        %v597 = vld [vmem:[#allocation4 + $0x250] sm:$0xff]
        %v598 = vld [vmem:[#allocation4 + $0x258] sm:$0xff]
        %v599 = vld [vmem:[#allocation4 + $0x260] sm:$0xff]
        %v600 = vld [vmem:[#allocation4 + $0x268] sm:$0xff]
        %v601 = vld [vmem:[#allocation4 + $0x270] sm:$0xff]
        %v602 = vld [vmem:[#allocation4 + $0x278] sm:$0xff]
        %v603 = vld [vmem:[#allocation4 + $0x280] sm:$0xff]
        %v604 = vld [vmem:[#allocation4 + $0x288] sm:$0xff]
        %v605 = vld [vmem:[#allocation4 + $0x290] sm:$0xff]
        %v606 = vld [vmem:[#allocation4 + $0x298] sm:$0xff]
        %v607 = vld [vmem:[#allocation4 + $0x2a0] sm:$0xff]
        %v608 = vld [vmem:[#allocation4 + $0x2a8] sm:$0xff]
        %v609 = vld [vmem:[#allocation4 + $0x2b0] sm:$0xff]
        %v610 = vld [vmem:[#allocation4 + $0x2b8] sm:$0xff]
        %v611 = vld [vmem:[#allocation4 + $0x2c0] sm:$0xff]
        %v612 = vld [vmem:[#allocation4 + $0x2c8] sm:$0xff]
        %v613 = vld [vmem:[#allocation4 + $0x2d0] sm:$0xff]
        %v614 = vld [vmem:[#allocation4 + $0x2d8] sm:$0xff]
        %v615 = vld [vmem:[#allocation4 + $0x2e0] sm:$0xff]
        %v616 = vld [vmem:[#allocation4 + $0x2e8] sm:$0xff]
        %v617 = vld [vmem:[#allocation4 + $0x2f0] sm:$0xff]
        %v618 = vld [vmem:[#allocation4 + $0x2f8] sm:$0xff]
        %v619 = vld [vmem:[#allocation4 + $0x300] sm:$0xff]
        %v620 = vld [vmem:[#allocation4 + $0x308] sm:$0xff]
        %v621 = vld [vmem:[#allocation4 + $0x310] sm:$0xff]
        %v622 = vld [vmem:[#allocation4 + $0x318] sm:$0xff]
        %v623 = vld [vmem:[#allocation4 + $0x320] sm:$0xff]
        %v624 = vld [vmem:[#allocation4 + $0x328] sm:$0xff]
        %v625 = vld [vmem:[#allocation4 + $0x330] sm:$0xff]
        %v626 = vld [vmem:[#allocation4 + $0x338] sm:$0xff]
        %v627 = vld [vmem:[#allocation4 + $0x340] sm:$0xff]
        %v628 = vld [vmem:[#allocation4 + $0x348] sm:$0xff]
        %v629 = vld [vmem:[#allocation4 + $0x350] sm:$0xff]
        %v630 = vld [vmem:[#allocation4 + $0x358] sm:$0xff]
        %v631 = vld [vmem:[#allocation4 + $0x360] sm:$0xff]
        %v632 = vld [vmem:[#allocation4 + $0x368] sm:$0xff]
        %v633 = vld [vmem:[#allocation4 + $0x370] sm:$0xff]
        %v634 = vld [vmem:[#allocation4 + $0x378] sm:$0xff]
        %v635 = vld [vmem:[#allocation4 + $0x380] sm:$0xff]
        %v636 = vld [vmem:[#allocation4 + $0x388] sm:$0xff]
        %v637 = vld [vmem:[#allocation4 + $0x390] sm:$0xff]
        %v638 = vld [vmem:[#allocation4 + $0x398] sm:$0xff]
        %v639 = vld [vmem:[#allocation4 + $0x3a0] sm:$0xff]
        %v640 = vld [vmem:[#allocation4 + $0x3a8] sm:$0xff]
        %v641 = vld [vmem:[#allocation4 + $0x3b0] sm:$0xff]
        %v642 = vld [vmem:[#allocation4 + $0x3b8] sm:$0xff]
        %v643 = vld [vmem:[#allocation4 + $0x3c0] sm:$0xff]
        %v644 = vld [vmem:[#allocation4 + $0x3c8] sm:$0xff]
        %v645 = vld [vmem:[#allocation4 + $0x3d0] sm:$0xff]
        %v646 = vld [vmem:[#allocation4 + $0x3d8] sm:$0xff]
        %v647 = vld [vmem:[#allocation4 + $0x3e0] sm:$0xff]
        %v648 = vld [vmem:[#allocation4 + $0x3e8] sm:$0xff]
        %v649 = vld [vmem:[#allocation4 + $0x3f0] sm:$0xff]
        %v650 = vld [vmem:[#allocation4 + $0x3f8] sm:$0xff]
        %v651 = vld [vmem:[#allocation4 + $0x400] sm:$0xff]
        %v652 = vld [vmem:[#allocation4 + $0x408] sm:$0xff]
        %v653 = vld [vmem:[#allocation4 + $0x410] sm:$0xff]
        %v654 = vld [vmem:[#allocation4 + $0x418] sm:$0xff]
        %v655 = vld [vmem:[#allocation4 + $0x420] sm:$0xff]
        %v656 = vld [vmem:[#allocation4 + $0x428] sm:$0xff]
        %v657 = vld [vmem:[#allocation4 + $0x430] sm:$0xff]
        %v658 = vld [vmem:[#allocation4 + $0x438] sm:$0xff]
        %v659 = vld [vmem:[#allocation4 + $0x440] sm:$0xff]
        %v660 = vld [vmem:[#allocation4 + $0x448] sm:$0xff]
        %v661 = vld [vmem:[#allocation4 + $0x450] sm:$0xff]
        %v662 = vld [vmem:[#allocation4 + $0x458] sm:$0xff]
        %v663 = vld [vmem:[#allocation4 + $0x460] sm:$0xff]
        %v664 = vld [vmem:[#allocation4 + $0x468] sm:$0xff]
        %v665 = vld [vmem:[#allocation4 + $0x470] sm:$0xff]
        %v666 = vld [vmem:[#allocation4 + $0x478] sm:$0xff]
        %667 = vmatprep.subr.mxu0 0.0
        %668 = vmatpush1.msra.mxu0 %v523
        %669 = vmatprep.subr.mxu0 0.0
        %670 = vmatpush1.msra.mxu0 %v524
        %671 = vmatprep.subr.mxu0 0.0
        %672 = vmatpush1.msra.mxu0 %v525
        %673 = vmatprep.subr.mxu0 0.0
        %674 = vmatpush1.msra.mxu0 %v526
        %675 = vmatprep.subr.mxu0 0.0
        %676 = vmatpush1.msra.mxu0 %v527
        %677 = vmatprep.subr.mxu0 0.0
        %678 = vmatpush1.msra.mxu0 %v528
        %679 = vmatprep.subr.mxu0 0.0
        %680 = vmatpush1.msra.mxu0 %v529
        %681 = vmatprep.subr.mxu0 0.0
        %682 = vmatpush1.msra.mxu0 %v530
        %683 = vmatprep.subr.mxu0 0.0
        %684 = vmatpush1.msra.mxu0 %v531
        %685 = vmatprep.subr.mxu0 0.0
        %686 = vmatpush1.msra.mxu0 %v532
        %687 = vmatprep.subr.mxu0 0.0
        %688 = vmatpush1.msra.mxu0 %v533
        %689 = vmatprep.subr.mxu0 0.0
        %690 = vmatpush1.msra.mxu0 %v534
        %691 = vmatprep.subr.mxu0 0.0
        %692 = vmatpush1.msra.mxu0 %v535
        %693 = vmatprep.subr.mxu0 0.0
        %694 = vmatpush1.msra.mxu0 %v536
        %695 = vmatprep.subr.mxu0 0.0
        %696 = vmatpush1.msra.mxu0 %v537
        %697 = vmatprep.subr.mxu0 0.0
        %698 = vmatpush1.msra.mxu0 %v538
        %699 = vmatprep.subr.mxu0 0.0
        %700 = vmatpush1.msra.mxu0 %v539
        %701 = vmatprep.subr.mxu0 0.0
        %702 = vmatpush1.msra.mxu0 %v540
        %703 = vmatprep.subr.mxu0 0.0
        %704 = vmatpush1.msra.mxu0 %v541
        %705 = vmatprep.subr.mxu0 0.0
        %706 = vmatpush1.msra.mxu0 %v542
        %707 = vmatprep.subr.mxu0 0.0
        %708 = vmatpush1.msra.mxu0 %v543
        %709 = vmatprep.subr.mxu0 0.0
        %710 = vmatpush1.msra.mxu0 %v544
        %711 = vmatprep.subr.mxu0 0.0
        %712 = vmatpush1.msra.mxu0 %v545
        %713 = vmatprep.subr.mxu0 0.0
        %714 = vmatpush1.msra.mxu0 %v546
        %715 = vmatprep.subr.mxu0 0.0
        %716 = vmatpush1.msra.mxu0 %v547
        %717 = vmatprep.subr.mxu0 0.0
        %718 = vmatpush1.msra.mxu0 %v548
        %719 = vmatprep.subr.mxu0 0.0
        %720 = vmatpush1.msra.mxu0 %v549
        %721 = vmatprep.subr.mxu0 0.0
        %722 = vmatpush1.msra.mxu0 %v550
        %723 = vmatprep.subr.mxu0 0.0
        %724 = vmatpush1.msra.mxu0 %v551
        %725 = vmatprep.subr.mxu0 0.0
        %726 = vmatpush1.msra.mxu0 %v552
        %727 = vmatprep.subr.mxu0 0.0
        %728 = vmatpush1.msra.mxu0 %v553
        %729 = vmatprep.subr.mxu0 0.0
        %730 = vmatpush1.msra.mxu0 %v554
        %731 = vmatprep.mubr.f32.mxu0 %v361
        %732 = vmatmul.mubr.f32.gmra.mrb[0].mxu0 %v341
        %v733 = vpop.f32.mrb[0].mxu0
        %v734 = vadd.f32 0.0, %v733
        %v735 = vpop.f32.mrb[0].mxu0
        %736 = vmatprep.mubr.f32.mxu0 %v362
        %737 = vmatmul.mubr.f32.gmra.mrb[0].mxu0 %v342
        %v738 = vpop.f32.mrb[0].mxu0
        %v739 = vadd.f32 0.0, %v738
        %v740 = vpop.f32.mrb[0].mxu0
        %741 = vmatprep.mubr.f32.mxu0 %v363
        %742 = vmatmul.mubr.f32.gmra.mrb[0].mxu0 %v343
        %v743 = vpop.f32.mrb[0].mxu0
        %v744 = vadd.f32 0.0, %v743
        %v745 = vpop.f32.mrb[0].mxu0
        %746 = vmatprep.mubr.f32.mxu0 %v364
        %747 = vmatmul.mubr.f32.gmra.mrb[0].mxu0 %v344
        %v748 = vpop.f32.mrb[0].mxu0
        %v749 = vadd.f32 0.0, %v748
        %v750 = vpop.f32.mrb[0].mxu0
        %751 = vmatprep.mubr.f32.mxu0 %v365
        %752 = vmatmul.mubr.f32.gmra.mrb[0].mxu0 %v345
        %v753 = vpop.f32.mrb[0].mxu0
        %v754 = vadd.f32 0.0, %v753
        %v755 = vpop.f32.mrb[0].mxu0
        %756 = vmatprep.mubr.f32.mxu0 %v366
        %757 = vmatmul.mubr.f32.gmra.mrb[0].mxu0 %v346
        %v758 = vpop.f32.mrb[0].mxu0
        %v759 = vadd.f32 0.0, %v758
        %v760 = vpop.f32.mrb[0].mxu0
        %761 = vmatprep.mubr.f32.mxu0 %v367
        %762 = vmatmul.mubr.f32.gmra.mrb[0].mxu0 %v347
        %v763 = vpop.f32.mrb[0].mxu0
        %v764 = vadd.f32 0.0, %v763
        %v765 = vpop.f32.mrb[0].mxu0
        %766 = vmatprep.mubr.f32.mxu0 %v368
        %767 = vmatmul.mubr.f32.gmra.mrb[0].mxu0 %v348
        %v768 = vpop.f32.mrb[0].mxu0
        %v769 = vadd.f32 0.0, %v768
        %v770 = vpop.f32.mrb[0].mxu0
        %771 = vmatprep.mubr.f32.mxu0 %v369
        %772 = vmatmul.mubr.f32.gmra.mrb[0].mxu0 %v349
        %v773 = vpop.f32.mrb[0].mxu0
        %v774 = vadd.f32 0.0, %v773
        %v775 = vpop.f32.mrb[0].mxu0
        %776 = vmatprep.mubr.f32.mxu0 %v370
        %777 = vmatmul.mubr.f32.gmra.mrb[0].mxu0 %v350
        %v778 = vpop.f32.mrb[0].mxu0
        %v779 = vadd.f32 0.0, %v778
        %v780 = vpop.f32.mrb[0].mxu0
        %781 = vmatprep.mubr.f32.mxu0 %v371
        %782 = vmatmul.mubr.f32.gmra.mrb[0].mxu0 %v351
        %v783 = vpop.f32.mrb[0].mxu0
        %v784 = vadd.f32 0.0, %v783
        %v785 = vpop.f32.mrb[0].mxu0
        %786 = vmatprep.mubr.f32.mxu0 %v372
        %787 = vmatmul.mubr.f32.gmra.mrb[0].mxu0 %v352
        %v788 = vpop.f32.mrb[0].mxu0
        %v789 = vadd.f32 0.0, %v788
        %v790 = vpop.f32.mrb[0].mxu0
        %791 = vmatprep.mubr.f32.mxu0 %v373
        %792 = vmatmul.mubr.f32.gmra.mrb[0].mxu0 %v353
        %v793 = vpop.f32.mrb[0].mxu0
        %v794 = vadd.f32 0.0, %v793
        %v795 = vpop.f32.mrb[0].mxu0
        %796 = vmatprep.mubr.f32.mxu0 %v374
        %797 = vmatmul.mubr.f32.gmra.mrb[0].mxu0 %v354
        %v798 = vpop.f32.mrb[0].mxu0
        %v799 = vadd.f32 0.0, %v798
        %v800 = vpop.f32.mrb[0].mxu0
        %801 = vmatprep.mubr.f32.mxu0 %v375
        %802 = vmatmul.mubr.f32.gmra.mrb[0].mxu0 %v355
        %v803 = vpop.f32.mrb[0].mxu0
        %v804 = vadd.f32 0.0, %v803
        %v805 = vpop.f32.mrb[0].mxu0
        %806 = vmatprep.mubr.f32.mxu0 %v376
        %807 = vmatmul.mubr.f32.gmra.mrb[0].mxu0 %v356
        %v808 = vpop.f32.mrb[0].mxu0
        %v809 = vadd.f32 0.0, %v808
        %v810 = vpop.f32.mrb[0].mxu0
        %811 = vmatprep.mubr.f32.mxu0 %v377
        %812 = vmatmul.mubr.f32.gmra.mrb[0].mxu0 %v357
        %v813 = vpop.f32.mrb[0].mxu0
        %v814 = vadd.f32 0.0, %v813
        %v815 = vpop.f32.mrb[0].mxu0
        %816 = vmatprep.mubr.f32.mxu0 %v378
        %817 = vmatmul.mubr.f32.gmra.mrb[0].mxu0 %v358
        %v818 = vpop.f32.mrb[0].mxu0
        %v819 = vadd.f32 0.0, %v818
        %v820 = vpop.f32.mrb[0].mxu0
        %821 = vmatprep.mubr.f32.mxu0 %v379
        %822 = vmatmul.mubr.f32.gmra.mrb[0].mxu0 %v359
        %v823 = vpop.f32.mrb[0].mxu0
        %v824 = vadd.f32 0.0, %v823
        %v825 = vpop.f32.mrb[0].mxu0
        %826 = vmatprep.mubr.f32.mxu0 %v380
        %827 = vmatmul.mubr.f32.gmra.mrb[0].mxu0 %v360
        %v828 = vpop.f32.mrb[0].mxu0
        %v829 = vadd.f32 0.0, %v828
        %v830 = vpop.f32.mrb[0].mxu0
        %831 = vdwg.mxu0
        %832 = vmatprep.subr.mxu0 0.0
        %833 = vmatpush1.msra.mxu0 %v555
        %834 = vmatprep.subr.mxu0 0.0
        %835 = vmatpush1.msra.mxu0 %v556
        %836 = vmatprep.subr.mxu0 0.0
        %837 = vmatpush1.msra.mxu0 %v557
        %838 = vmatprep.subr.mxu0 0.0
        %839 = vmatpush1.msra.mxu0 %v558
        %840 = vmatprep.subr.mxu0 0.0
        %841 = vmatpush1.msra.mxu0 %v559
        %842 = vmatprep.subr.mxu0 0.0
        %843 = vmatpush1.msra.mxu0 %v560
        %844 = vmatprep.subr.mxu0 0.0
        %845 = vmatpush1.msra.mxu0 %v561
        %846 = vmatprep.subr.mxu0 0.0
        %847 = vmatpush1.msra.mxu0 %v562
        %848 = vmatprep.subr.mxu0 0.0
        %849 = vmatpush1.msra.mxu0 %v563
        %850 = vmatprep.subr.mxu0 0.0
        %851 = vmatpush1.msra.mxu0 %v564
        %852 = vmatprep.subr.mxu0 0.0
        %853 = vmatpush1.msra.mxu0 %v565
        %854 = vmatprep.subr.mxu0 0.0
        %855 = vmatpush1.msra.mxu0 %v566
        %856 = vmatprep.subr.mxu0 0.0
        %857 = vmatpush1.msra.mxu0 %v567
        %858 = vmatprep.subr.mxu0 0.0
        %859 = vmatpush1.msra.mxu0 %v568
        %860 = vmatprep.subr.mxu0 0.0
        %861 = vmatpush1.msra.mxu0 %v569
        %862 = vmatprep.subr.mxu0 0.0
        %863 = vmatpush1.msra.mxu0 %v570
        %864 = vmatprep.subr.mxu0 0.0
        %865 = vmatpush1.msra.mxu0 %v571
        %866 = vmatprep.subr.mxu0 0.0
        %867 = vmatpush1.msra.mxu0 %v572
        %868 = vmatprep.subr.mxu0 0.0
        %869 = vmatpush1.msra.mxu0 %v573
        %870 = vmatprep.subr.mxu0 0.0
        %871 = vmatpush1.msra.mxu0 %v574
        %872 = vmatprep.subr.mxu0 0.0
        %873 = vmatpush1.msra.mxu0 %v575
        %874 = vmatprep.subr.mxu0 0.0
        %875 = vmatpush1.msra.mxu0 %v576
        %876 = vmatprep.subr.mxu0 0.0
        %877 = vmatpush1.msra.mxu0 %v577
        %878 = vmatprep.subr.mxu0 0.0
        %879 = vmatpush1.msra.mxu0 %v578
        %880 = vmatprep.subr.mxu0 0.0
        %881 = vmatpush1.msra.mxu0 %v579
        %882 = vmatprep.subr.mxu0 0.0
        %883 = vmatpush1.msra.mxu0 %v580
        %884 = vmatprep.subr.mxu0 0.0
        %885 = vmatpush1.msra.mxu0 %v581
        %886 = vmatprep.subr.mxu0 0.0
        %887 = vmatpush1.msra.mxu0 %v582
        %888 = vmatprep.subr.mxu0 0.0
        %889 = vmatpush1.msra.mxu0 %v583
        %890 = vmatprep.subr.mxu0 0.0
        %891 = vmatpush1.msra.mxu0 %v584
        %892 = vmatprep.subr.mxu0 0.0
        %893 = vmatpush1.msra.mxu0 %v585
        %894 = vmatprep.subr.mxu0 0.0
        %895 = vmatpush1.msra.mxu0 %v586
        %896 = vmatprep.mubr.f32.mxu0 %v402
        %897 = vmatmul.mubr.f32.gmra.mrb[0].mxu0 %v381
        %v898 = vpop.f32.mrb[0].mxu0
        %v899 = vadd.f32 %v734, %v898
        %v900 = vpop.f32.mrb[0].mxu0
        %901 = vmatprep.mubr.f32.mxu0 %v403
        %902 = vmatmul.mubr.f32.gmra.mrb[0].mxu0 %v382
        %v903 = vpop.f32.mrb[0].mxu0
        %v904 = vadd.f32 %v739, %v903
        %v905 = vpop.f32.mrb[0].mxu0
        %906 = vmatprep.mubr.f32.mxu0 %v404
        %907 = vmatmul.mubr.f32.gmra.mrb[0].mxu0 %v383
        %v908 = vpop.f32.mrb[0].mxu0
        %v909 = vadd.f32 %v744, %v908
        %v910 = vpop.f32.mrb[0].mxu0
        %911 = vmatprep.mubr.f32.mxu0 %v405
        %912 = vmatmul.mubr.f32.gmra.mrb[0].mxu0 %v384
        %v913 = vpop.f32.mrb[0].mxu0
        %v914 = vadd.f32 %v749, %v913
        %v915 = vpop.f32.mrb[0].mxu0
        %916 = vmatprep.mubr.f32.mxu0 %v406
        %917 = vmatmul.mubr.f32.gmra.mrb[0].mxu0 %v385
        %v918 = vpop.f32.mrb[0].mxu0
        %v919 = vadd.f32 %v754, %v918
        %v920 = vpop.f32.mrb[0].mxu0
        %921 = vmatprep.mubr.f32.mxu0 %v407
        %922 = vmatmul.mubr.f32.gmra.mrb[0].mxu0 %v386
        %v923 = vpop.f32.mrb[0].mxu0
        %v924 = vadd.f32 %v759, %v923
        %v925 = vpop.f32.mrb[0].mxu0
        %926 = vmatprep.mubr.f32.mxu0 %v408
        %927 = vmatmul.mubr.f32.gmra.mrb[0].mxu0 %v387
        %v928 = vpop.f32.mrb[0].mxu0
        %v929 = vadd.f32 %v764, %v928
        %v930 = vpop.f32.mrb[0].mxu0
        %931 = vmatprep.mubr.f32.mxu0 %v409
        %932 = vmatmul.mubr.f32.gmra.mrb[0].mxu0 %v388
        %v933 = vpop.f32.mrb[0].mxu0
        %v934 = vadd.f32 %v769, %v933
        %v935 = vpop.f32.mrb[0].mxu0
        %936 = vmatprep.mubr.f32.mxu0 %v410
        %937 = vmatmul.mubr.f32.gmra.mrb[0].mxu0 %v389
        %v938 = vpop.f32.mrb[0].mxu0
        %v939 = vadd.f32 %v774, %v938
        %v940 = vpop.f32.mrb[0].mxu0
        %941 = vmatprep.mubr.f32.mxu0 %v411
        %942 = vmatmul.mubr.f32.gmra.mrb[0].mxu0 %v390
        %v943 = vpop.f32.mrb[0].mxu0
        %v944 = vadd.f32 %v779, %v943
        %v945 = vpop.f32.mrb[0].mxu0
        %946 = vmatprep.mubr.f32.mxu0 %v412
        %947 = vmatmul.mubr.f32.gmra.mrb[0].mxu0 %v391
        %v948 = vpop.f32.mrb[0].mxu0
        %v949 = vadd.f32 %v784, %v948
        %v950 = vpop.f32.mrb[0].mxu0
        %951 = vmatprep.mubr.f32.mxu0 %v413
        %952 = vmatmul.mubr.f32.gmra.mrb[0].mxu0 %v392
        %v953 = vpop.f32.mrb[0].mxu0
        %v954 = vadd.f32 %v789, %v953
        %v955 = vpop.f32.mrb[0].mxu0
        %956 = vmatprep.mubr.f32.mxu0 %v414
        %957 = vmatmul.mubr.f32.gmra.mrb[0].mxu0 %v393
        %v958 = vpop.f32.mrb[0].mxu0
        %v959 = vadd.f32 %v794, %v958
        %v960 = vpop.f32.mrb[0].mxu0
        %961 = vmatprep.mubr.f32.mxu0 %v415
        %962 = vmatmul.mubr.f32.gmra.mrb[0].mxu0 %v394
        %v963 = vpop.f32.mrb[0].mxu0
        %v964 = vadd.f32 %v799, %v963
        %v965 = vpop.f32.mrb[0].mxu0
        %966 = vmatprep.mubr.f32.mxu0 %v416
        %967 = vmatmul.mubr.f32.gmra.mrb[0].mxu0 %v395
        %v968 = vpop.f32.mrb[0].mxu0
        %v969 = vadd.f32 %v804, %v968
        %v970 = vpop.f32.mrb[0].mxu0
        %971 = vmatprep.mubr.f32.mxu0 %v417
        %972 = vmatmul.mubr.f32.gmra.mrb[0].mxu0 %v396
        %v973 = vpop.f32.mrb[0].mxu0
        %v974 = vadd.f32 %v809, %v973
        %v975 = vpop.f32.mrb[0].mxu0
        %976 = vmatprep.mubr.f32.mxu0 %v418
        %977 = vmatmul.mubr.f32.gmra.mrb[0].mxu0 %v397
        %v978 = vpop.f32.mrb[0].mxu0
        %v979 = vadd.f32 %v814, %v978
        %v980 = vpop.f32.mrb[0].mxu0
        %981 = vmatprep.mubr.f32.mxu0 %v419
        %982 = vmatmul.mubr.f32.gmra.mrb[0].mxu0 %v398
        %v983 = vpop.f32.mrb[0].mxu0
        %v984 = vadd.f32 %v819, %v983
        %v985 = vpop.f32.mrb[0].mxu0
        %986 = vmatprep.mubr.f32.mxu0 %v420
        %987 = vmatmul.mubr.f32.gmra.mrb[0].mxu0 %v399
        %v988 = vpop.f32.mrb[0].mxu0
        %v989 = vadd.f32 %v824, %v988
        %v990 = vpop.f32.mrb[0].mxu0
        %991 = vmatprep.mubr.f32.mxu0 %v421
        %992 = vmatmul.mubr.f32.gmra.mrb[0].mxu0 %v400
        %v993 = vpop.f32.mrb[0].mxu0
        %v994 = vadd.f32 %v829, %v993
        %v995 = vpop.f32.mrb[0].mxu0
        %996 = vdwg.mxu0
        %997 = vmatprep.subr.mxu0 0.0
        %998 = vmatpush1.msra.mxu0 %v587
        %999 = vmatprep.subr.mxu0 0.0
        %1000 = vmatpush1.msra.mxu0 %v588
        %1001 = vmatprep.subr.mxu0 0.0
        %1002 = vmatpush1.msra.mxu0 %v589
        %1003 = vmatprep.subr.mxu0 0.0
        %1004 = vmatpush1.msra.mxu0 %v590
        %1005 = vmatprep.subr.mxu0 0.0
        %1006 = vmatpush1.msra.mxu0 %v591
        %1007 = vmatprep.subr.mxu0 0.0
        %1008 = vmatpush1.msra.mxu0 %v592
        %1009 = vmatprep.subr.mxu0 0.0
        %1010 = vmatpush1.msra.mxu0 %v593
        %1011 = vmatprep.subr.mxu0 0.0
        %1012 = vmatpush1.msra.mxu0 %v594
        %1013 = vmatprep.subr.mxu0 0.0
        %1014 = vmatpush1.msra.mxu0 %v595
        %1015 = vmatprep.subr.mxu0 0.0
        %1016 = vmatpush1.msra.mxu0 %v596
        %1017 = vmatprep.subr.mxu0 0.0
        %1018 = vmatpush1.msra.mxu0 %v597
        %1019 = vmatprep.subr.mxu0 0.0
        %1020 = vmatpush1.msra.mxu0 %v598
        %1021 = vmatprep.subr.mxu0 0.0
        %1022 = vmatpush1.msra.mxu0 %v599
        %1023 = vmatprep.subr.mxu0 0.0
        %1024 = vmatpush1.msra.mxu0 %v600
        %1025 = vmatprep.subr.mxu0 0.0
        %1026 = vmatpush1.msra.mxu0 %v601
        %1027 = vmatprep.subr.mxu0 0.0
        %1028 = vmatpush1.msra.mxu0 %v602
        %1029 = vmatprep.subr.mxu0 0.0
        %1030 = vmatpush1.msra.mxu0 %v603
        %1031 = vmatprep.subr.mxu0 0.0
        %1032 = vmatpush1.msra.mxu0 %v604
        %1033 = vmatprep.subr.mxu0 0.0
        %1034 = vmatpush1.msra.mxu0 %v605
        %1035 = vmatprep.subr.mxu0 0.0
        %1036 = vmatpush1.msra.mxu0 %v606
        %1037 = vmatprep.subr.mxu0 0.0
        %1038 = vmatpush1.msra.mxu0 %v607
        %1039 = vmatprep.subr.mxu0 0.0
        %1040 = vmatpush1.msra.mxu0 %v608
        %1041 = vmatprep.subr.mxu0 0.0
        %1042 = vmatpush1.msra.mxu0 %v609
        %1043 = vmatprep.subr.mxu0 0.0
        %1044 = vmatpush1.msra.mxu0 %v610
        %1045 = vmatprep.subr.mxu0 0.0
        %1046 = vmatpush1.msra.mxu0 %v611
        %1047 = vmatprep.subr.mxu0 0.0
        %1048 = vmatpush1.msra.mxu0 %v612
        %1049 = vmatprep.subr.mxu0 0.0
        %1050 = vmatpush1.msra.mxu0 %v613
        %1051 = vmatprep.subr.mxu0 0.0
        %1052 = vmatpush1.msra.mxu0 %v614
        %1053 = vmatprep.subr.mxu0 0.0
        %1054 = vmatpush1.msra.mxu0 %v615
        %1055 = vmatprep.subr.mxu0 0.0
        %1056 = vmatpush1.msra.mxu0 %v616
        %1057 = vmatprep.subr.mxu0 0.0
        %1058 = vmatpush1.msra.mxu0 %v617
        %1059 = vmatprep.subr.mxu0 0.0
        %1060 = vmatpush1.msra.mxu0 %v618
        %1061 = vmatprep.mubr.f32.mxu0 %v442
        %1062 = vmatmul.mubr.f32.gmra.mrb[0].mxu0 %v422
        %v1063 = vpop.f32.mrb[0].mxu0
        %v1064 = vadd.f32 %v899, %v1063
        %v1065 = vpop.f32.mrb[0].mxu0
        %1066 = vmatprep.mubr.f32.mxu0 %v443
        %1067 = vmatmul.mubr.f32.gmra.mrb[0].mxu0 %v423
        %v1068 = vpop.f32.mrb[0].mxu0
        %v1069 = vadd.f32 %v904, %v1068
        %v1070 = vpop.f32.mrb[0].mxu0
        %1071 = vmatprep.mubr.f32.mxu0 %v444
        %1072 = vmatmul.mubr.f32.gmra.mrb[0].mxu0 %v424
        %v1073 = vpop.f32.mrb[0].mxu0
        %v1074 = vadd.f32 %v909, %v1073
        %v1075 = vpop.f32.mrb[0].mxu0
        %1076 = vmatprep.mubr.f32.mxu0 %v445
        %1077 = vmatmul.mubr.f32.gmra.mrb[0].mxu0 %v425
        %v1078 = vpop.f32.mrb[0].mxu0
        %v1079 = vadd.f32 %v914, %v1078
        %v1080 = vpop.f32.mrb[0].mxu0
        %1081 = vmatprep.mubr.f32.mxu0 %v446
        %1082 = vmatmul.mubr.f32.gmra.mrb[0].mxu0 %v426
        %v1083 = vpop.f32.mrb[0].mxu0
        %v1084 = vadd.f32 %v919, %v1083
        %v1085 = vpop.f32.mrb[0].mxu0
        %1086 = vmatprep.mubr.f32.mxu0 %v447
        %1087 = vmatmul.mubr.f32.gmra.mrb[0].mxu0 %v427
        %v1088 = vpop.f32.mrb[0].mxu0
        %v1089 = vadd.f32 %v924, %v1088
        %v1090 = vpop.f32.mrb[0].mxu0
        %1091 = vmatprep.mubr.f32.mxu0 %v448
        %1092 = vmatmul.mubr.f32.gmra.mrb[0].mxu0 %v428
        %v1093 = vpop.f32.mrb[0].mxu0
        %v1094 = vadd.f32 %v929, %v1093
        %v1095 = vpop.f32.mrb[0].mxu0
        %1096 = vmatprep.mubr.f32.mxu0 %v449
        %1097 = vmatmul.mubr.f32.gmra.mrb[0].mxu0 %v429
        %v1098 = vpop.f32.mrb[0].mxu0
        %v1099 = vadd.f32 %v934, %v1098
        %v1100 = vpop.f32.mrb[0].mxu0
        %1101 = vmatprep.mubr.f32.mxu0 %v450
        %1102 = vmatmul.mubr.f32.gmra.mrb[0].mxu0 %v430
        %v1103 = vpop.f32.mrb[0].mxu0
        %v1104 = vadd.f32 %v939, %v1103
        %v1105 = vpop.f32.mrb[0].mxu0
        %1106 = vmatprep.mubr.f32.mxu0 %v451
        %1107 = vmatmul.mubr.f32.gmra.mrb[0].mxu0 %v431
        %v1108 = vpop.f32.mrb[0].mxu0
        %v1109 = vadd.f32 %v944, %v1108
        %v1110 = vpop.f32.mrb[0].mxu0
        %1111 = vmatprep.mubr.f32.mxu0 %v452
        %1112 = vmatmul.mubr.f32.gmra.mrb[0].mxu0 %v432
        %v1113 = vpop.f32.mrb[0].mxu0
        %v1114 = vadd.f32 %v949, %v1113
        %v1115 = vpop.f32.mrb[0].mxu0
        %1116 = vmatprep.mubr.f32.mxu0 %v453
        %1117 = vmatmul.mubr.f32.gmra.mrb[0].mxu0 %v433
        %v1118 = vpop.f32.mrb[0].mxu0
        %v1119 = vadd.f32 %v954, %v1118
        %v1120 = vpop.f32.mrb[0].mxu0
        %1121 = vmatprep.mubr.f32.mxu0 %v454
        %1122 = vmatmul.mubr.f32.gmra.mrb[0].mxu0 %v434
        %v1123 = vpop.f32.mrb[0].mxu0
        %v1124 = vadd.f32 %v959, %v1123
        %v1125 = vpop.f32.mrb[0].mxu0
        %1126 = vmatprep.mubr.f32.mxu0 %v455
        %1127 = vmatmul.mubr.f32.gmra.mrb[0].mxu0 %v435
        %v1128 = vpop.f32.mrb[0].mxu0
        %v1129 = vadd.f32 %v964, %v1128
        %v1130 = vpop.f32.mrb[0].mxu0
        %1131 = vmatprep.mubr.f32.mxu0 %v456
        %1132 = vmatmul.mubr.f32.gmra.mrb[0].mxu0 %v436
        %v1133 = vpop.f32.mrb[0].mxu0
        %v1134 = vadd.f32 %v969, %v1133
        %v1135 = vpop.f32.mrb[0].mxu0
        %1136 = vmatprep.mubr.f32.mxu0 %v457
        %1137 = vmatmul.mubr.f32.gmra.mrb[0].mxu0 %v437
        %v1138 = vpop.f32.mrb[0].mxu0
        %v1139 = vadd.f32 %v974, %v1138
        %v1140 = vpop.f32.mrb[0].mxu0
        %1141 = vmatprep.mubr.f32.mxu0 %v458
        %1142 = vmatmul.mubr.f32.gmra.mrb[0].mxu0 %v438
        %v1143 = vpop.f32.mrb[0].mxu0
        %v1144 = vadd.f32 %v979, %v1143
        %v1145 = vpop.f32.mrb[0].mxu0
        %1146 = vmatprep.mubr.f32.mxu0 %v459
        %1147 = vmatmul.mubr.f32.gmra.mrb[0].mxu0 %v439
        %v1148 = vpop.f32.mrb[0].mxu0
        %v1149 = vadd.f32 %v984, %v1148
        %v1150 = vpop.f32.mrb[0].mxu0
        %1151 = vmatprep.mubr.f32.mxu0 %v460
        %1152 = vmatmul.mubr.f32.gmra.mrb[0].mxu0 %v440
        %v1153 = vpop.f32.mrb[0].mxu0
        %v1154 = vadd.f32 %v989, %v1153
        %v1155 = vpop.f32.mrb[0].mxu0
        %1156 = vmatprep.mubr.f32.mxu0 %v461
        %1157 = vmatmul.mubr.f32.gmra.mrb[0].mxu0 %v441
        %v1158 = vpop.f32.mrb[0].mxu0
        %v1159 = vadd.f32 %v994, %v1158
        %v1160 = vpop.f32.mrb[0].mxu0
        %1161 = vdwg.mxu0
        %1162 = vmatprep.subr.mxu0 0.0
        %1163 = vmatpush1.msra.mxu0 %v619
        %1164 = vmatprep.subr.mxu0 0.0
        %1165 = vmatpush1.msra.mxu0 %v620
        %1166 = vmatprep.subr.mxu0 0.0
        %1167 = vmatpush1.msra.mxu0 %v621
        %1168 = vmatprep.subr.mxu0 0.0
        %1169 = vmatpush1.msra.mxu0 %v622
        %1170 = vmatprep.subr.mxu0 0.0
        %1171 = vmatpush1.msra.mxu0 %v623
        %1172 = vmatprep.subr.mxu0 0.0
        %1173 = vmatpush1.msra.mxu0 %v624
        %1174 = vmatprep.subr.mxu0 0.0
        %1175 = vmatpush1.msra.mxu0 %v625
        %1176 = vmatprep.subr.mxu0 0.0
        %1177 = vmatpush1.msra.mxu0 %v626
        %1178 = vmatprep.subr.mxu0 0.0
        %1179 = vmatpush1.msra.mxu0 %v627
        %1180 = vmatprep.subr.mxu0 0.0
        %1181 = vmatpush1.msra.mxu0 %v628
        %1182 = vmatprep.subr.mxu0 0.0
        %1183 = vmatpush1.msra.mxu0 %v629
        %1184 = vmatprep.subr.mxu0 0.0
        %1185 = vmatpush1.msra.mxu0 %v630
        %1186 = vmatprep.subr.mxu0 0.0
        %1187 = vmatpush1.msra.mxu0 %v631
        %1188 = vmatprep.subr.mxu0 0.0
        %1189 = vmatpush1.msra.mxu0 %v632
        %1190 = vmatprep.subr.mxu0 0.0
        %1191 = vmatpush1.msra.mxu0 %v633
        %1192 = vmatprep.subr.mxu0 0.0
        %1193 = vmatpush1.msra.mxu0 %v634
        %1194 = vmatprep.subr.mxu0 0.0
        %1195 = vmatpush1.msra.mxu0 %v635
        %1196 = vmatprep.subr.mxu0 0.0
        %1197 = vmatpush1.msra.mxu0 %v636
        %1198 = vmatprep.subr.mxu0 0.0
        %1199 = vmatpush1.msra.mxu0 %v637
        %1200 = vmatprep.subr.mxu0 0.0
        %1201 = vmatpush1.msra.mxu0 %v638
        %1202 = vmatprep.subr.mxu0 0.0
        %1203 = vmatpush1.msra.mxu0 %v639
        %1204 = vmatprep.subr.mxu0 0.0
        %1205 = vmatpush1.msra.mxu0 %v640
        %1206 = vmatprep.subr.mxu0 0.0
        %1207 = vmatpush1.msra.mxu0 %v641
        %1208 = vmatprep.subr.mxu0 0.0
        %1209 = vmatpush1.msra.mxu0 %v642
        %1210 = vmatprep.subr.mxu0 0.0
        %1211 = vmatpush1.msra.mxu0 %v643
        %1212 = vmatprep.subr.mxu0 0.0
        %1213 = vmatpush1.msra.mxu0 %v644
        %1214 = vmatprep.subr.mxu0 0.0
        %1215 = vmatpush1.msra.mxu0 %v645
        %1216 = vmatprep.subr.mxu0 0.0
        %1217 = vmatpush1.msra.mxu0 %v646
        %1218 = vmatprep.subr.mxu0 0.0
        %1219 = vmatpush1.msra.mxu0 %v647
        %1220 = vmatprep.subr.mxu0 0.0
        %1221 = vmatpush1.msra.mxu0 %v648
        %1222 = vmatprep.subr.mxu0 0.0
        %1223 = vmatpush1.msra.mxu0 %v649
        %1224 = vmatprep.subr.mxu0 0.0
        %1225 = vmatpush1.msra.mxu0 %v650
        %1226 = vmatprep.mubr.f32.mxu0 %v483
        %1227 = vmatmul.mubr.f32.gmra.mrb[0].mxu0 %v463
        %v1228 = vpop.f32.mrb[0].mxu0
        %v1229 = vadd.f32 %v1064, %v1228
        %v1230 = vpop.f32.mrb[0].mxu0
        %1231 = vmatprep.mubr.f32.mxu0 %v484
        %1232 = vmatmul.mubr.f32.gmra.mrb[0].mxu0 %v464
        %v1233 = vpop.f32.mrb[0].mxu0
        %v1234 = vadd.f32 %v1069, %v1233
        %v1235 = vpop.f32.mrb[0].mxu0
        %1236 = vmatprep.mubr.f32.mxu0 %v485
        %1237 = vmatmul.mubr.f32.gmra.mrb[0].mxu0 %v465
        %v1238 = vpop.f32.mrb[0].mxu0
        %v1239 = vadd.f32 %v1074, %v1238
        %v1240 = vpop.f32.mrb[0].mxu0
        %1241 = vmatprep.mubr.f32.mxu0 %v486
        %1242 = vmatmul.mubr.f32.gmra.mrb[0].mxu0 %v466
        %v1243 = vpop.f32.mrb[0].mxu0
        %v1244 = vadd.f32 %v1079, %v1243
        %v1245 = vpop.f32.mrb[0].mxu0
        %1246 = vmatprep.mubr.f32.mxu0 %v487
        %1247 = vmatmul.mubr.f32.gmra.mrb[0].mxu0 %v467
        %v1248 = vpop.f32.mrb[0].mxu0
        %v1249 = vadd.f32 %v1084, %v1248
        %v1250 = vpop.f32.mrb[0].mxu0
        %1251 = vmatprep.mubr.f32.mxu0 %v488
        %1252 = vmatmul.mubr.f32.gmra.mrb[0].mxu0 %v468
        %v1253 = vpop.f32.mrb[0].mxu0
        %v1254 = vadd.f32 %v1089, %v1253
        %v1255 = vpop.f32.mrb[0].mxu0
        %1256 = vmatprep.mubr.f32.mxu0 %v489
        %1257 = vmatmul.mubr.f32.gmra.mrb[0].mxu0 %v469
        %v1258 = vpop.f32.mrb[0].mxu0
        %v1259 = vadd.f32 %v1094, %v1258
        %v1260 = vpop.f32.mrb[0].mxu0
        %1261 = vmatprep.mubr.f32.mxu0 %v490
        %1262 = vmatmul.mubr.f32.gmra.mrb[0].mxu0 %v470
        %v1263 = vpop.f32.mrb[0].mxu0
        %v1264 = vadd.f32 %v1099, %v1263
        %v1265 = vpop.f32.mrb[0].mxu0
        %1266 = vmatprep.mubr.f32.mxu0 %v491
        %1267 = vmatmul.mubr.f32.gmra.mrb[0].mxu0 %v471
        %v1268 = vpop.f32.mrb[0].mxu0
        %v1269 = vadd.f32 %v1104, %v1268
        %v1270 = vpop.f32.mrb[0].mxu0
        %1271 = vmatprep.mubr.f32.mxu0 %v492
        %1272 = vmatmul.mubr.f32.gmra.mrb[0].mxu0 %v472
        %v1273 = vpop.f32.mrb[0].mxu0
        %v1274 = vadd.f32 %v1109, %v1273
        %v1275 = vpop.f32.mrb[0].mxu0
        %1276 = vmatprep.mubr.f32.mxu0 %v493
        %1277 = vmatmul.mubr.f32.gmra.mrb[0].mxu0 %v473
        %v1278 = vpop.f32.mrb[0].mxu0
        %v1279 = vadd.f32 %v1114, %v1278
        %v1280 = vpop.f32.mrb[0].mxu0
        %1281 = vmatprep.mubr.f32.mxu0 %v494
        %1282 = vmatmul.mubr.f32.gmra.mrb[0].mxu0 %v474
        %v1283 = vpop.f32.mrb[0].mxu0
        %v1284 = vadd.f32 %v1119, %v1283
        %v1285 = vpop.f32.mrb[0].mxu0
        %1286 = vmatprep.mubr.f32.mxu0 %v495
        %1287 = vmatmul.mubr.f32.gmra.mrb[0].mxu0 %v475
        %v1288 = vpop.f32.mrb[0].mxu0
        %v1289 = vadd.f32 %v1124, %v1288
        %v1290 = vpop.f32.mrb[0].mxu0
        %1291 = vmatprep.mubr.f32.mxu0 %v496
        %1292 = vmatmul.mubr.f32.gmra.mrb[0].mxu0 %v476
        %v1293 = vpop.f32.mrb[0].mxu0
        %v1294 = vadd.f32 %v1129, %v1293
        %v1295 = vpop.f32.mrb[0].mxu0
        %1296 = vmatprep.mubr.f32.mxu0 %v497
        %1297 = vmatmul.mubr.f32.gmra.mrb[0].mxu0 %v477
        %v1298 = vpop.f32.mrb[0].mxu0
        %v1299 = vadd.f32 %v1134, %v1298
        %v1300 = vpop.f32.mrb[0].mxu0
        %1301 = vmatprep.mubr.f32.mxu0 %v498
        %1302 = vmatmul.mubr.f32.gmra.mrb[0].mxu0 %v478
        %v1303 = vpop.f32.mrb[0].mxu0
        %v1304 = vadd.f32 %v1139, %v1303
        %v1305 = vpop.f32.mrb[0].mxu0
        %1306 = vmatprep.mubr.f32.mxu0 %v499
        %1307 = vmatmul.mubr.f32.gmra.mrb[0].mxu0 %v479
        %v1308 = vpop.f32.mrb[0].mxu0
        %v1309 = vadd.f32 %v1144, %v1308
        %v1310 = vpop.f32.mrb[0].mxu0
        %1311 = vmatprep.mubr.f32.mxu0 %v500
        %1312 = vmatmul.mubr.f32.gmra.mrb[0].mxu0 %v480
        %v1313 = vpop.f32.mrb[0].mxu0
        %v1314 = vadd.f32 %v1149, %v1313
        %v1315 = vpop.f32.mrb[0].mxu0
        %1316 = vmatprep.mubr.f32.mxu0 %v501
        %1317 = vmatmul.mubr.f32.gmra.mrb[0].mxu0 %v481
        %v1318 = vpop.f32.mrb[0].mxu0
        %v1319 = vadd.f32 %v1154, %v1318
        %v1320 = vpop.f32.mrb[0].mxu0
        %1321 = vmatprep.mubr.f32.mxu0 %v502
        %1322 = vmatmul.mubr.f32.gmra.mrb[0].mxu0 %v482
        %v1323 = vpop.f32.mrb[0].mxu0
        %v1324 = vadd.f32 %v1159, %v1323
        %v1325 = vpop.f32.mrb[0].mxu0
        %1326 = vdwg.mxu0
        %1327 = vmatprep.subr.mxu0 0.0
        %1328 = vmatpush1.msra.mxu0 %v651
        %1329 = vmatprep.subr.mxu0 0.0
        %1330 = vmatpush1.msra.mxu0 %v652
        %1331 = vmatprep.subr.mxu0 0.0
        %1332 = vmatpush1.msra.mxu0 %v653
        %1333 = vmatprep.subr.mxu0 0.0
        %1334 = vmatpush1.msra.mxu0 %v654
        %1335 = vmatprep.subr.mxu0 0.0
        %1336 = vmatpush1.msra.mxu0 %v655
        %1337 = vmatprep.subr.mxu0 0.0
        %1338 = vmatpush1.msra.mxu0 %v656
        %1339 = vmatprep.subr.mxu0 0.0
        %1340 = vmatpush1.msra.mxu0 %v657
        %1341 = vmatprep.subr.mxu0 0.0
        %1342 = vmatpush1.msra.mxu0 %v658
        %1343 = vmatprep.subr.mxu0 0.0
        %1344 = vmatpush1.msra.mxu0 %v659
        %1345 = vmatprep.subr.mxu0 0.0
        %1346 = vmatpush1.msra.mxu0 %v660
        %1347 = vmatprep.subr.mxu0 0.0
        %1348 = vmatpush1.msra.mxu0 %v661
        %1349 = vmatprep.subr.mxu0 0.0
        %1350 = vmatpush1.msra.mxu0 %v662
        %1351 = vmatprep.subr.mxu0 0.0
        %1352 = vmatpush1.msra.mxu0 %v663
        %1353 = vmatprep.subr.mxu0 0.0
        %1354 = vmatpush1.msra.mxu0 %v664
        %1355 = vmatprep.subr.mxu0 0.0
        %1356 = vmatpush1.msra.mxu0 %v665
        %1357 = vmatprep.subr.mxu0 0.0
        %1358 = vmatpush1.msra.mxu0 %v666
        %1359 = vmatprep.subr.mxu0 0.0
        %1360 = vmatpush1.msra.mxu0 0.0
        %1361 = vmatprep.subr.mxu0 0.0
        %1362 = vmatpush1.msra.mxu0 0.0
        %1363 = vmatprep.subr.mxu0 0.0
        %1364 = vmatpush1.msra.mxu0 0.0
        %1365 = vmatprep.subr.mxu0 0.0
        %1366 = vmatpush1.msra.mxu0 0.0
        %1367 = vmatprep.subr.mxu0 0.0
        %1368 = vmatpush1.msra.mxu0 0.0
        %1369 = vmatprep.subr.mxu0 0.0
        %1370 = vmatpush1.msra.mxu0 0.0
        %1371 = vmatprep.subr.mxu0 0.0
        %1372 = vmatpush1.msra.mxu0 0.0
        %1373 = vmatprep.subr.mxu0 0.0
        %1374 = vmatpush1.msra.mxu0 0.0
        %1375 = vmatprep.subr.mxu0 0.0
        %1376 = vmatpush1.msra.mxu0 0.0
        %1377 = vmatprep.subr.mxu0 0.0
        %1378 = vmatpush1.msra.mxu0 0.0
        %1379 = vmatprep.subr.mxu0 0.0
        %1380 = vmatpush1.msra.mxu0 0.0
        %1381 = vmatprep.subr.mxu0 0.0
        %1382 = vmatpush1.msra.mxu0 0.0
        %1383 = vmatprep.subr.mxu0 0.0
        %1384 = vmatpush1.msra.mxu0 0.0
        %1385 = vmatprep.subr.mxu0 0.0
        %1386 = vmatpush1.msra.mxu0 0.0
        %1387 = vmatprep.subr.mxu0 0.0
        %1388 = vmatpush1.msra.mxu0 0.0
        %1389 = vmatprep.subr.mxu0 0.0
        %1390 = vmatpush1.msra.mxu0 0.0
        %1391 = vmatprep.mubr.f32.mxu0 0.0
        %1392 = vmatmul.mubr.f32.gmra.mrb[0].mxu0 %v503
        %v1393 = vpop.f32.mrb[0].mxu0
        %v1394 = vadd.f32 %v1229, %v1393
        %v1395 = vpop.f32.mrb[0].mxu0
        %1396 = vmatprep.mubr.f32.mxu0 0.0
        %1397 = vmatmul.mubr.f32.gmra.mrb[0].mxu0 %v504
        %v1398 = vpop.f32.mrb[0].mxu0
        %v1399 = vadd.f32 %v1234, %v1398
        %v1400 = vpop.f32.mrb[0].mxu0
        %1401 = vmatprep.mubr.f32.mxu0 0.0
        %1402 = vmatmul.mubr.f32.gmra.mrb[0].mxu0 %v505
        %v1403 = vpop.f32.mrb[0].mxu0
        %v1404 = vadd.f32 %v1239, %v1403
        %v1405 = vpop.f32.mrb[0].mxu0
        %1406 = vmatprep.mubr.f32.mxu0 0.0
        %1407 = vmatmul.mubr.f32.gmra.mrb[0].mxu0 %v506
        %v1408 = vpop.f32.mrb[0].mxu0
        %v1409 = vadd.f32 %v1244, %v1408
        %v1410 = vpop.f32.mrb[0].mxu0
        %1411 = vmatprep.mubr.f32.mxu0 0.0
        %1412 = vmatmul.mubr.f32.gmra.mrb[0].mxu0 %v507
        %v1413 = vpop.f32.mrb[0].mxu0
        %v1414 = vadd.f32 %v1249, %v1413
        %v1415 = vpop.f32.mrb[0].mxu0
        %1416 = vmatprep.mubr.f32.mxu0 0.0
        %1417 = vmatmul.mubr.f32.gmra.mrb[0].mxu0 %v508
        %v1418 = vpop.f32.mrb[0].mxu0
        %v1419 = vadd.f32 %v1254, %v1418
        %v1420 = vpop.f32.mrb[0].mxu0
        %1421 = vmatprep.mubr.f32.mxu0 0.0
        %1422 = vmatmul.mubr.f32.gmra.mrb[0].mxu0 %v509
        %v1423 = vpop.f32.mrb[0].mxu0
        %v1424 = vadd.f32 %v1259, %v1423
        %v1425 = vpop.f32.mrb[0].mxu0
        %1426 = vmatprep.mubr.f32.mxu0 0.0
        %1427 = vmatmul.mubr.f32.gmra.mrb[0].mxu0 %v510
        %v1428 = vpop.f32.mrb[0].mxu0
        %v1429 = vadd.f32 %v1264, %v1428
        %v1430 = vpop.f32.mrb[0].mxu0
        %1431 = vmatprep.mubr.f32.mxu0 0.0
        %1432 = vmatmul.mubr.f32.gmra.mrb[0].mxu0 %v511
        %v1433 = vpop.f32.mrb[0].mxu0
        %v1434 = vadd.f32 %v1269, %v1433
        %v1435 = vpop.f32.mrb[0].mxu0
        %1436 = vmatprep.mubr.f32.mxu0 0.0
        %1437 = vmatmul.mubr.f32.gmra.mrb[0].mxu0 %v512
        %v1438 = vpop.f32.mrb[0].mxu0
        %v1439 = vadd.f32 %v1274, %v1438
        %v1440 = vpop.f32.mrb[0].mxu0
        %1441 = vmatprep.mubr.f32.mxu0 0.0
        %1442 = vmatmul.mubr.f32.gmra.mrb[0].mxu0 %v513
        %v1443 = vpop.f32.mrb[0].mxu0
        %v1444 = vadd.f32 %v1279, %v1443
        %v1445 = vpop.f32.mrb[0].mxu0
        %1446 = vmatprep.mubr.f32.mxu0 0.0
        %1447 = vmatmul.mubr.f32.gmra.mrb[0].mxu0 %v514
        %v1448 = vpop.f32.mrb[0].mxu0
        %v1449 = vadd.f32 %v1284, %v1448
        %v1450 = vpop.f32.mrb[0].mxu0
        %1451 = vmatprep.mubr.f32.mxu0 0.0
        %1452 = vmatmul.mubr.f32.gmra.mrb[0].mxu0 %v515
        %v1453 = vpop.f32.mrb[0].mxu0
        %v1454 = vadd.f32 %v1289, %v1453
        %v1455 = vpop.f32.mrb[0].mxu0
        %1456 = vmatprep.mubr.f32.mxu0 0.0
        %1457 = vmatmul.mubr.f32.gmra.mrb[0].mxu0 %v516
        %v1458 = vpop.f32.mrb[0].mxu0
        %v1459 = vadd.f32 %v1294, %v1458
        %v1460 = vpop.f32.mrb[0].mxu0
        %1461 = vmatprep.mubr.f32.mxu0 0.0
        %1462 = vmatmul.mubr.f32.gmra.mrb[0].mxu0 %v517
        %v1463 = vpop.f32.mrb[0].mxu0
        %v1464 = vadd.f32 %v1299, %v1463
        %v1465 = vpop.f32.mrb[0].mxu0
        %1466 = vmatprep.mubr.f32.mxu0 0.0
        %1467 = vmatmul.mubr.f32.gmra.mrb[0].mxu0 %v518
        %v1468 = vpop.f32.mrb[0].mxu0
        %v1469 = vadd.f32 %v1304, %v1468
        %v1470 = vpop.f32.mrb[0].mxu0
        %1471 = vmatprep.mubr.f32.mxu0 0.0
        %1472 = vmatmul.mubr.f32.gmra.mrb[0].mxu0 %v519
        %v1473 = vpop.f32.mrb[0].mxu0
        %v1474 = vadd.f32 %v1309, %v1473
        %v1475 = vpop.f32.mrb[0].mxu0
        %1476 = vmatprep.mubr.f32.mxu0 0.0
        %1477 = vmatmul.mubr.f32.gmra.mrb[0].mxu0 %v520
        %v1478 = vpop.f32.mrb[0].mxu0
        %v1479 = vadd.f32 %v1314, %v1478
        %v1480 = vpop.f32.mrb[0].mxu0
        %1481 = vmatprep.mubr.f32.mxu0 0.0
        %1482 = vmatmul.mubr.f32.gmra.mrb[0].mxu0 %v521
        %v1483 = vpop.f32.mrb[0].mxu0
        %v1484 = vadd.f32 %v1319, %v1483
        %v1485 = vpop.f32.mrb[0].mxu0
        %1486 = vmatprep.mubr.f32.mxu0 0.0
        %1487 = vmatmul.mubr.f32.gmra.mrb[0].mxu0 %v522
        %v1488 = vpop.f32.mrb[0].mxu0
        %v1489 = vadd.f32 %v1324, %v1488
        %v1490 = vpop.f32.mrb[0].mxu0
        %1491 = vdwg.mxu0
        %v1492 = vld [vmem:[#allocation7] sm:$0x1]
        %v1494 = vlaneseq
        %v1495 = vshrl.u32 %v1494, 7
        %v1496 = vsub.s32 0, %v1495
        %v1497 = vrot.slane %v1492, %v1496
        %v1499 = vmul.f32 %v1394, %v1497
        %v1500 = vmul.f32 %v1399, %v1497
        %v1501 = vmul.f32 %v1404, %v1497
        %v1502 = vmul.f32 %v1409, %v1497
        %v1503 = vmul.f32 %v1414, %v1497
        %v1504 = vmul.f32 %v1419, %v1497
        %v1505 = vmul.f32 %v1424, %v1497
        %v1506 = vmul.f32 %v1429, %v1497
        %v1507 = vmul.f32 %v1434, %v1497
        %v1508 = vmul.f32 %v1439, %v1497
        %v1509 = vmul.f32 %v1444, %v1497
        %v1510 = vmul.f32 %v1449, %v1497
        %v1511 = vmul.f32 %v1454, %v1497
        %v1512 = vmul.f32 %v1459, %v1497
        %v1513 = vmul.f32 %v1464, %v1497
        %v1514 = vmul.f32 %v1469, %v1497
        %v1515 = vmul.f32 %v1474, %v1497
        %v1516 = vmul.f32 %v1479, %v1497
        %v1517 = vmul.f32 %v1484, %v1497
        %v1518 = vmul.f32 %v1489, %v1497
        %v1519 = vld [vmem:[#allocation9] sm:$0x1]
        %v1521 = vlaneseq
        %v1522 = vshrl.u32 %v1521, 7
        %v1523 = vsub.s32 0, %v1522
        %v1524 = vrot.slane %v1519, %v1523
        %v1526 = vadd.f32 %v1499, %v1524
        %v1527 = vadd.f32 %v1500, %v1524
        %v1528 = vadd.f32 %v1501, %v1524
        %v1529 = vadd.f32 %v1502, %v1524
        %v1530 = vadd.f32 %v1503, %v1524
        %v1531 = vadd.f32 %v1504, %v1524
        %v1532 = vadd.f32 %v1505, %v1524
        %v1533 = vadd.f32 %v1506, %v1524
        %v1534 = vadd.f32 %v1507, %v1524
        %v1535 = vadd.f32 %v1508, %v1524
        %v1536 = vadd.f32 %v1509, %v1524
        %v1537 = vadd.f32 %v1510, %v1524
        %v1538 = vadd.f32 %v1511, %v1524
        %v1539 = vadd.f32 %v1512, %v1524
        %v1540 = vadd.f32 %v1513, %v1524
        %v1541 = vadd.f32 %v1514, %v1524
        %v1542 = vadd.f32 %v1515, %v1524
        %v1543 = vadd.f32 %v1516, %v1524
        %v1544 = vadd.f32 %v1517, %v1524
        %v1545 = vadd.f32 %v1518, %v1524
        %v1546 = vmax.f32 %v1526, 0.0
        %v1547 = vmax.f32 %v1527, 0.0
        %v1548 = vmax.f32 %v1528, 0.0
        %v1549 = vmax.f32 %v1529, 0.0
        %v1550 = vmax.f32 %v1530, 0.0
        %v1551 = vmax.f32 %v1531, 0.0
        %v1552 = vmax.f32 %v1532, 0.0
        %v1553 = vmax.f32 %v1533, 0.0
        %v1554 = vmax.f32 %v1534, 0.0
        %v1555 = vmax.f32 %v1535, 0.0
        %v1556 = vmax.f32 %v1536, 0.0
        %v1557 = vmax.f32 %v1537, 0.0
        %v1558 = vmax.f32 %v1538, 0.0
        %v1559 = vmax.f32 %v1539, 0.0
        %v1560 = vmax.f32 %v1540, 0.0
        %v1561 = vmax.f32 %v1541, 0.0
        %v1562 = vmax.f32 %v1542, 0.0
        %v1563 = vmax.f32 %v1543, 0.0
        %v1564 = vmax.f32 %v1544, 0.0
        %v1565 = vmax.f32 %v1545, 0.0
        %v1566 = vlaneseq
        %v1567 = vshrl.u32 %v1566, 7
        %v1568 = vadd.s32 %v1567, 8
        %v1569 = vadd.s32 %v1567, 16
        %v1570 = vadd.s32 %v1567, 24
        %v1571 = vadd.s32 %v1567, 32
        %v1572 = vadd.s32 %v1567, 40
        %v1573 = vadd.s32 %v1567, 48
        %v1574 = vadd.s32 %v1567, 56
        %v1575 = vadd.s32 %v1567, 64
        %v1576 = vadd.s32 %v1567, 72
        %v1577 = vadd.s32 %v1567, 80
        %v1578 = vadd.s32 %v1567, 88
        %v1579 = vadd.s32 %v1567, 96
        %v1580 = vadd.s32 %v1567, 104
        %v1581 = vadd.s32 %v1567, 112
        %v1582 = vadd.s32 %v1567, 120
        %v1583 = vadd.s32 %v1567, 128
        %v1584 = vadd.s32 %v1567, 136
        %v1585 = vadd.s32 %v1567, 144
        %v1586 = vadd.s32 %v1567, 152
        %s1587 = ssub.s32 1, %s326
        %p1588 = scmp.gt.s32.totalorder %s1587, 0
        %s1589 = scalar_select %p1588, %s1587, 0
        %s1590 = smul.u32 %s1589, 16
        %s1591 = ssub.s32 17, %s326
        %s1592 = smul.u32 %s1591, 16
        %v1593 = vstv %s1590
        %vm1594 = vcmp.ge.s32.totalorder %v1567, %v1593
        %vm1595 = vcmp.ge.s32.totalorder %v1568, %v1593
        %vm1596 = vcmp.ge.s32.totalorder %v1569, %v1593
        %vm1597 = vcmp.ge.s32.totalorder %v1570, %v1593
        %vm1598 = vcmp.ge.s32.totalorder %v1571, %v1593
        %vm1599 = vcmp.ge.s32.totalorder %v1572, %v1593
        %vm1600 = vcmp.ge.s32.totalorder %v1573, %v1593
        %vm1601 = vcmp.ge.s32.totalorder %v1574, %v1593
        %vm1602 = vcmp.ge.s32.totalorder %v1575, %v1593
        %vm1603 = vcmp.ge.s32.totalorder %v1576, %v1593
        %vm1604 = vcmp.ge.s32.totalorder %v1577, %v1593
        %vm1605 = vcmp.ge.s32.totalorder %v1578, %v1593
        %vm1606 = vcmp.ge.s32.totalorder %v1579, %v1593
        %vm1607 = vcmp.ge.s32.totalorder %v1580, %v1593
        %vm1608 = vcmp.ge.s32.totalorder %v1581, %v1593
        %vm1609 = vcmp.ge.s32.totalorder %v1582, %v1593
        %vm1610 = vcmp.ge.s32.totalorder %v1583, %v1593
        %vm1611 = vcmp.ge.s32.totalorder %v1584, %v1593
        %vm1612 = vcmp.ge.s32.totalorder %v1585, %v1593
        %vm1613 = vcmp.ge.s32.totalorder %v1586, %v1593
        %v1614 = vstv %s1592
        %vm1615 = vcmp.lt.s32.totalorder %v1567, %v1614
        %vm1616 = vcmp.lt.s32.totalorder %v1568, %v1614
        %vm1617 = vcmp.lt.s32.totalorder %v1569, %v1614
        %vm1618 = vcmp.lt.s32.totalorder %v1570, %v1614
        %vm1619 = vcmp.lt.s32.totalorder %v1571, %v1614
        %vm1620 = vcmp.lt.s32.totalorder %v1572, %v1614
        %vm1621 = vcmp.lt.s32.totalorder %v1573, %v1614
        %vm1622 = vcmp.lt.s32.totalorder %v1574, %v1614
        %vm1623 = vcmp.lt.s32.totalorder %v1575, %v1614
        %vm1624 = vcmp.lt.s32.totalorder %v1576, %v1614
        %vm1625 = vcmp.lt.s32.totalorder %v1577, %v1614
        %vm1626 = vcmp.lt.s32.totalorder %v1578, %v1614
        %vm1627 = vcmp.lt.s32.totalorder %v1579, %v1614
        %vm1628 = vcmp.lt.s32.totalorder %v1580, %v1614
        %vm1629 = vcmp.lt.s32.totalorder %v1581, %v1614
        %vm1630 = vcmp.lt.s32.totalorder %v1582, %v1614
        %vm1631 = vcmp.lt.s32.totalorder %v1583, %v1614
        %vm1632 = vcmp.lt.s32.totalorder %v1584, %v1614
        %vm1633 = vcmp.lt.s32.totalorder %v1585, %v1614
        %vm1634 = vcmp.lt.s32.totalorder %v1586, %v1614
        %vm1635 = vmand %vm1594, %vm1615
        %vm1636 = vmand %vm1595, %vm1616
        %vm1637 = vmand %vm1596, %vm1617
        %vm1638 = vmand %vm1597, %vm1618
        %vm1639 = vmand %vm1598, %vm1619
        %vm1640 = vmand %vm1599, %vm1620
        %vm1641 = vmand %vm1600, %vm1621
        %vm1642 = vmand %vm1601, %vm1622
        %vm1643 = vmand %vm1602, %vm1623
        %vm1644 = vmand %vm1603, %vm1624
        %vm1645 = vmand %vm1604, %vm1625
        %vm1646 = vmand %vm1605, %vm1626
        %vm1647 = vmand %vm1606, %vm1627
        %vm1648 = vmand %vm1607, %vm1628
        %vm1649 = vmand %vm1608, %vm1629
        %vm1650 = vmand %vm1609, %vm1630
        %vm1651 = vmand %vm1610, %vm1631
        %vm1652 = vmand %vm1611, %vm1632
        %vm1653 = vmand %vm1612, %vm1633
        %vm1654 = vmand %vm1613, %vm1634
        %v1655 = vsel %vm1635, 1, 0
        %v1656 = vsel %vm1636, 1, 0
        %v1657 = vsel %vm1637, 1, 0
        %v1658 = vsel %vm1638, 1, 0
        %v1659 = vsel %vm1639, 1, 0
        %v1660 = vsel %vm1640, 1, 0
        %v1661 = vsel %vm1641, 1, 0
        %v1662 = vsel %vm1642, 1, 0
        %v1663 = vsel %vm1643, 1, 0
        %v1664 = vsel %vm1644, 1, 0
        %v1665 = vsel %vm1645, 1, 0
        %v1666 = vsel %vm1646, 1, 0
        %v1667 = vsel %vm1647, 1, 0
        %v1668 = vsel %vm1648, 1, 0
        %v1669 = vsel %vm1649, 1, 0
        %v1670 = vsel %vm1650, 1, 0
        %v1671 = vsel %vm1651, 1, 0
        %v1672 = vsel %vm1652, 1, 0
        %v1673 = vsel %vm1653, 1, 0
        %v1674 = vsel %vm1654, 1, 0
        %vm1675 = vcmp.eq.s32.totalorder %v1655, 1
        %vm1676 = vcmp.eq.s32.totalorder %v1656, 1
        %vm1677 = vcmp.eq.s32.totalorder %v1657, 1
        %vm1678 = vcmp.eq.s32.totalorder %v1658, 1
        %vm1679 = vcmp.eq.s32.totalorder %v1659, 1
        %vm1680 = vcmp.eq.s32.totalorder %v1660, 1
        %vm1681 = vcmp.eq.s32.totalorder %v1661, 1
        %vm1682 = vcmp.eq.s32.totalorder %v1662, 1
        %vm1683 = vcmp.eq.s32.totalorder %v1663, 1
        %vm1684 = vcmp.eq.s32.totalorder %v1664, 1
        %vm1685 = vcmp.eq.s32.totalorder %v1665, 1
        %vm1686 = vcmp.eq.s32.totalorder %v1666, 1
        %vm1687 = vcmp.eq.s32.totalorder %v1667, 1
        %vm1688 = vcmp.eq.s32.totalorder %v1668, 1
        %vm1689 = vcmp.eq.s32.totalorder %v1669, 1
        %vm1690 = vcmp.eq.s32.totalorder %v1670, 1
        %vm1691 = vcmp.eq.s32.totalorder %v1671, 1
        %vm1692 = vcmp.eq.s32.totalorder %v1672, 1
        %vm1693 = vcmp.eq.s32.totalorder %v1673, 1
        %vm1694 = vcmp.eq.s32.totalorder %v1674, 1
        %v1695 = vsel %vm1675, %v1546, 0.0
        %v1696 = vsel %vm1676, %v1547, 0.0
        %v1697 = vsel %vm1677, %v1548, 0.0
        %v1698 = vsel %vm1678, %v1549, 0.0
        %v1699 = vsel %vm1679, %v1550, 0.0
        %v1700 = vsel %vm1680, %v1551, 0.0
        %v1701 = vsel %vm1681, %v1552, 0.0
        %v1702 = vsel %vm1682, %v1553, 0.0
        %v1703 = vsel %vm1683, %v1554, 0.0
        %v1704 = vsel %vm1684, %v1555, 0.0
        %v1705 = vsel %vm1685, %v1556, 0.0
        %v1706 = vsel %vm1686, %v1557, 0.0
        %v1707 = vsel %vm1687, %v1558, 0.0
        %v1708 = vsel %vm1688, %v1559, 0.0
        %v1709 = vsel %vm1689, %v1560, 0.0
        %v1710 = vsel %vm1690, %v1561, 0.0
        %v1711 = vsel %vm1691, %v1562, 0.0
        %v1712 = vsel %vm1692, %v1563, 0.0
        %v1713 = vsel %vm1693, %v1564, 0.0
        %v1714 = vsel %vm1694, %v1565, 0.0
        %vm1735 = vcmask 1040384
        %v1736 = vrot.slane %v1695, 7
        %v1737 = vrot.slane %v1696, 7
        %v1738 = vsel %vm1735, %v1736, %v1737
        %v1739 = vrot.slane %v1697, 7
        %v1740 = vrot.slane %v1698, 7
        %v1741 = vsel %vm1735, %v1739, %v1740
        %v1742 = vrot.slane %v1699, 7
        %v1743 = vrot.slane %v1700, 7
        %v1744 = vsel %vm1735, %v1742, %v1743
        %v1745 = vrot.slane %v1701, 7
        %v1746 = vrot.slane %v1702, 7
        %v1747 = vsel %vm1735, %v1745, %v1746
        %v1748 = vrot.slane %v1703, 7
        %v1749 = vrot.slane %v1704, 7
        %v1750 = vsel %vm1735, %v1748, %v1749
        %v1751 = vrot.slane %v1705, 7
        %v1752 = vrot.slane %v1706, 7
        %v1753 = vsel %vm1735, %v1751, %v1752
        %v1754 = vrot.slane %v1707, 7
        %v1755 = vrot.slane %v1708, 7
        %v1756 = vsel %vm1735, %v1754, %v1755
        %v1757 = vrot.slane %v1709, 7
        %v1758 = vrot.slane %v1710, 7
        %v1759 = vsel %vm1735, %v1757, %v1758
        %v1760 = vrot.slane %v1711, 7
        %v1761 = vrot.slane %v1712, 7
        %v1762 = vsel %vm1735, %v1760, %v1761
        %v1763 = vrot.slane %v1713, 7
        %v1764 = vrot.slane %v1714, 7
        %v1765 = vsel %vm1735, %v1763, %v1764
        %v1796 = vsel %vm1735, 0.0, %v1736
        %v1797 = vsel %vm1735, 0.0, %v1739
        %v1798 = vsel %vm1735, 0.0, %v1742
        %v1799 = vsel %vm1735, 0.0, %v1745
        %v1800 = vsel %vm1735, 0.0, %v1748
        %v1801 = vsel %vm1735, 0.0, %v1751
        %v1802 = vsel %vm1735, 0.0, %v1754
        %v1803 = vsel %vm1735, 0.0, %v1757
        %v1804 = vsel %vm1735, 0.0, %v1760
        %v1805 = vsel %vm1735, 0.0, %v1763
        %v1806 = vsel %vm1735, %v1737, 0.0
        %v1807 = vsel %vm1735, %v1740, 0.0
        %v1808 = vsel %vm1735, %v1743, 0.0
        %v1809 = vsel %vm1735, %v1746, 0.0
        %v1810 = vsel %vm1735, %v1749, 0.0
        %v1811 = vsel %vm1735, %v1752, 0.0
        %v1812 = vsel %vm1735, %v1755, 0.0
        %v1813 = vsel %vm1735, %v1758, 0.0
        %v1814 = vsel %vm1735, %v1761, 0.0
        %v1815 = vsel %vm1735, %v1764, 0.0
        %vm1832 = vcmask 1046528
        %v1833 = vrot.slane %v1796, 1
        %v1834 = vrot.slane %v1738, 1
        %v1835 = vsel %vm1832, %v1833, %v1834
        %v1836 = vrot.slane %v1806, 1
        %v1837 = vsel %vm1832, %v1834, %v1836
        %v1838 = vrot.slane %v1797, 1
        %v1839 = vrot.slane %v1741, 1
        %v1840 = vsel %vm1832, %v1838, %v1839
        %v1841 = vrot.slane %v1807, 1
        %v1842 = vsel %vm1832, %v1839, %v1841
        %v1843 = vrot.slane %v1798, 1
        %v1844 = vrot.slane %v1744, 1
        %v1845 = vsel %vm1832, %v1843, %v1844
        %v1846 = vrot.slane %v1808, 1
        %v1847 = vsel %vm1832, %v1844, %v1846
        %v1848 = vrot.slane %v1799, 1
        %v1849 = vrot.slane %v1747, 1
        %v1850 = vsel %vm1832, %v1848, %v1849
        %v1851 = vrot.slane %v1809, 1
        %v1852 = vsel %vm1832, %v1849, %v1851
        %v1853 = vrot.slane %v1800, 1
        %v1854 = vrot.slane %v1750, 1
        %v1855 = vsel %vm1832, %v1853, %v1854
        %v1856 = vrot.slane %v1810, 1
        %v1857 = vsel %vm1832, %v1854, %v1856
        %v1858 = vrot.slane %v1801, 1
        %v1859 = vrot.slane %v1753, 1
        %v1860 = vsel %vm1832, %v1858, %v1859
        %v1861 = vrot.slane %v1811, 1
        %v1862 = vsel %vm1832, %v1859, %v1861
        %v1863 = vrot.slane %v1802, 1
        %v1864 = vrot.slane %v1756, 1
        %v1865 = vsel %vm1832, %v1863, %v1864
        %v1866 = vrot.slane %v1812, 1
        %v1867 = vsel %vm1832, %v1864, %v1866
        %v1868 = vrot.slane %v1803, 1
        %v1869 = vrot.slane %v1759, 1
        %v1870 = vsel %vm1832, %v1868, %v1869
        %v1871 = vrot.slane %v1813, 1
        %v1872 = vsel %vm1832, %v1869, %v1871
        %vm1889 = vcmask 1045504
        %v1890 = vrot.slane %v1796, 2
        %v1891 = vrot.slane %v1738, 2
        %v1892 = vsel %vm1889, %v1890, %v1891
        %v1893 = vrot.slane %v1806, 2
        %v1894 = vsel %vm1889, %v1891, %v1893
        %v1895 = vrot.slane %v1797, 2
        %v1896 = vrot.slane %v1741, 2
        %v1897 = vsel %vm1889, %v1895, %v1896
        %v1898 = vrot.slane %v1807, 2
        %v1899 = vsel %vm1889, %v1896, %v1898
        %v1900 = vrot.slane %v1798, 2
        %v1901 = vrot.slane %v1744, 2
        %v1902 = vsel %vm1889, %v1900, %v1901
        %v1903 = vrot.slane %v1808, 2
        %v1904 = vsel %vm1889, %v1901, %v1903
        %v1905 = vrot.slane %v1799, 2
        %v1906 = vrot.slane %v1747, 2
        %v1907 = vsel %vm1889, %v1905, %v1906
        %v1908 = vrot.slane %v1809, 2
        %v1909 = vsel %vm1889, %v1906, %v1908
        %v1910 = vrot.slane %v1800, 2
        %v1911 = vrot.slane %v1750, 2
        %v1912 = vsel %vm1889, %v1910, %v1911
        %v1913 = vrot.slane %v1810, 2
        %v1914 = vsel %vm1889, %v1911, %v1913
        %v1915 = vrot.slane %v1801, 2
        %v1916 = vrot.slane %v1753, 2
        %v1917 = vsel %vm1889, %v1915, %v1916
        %v1918 = vrot.slane %v1811, 2
        %v1919 = vsel %vm1889, %v1916, %v1918
        %v1920 = vrot.slane %v1802, 2
        %v1921 = vrot.slane %v1756, 2
        %v1922 = vsel %vm1889, %v1920, %v1921
        %v1923 = vrot.slane %v1812, 2
        %v1924 = vsel %vm1889, %v1921, %v1923
        %v1925 = vrot.slane %v1803, 2
        %v1926 = vrot.slane %v1759, 2
        %v1927 = vsel %vm1889, %v1925, %v1926
        %v1928 = vrot.slane %v1813, 2
        %v1929 = vsel %vm1889, %v1926, %v1928
        %v1948 = vrot.slane %v1804, 1
        %v1949 = vrot.slane %v1762, 1
        %v1950 = vsel %vm1832, %v1948, %v1949
        %v1951 = vrot.slane %v1814, 1
        %v1952 = vsel %vm1832, %v1949, %v1951
        %v1955 = vrot.slane %v1804, 2
        %v1956 = vrot.slane %v1762, 2
        %v1957 = vsel %vm1889, %v1955, %v1956
        %v1958 = vrot.slane %v1814, 2
        %v1959 = vsel %vm1889, %v1956, %v1958
        %v1964 = vrot.slane %v1805, 1
        %v1965 = vrot.slane %v1765, 1
        %v1966 = vsel %vm1832, %v1964, %v1965
        %v1967 = vrot.slane %v1815, 1
        %v1968 = vsel %vm1832, %v1965, %v1967
        %v1971 = vrot.slane %v1805, 2
        %v1972 = vrot.slane %v1765, 2
        %v1973 = vsel %vm1889, %v1971, %v1972
        %v1974 = vrot.slane %v1815, 2
        %v1975 = vsel %vm1889, %v1972, %v1974
        %v1978 = vld [vmem:[#allocation10] sm:$0xff]
        %v1979 = vld [vmem:[#allocation10 + $0x8] sm:$0xff]
        %v1980 = vld [vmem:[#allocation10 + $0x10] sm:$0xff]
        %v1981 = vld [vmem:[#allocation10 + $0x18] sm:$0xff]
        %v1982 = vld [vmem:[#allocation10 + $0x20] sm:$0xff]
        %v1983 = vld [vmem:[#allocation10 + $0x28] sm:$0xff]
        %v1984 = vld [vmem:[#allocation10 + $0x30] sm:$0xff]
        %v1985 = vld [vmem:[#allocation10 + $0x38] sm:$0xff]
        %v1986 = vld [vmem:[#allocation10 + $0x40] sm:$0xff]
        %v1987 = vld [vmem:[#allocation10 + $0x48] sm:$0xff]
        %v1988 = vld [vmem:[#allocation10 + $0x50] sm:$0xff]
        %v1989 = vld [vmem:[#allocation10 + $0x58] sm:$0xff]
        %v1990 = vld [vmem:[#allocation10 + $0x60] sm:$0xff]
        %v1991 = vld [vmem:[#allocation10 + $0x68] sm:$0xff]
        %v1992 = vld [vmem:[#allocation10 + $0x70] sm:$0xff]
        %v1993 = vld [vmem:[#allocation10 + $0x78] sm:$0xff]
        %v1994 = vld [vmem:[#allocation10 + $0x80] sm:$0xff]
        %v1995 = vld [vmem:[#allocation10 + $0x88] sm:$0xff]
        %v1996 = vld [vmem:[#allocation10 + $0x90] sm:$0xff]
        %v1997 = vld [vmem:[#allocation10 + $0x98] sm:$0xff]
        %v1998 = vld [vmem:[#allocation10 + $0xa0] sm:$0xff]
        %v1999 = vld [vmem:[#allocation10 + $0xa8] sm:$0xff]
        %v2000 = vld [vmem:[#allocation10 + $0xb0] sm:$0xff]
        %v2001 = vld [vmem:[#allocation10 + $0xb8] sm:$0xff]
        %v2002 = vld [vmem:[#allocation10 + $0xc0] sm:$0xff]
        %v2003 = vld [vmem:[#allocation10 + $0xc8] sm:$0xff]
        %v2004 = vld [vmem:[#allocation10 + $0xd0] sm:$0xff]
        %v2005 = vld [vmem:[#allocation10 + $0xd8] sm:$0xff]
        %v2006 = vld [vmem:[#allocation10 + $0xe0] sm:$0xff]
        %v2007 = vld [vmem:[#allocation10 + $0xe8] sm:$0xff]
        %v2008 = vld [vmem:[#allocation10 + $0xf0] sm:$0xff]
        %v2009 = vld [vmem:[#allocation10 + $0xf8] sm:$0xff]
        %v2010 = vld [vmem:[#allocation10 + $0x100] sm:$0xff]
        %v2011 = vld [vmem:[#allocation10 + $0x108] sm:$0xff]
        %v2012 = vld [vmem:[#allocation10 + $0x110] sm:$0xff]
        %v2013 = vld [vmem:[#allocation10 + $0x118] sm:$0xff]
        %v2014 = vld [vmem:[#allocation10 + $0x120] sm:$0xff]
        %v2015 = vld [vmem:[#allocation10 + $0x128] sm:$0xff]
        %v2016 = vld [vmem:[#allocation10 + $0x130] sm:$0xff]
        %v2017 = vld [vmem:[#allocation10 + $0x138] sm:$0xff]
        %v2018 = vld [vmem:[#allocation10 + $0x140] sm:$0xff]
        %v2019 = vld [vmem:[#allocation10 + $0x148] sm:$0xff]
        %v2020 = vld [vmem:[#allocation10 + $0x150] sm:$0xff]
        %v2021 = vld [vmem:[#allocation10 + $0x158] sm:$0xff]
        %v2022 = vld [vmem:[#allocation10 + $0x160] sm:$0xff]
        %v2023 = vld [vmem:[#allocation10 + $0x168] sm:$0xff]
        %v2024 = vld [vmem:[#allocation10 + $0x170] sm:$0xff]
        %v2025 = vld [vmem:[#allocation10 + $0x178] sm:$0xff]
        %v2026 = vld [vmem:[#allocation10 + $0x180] sm:$0xff]
        %v2027 = vld [vmem:[#allocation10 + $0x188] sm:$0xff]
        %v2028 = vld [vmem:[#allocation10 + $0x190] sm:$0xff]
        %v2029 = vld [vmem:[#allocation10 + $0x198] sm:$0xff]
        %v2030 = vld [vmem:[#allocation10 + $0x1a0] sm:$0xff]
        %v2031 = vld [vmem:[#allocation10 + $0x1a8] sm:$0xff]
        %v2032 = vld [vmem:[#allocation10 + $0x1b0] sm:$0xff]
        %v2033 = vld [vmem:[#allocation10 + $0x1b8] sm:$0xff]
        %v2034 = vld [vmem:[#allocation10 + $0x1c0] sm:$0xff]
        %v2035 = vld [vmem:[#allocation10 + $0x1c8] sm:$0xff]
        %v2036 = vld [vmem:[#allocation10 + $0x1d0] sm:$0xff]
        %v2037 = vld [vmem:[#allocation10 + $0x1d8] sm:$0xff]
        %v2038 = vld [vmem:[#allocation10 + $0x1e0] sm:$0xff]
        %v2039 = vld [vmem:[#allocation10 + $0x1e8] sm:$0xff]
        %v2040 = vld [vmem:[#allocation10 + $0x1f0] sm:$0xff]
        %v2041 = vld [vmem:[#allocation10 + $0x1f8] sm:$0xff]
        %v2042 = vld [vmem:[#allocation10 + $0x200] sm:$0xff]
        %v2043 = vld [vmem:[#allocation10 + $0x208] sm:$0xff]
        %v2044 = vld [vmem:[#allocation10 + $0x210] sm:$0xff]
        %v2045 = vld [vmem:[#allocation10 + $0x218] sm:$0xff]
        %v2046 = vld [vmem:[#allocation10 + $0x220] sm:$0xff]
        %v2047 = vld [vmem:[#allocation10 + $0x228] sm:$0xff]
        %v2048 = vld [vmem:[#allocation10 + $0x230] sm:$0xff]
        %v2049 = vld [vmem:[#allocation10 + $0x238] sm:$0xff]
        %v2050 = vld [vmem:[#allocation10 + $0x240] sm:$0xff]
        %v2051 = vld [vmem:[#allocation10 + $0x248] sm:$0xff]
        %v2052 = vld [vmem:[#allocation10 + $0x250] sm:$0xff]
        %v2053 = vld [vmem:[#allocation10 + $0x258] sm:$0xff]
        %v2054 = vld [vmem:[#allocation10 + $0x260] sm:$0xff]
        %v2055 = vld [vmem:[#allocation10 + $0x268] sm:$0xff]
        %v2056 = vld [vmem:[#allocation10 + $0x270] sm:$0xff]
        %v2057 = vld [vmem:[#allocation10 + $0x278] sm:$0xff]
        %v2058 = vld [vmem:[#allocation10 + $0x280] sm:$0xff]
        %v2059 = vld [vmem:[#allocation10 + $0x288] sm:$0xff]
        %v2060 = vld [vmem:[#allocation10 + $0x290] sm:$0xff]
        %v2061 = vld [vmem:[#allocation10 + $0x298] sm:$0xff]
        %v2062 = vld [vmem:[#allocation10 + $0x2a0] sm:$0xff]
        %v2063 = vld [vmem:[#allocation10 + $0x2a8] sm:$0xff]
        %v2064 = vld [vmem:[#allocation10 + $0x2b0] sm:$0xff]
        %v2065 = vld [vmem:[#allocation10 + $0x2b8] sm:$0xff]
        %v2066 = vld [vmem:[#allocation10 + $0x2c0] sm:$0xff]
        %v2067 = vld [vmem:[#allocation10 + $0x2c8] sm:$0xff]
        %v2068 = vld [vmem:[#allocation10 + $0x2d0] sm:$0xff]
        %v2069 = vld [vmem:[#allocation10 + $0x2d8] sm:$0xff]
        %v2070 = vld [vmem:[#allocation10 + $0x2e0] sm:$0xff]
        %v2071 = vld [vmem:[#allocation10 + $0x2e8] sm:$0xff]
        %v2072 = vld [vmem:[#allocation10 + $0x2f0] sm:$0xff]
        %v2073 = vld [vmem:[#allocation10 + $0x2f8] sm:$0xff]
        %v2074 = vld [vmem:[#allocation10 + $0x300] sm:$0xff]
        %v2075 = vld [vmem:[#allocation10 + $0x308] sm:$0xff]
        %v2076 = vld [vmem:[#allocation10 + $0x310] sm:$0xff]
        %v2077 = vld [vmem:[#allocation10 + $0x318] sm:$0xff]
        %v2078 = vld [vmem:[#allocation10 + $0x320] sm:$0xff]
        %v2079 = vld [vmem:[#allocation10 + $0x328] sm:$0xff]
        %v2080 = vld [vmem:[#allocation10 + $0x330] sm:$0xff]
        %v2081 = vld [vmem:[#allocation10 + $0x338] sm:$0xff]
        %v2082 = vld [vmem:[#allocation10 + $0x340] sm:$0xff]
        %v2083 = vld [vmem:[#allocation10 + $0x348] sm:$0xff]
        %v2084 = vld [vmem:[#allocation10 + $0x350] sm:$0xff]
        %v2085 = vld [vmem:[#allocation10 + $0x358] sm:$0xff]
        %v2086 = vld [vmem:[#allocation10 + $0x360] sm:$0xff]
        %v2087 = vld [vmem:[#allocation10 + $0x368] sm:$0xff]
        %v2088 = vld [vmem:[#allocation10 + $0x370] sm:$0xff]
        %v2089 = vld [vmem:[#allocation10 + $0x378] sm:$0xff]
        %v2090 = vld [vmem:[#allocation10 + $0x380] sm:$0xff]
        %v2091 = vld [vmem:[#allocation10 + $0x388] sm:$0xff]
        %v2092 = vld [vmem:[#allocation10 + $0x390] sm:$0xff]
        %v2093 = vld [vmem:[#allocation10 + $0x398] sm:$0xff]
        %v2094 = vld [vmem:[#allocation10 + $0x3a0] sm:$0xff]
        %v2095 = vld [vmem:[#allocation10 + $0x3a8] sm:$0xff]
        %v2096 = vld [vmem:[#allocation10 + $0x3b0] sm:$0xff]
        %v2097 = vld [vmem:[#allocation10 + $0x3b8] sm:$0xff]
        %v2098 = vld [vmem:[#allocation10 + $0x3c0] sm:$0xff]
        %v2099 = vld [vmem:[#allocation10 + $0x3c8] sm:$0xff]
        %v2100 = vld [vmem:[#allocation10 + $0x3d0] sm:$0xff]
        %v2101 = vld [vmem:[#allocation10 + $0x3d8] sm:$0xff]
        %v2102 = vld [vmem:[#allocation10 + $0x3e0] sm:$0xff]
        %v2103 = vld [vmem:[#allocation10 + $0x3e8] sm:$0xff]
        %v2104 = vld [vmem:[#allocation10 + $0x3f0] sm:$0xff]
        %v2105 = vld [vmem:[#allocation10 + $0x3f8] sm:$0xff]
        %v2106 = vld [vmem:[#allocation10 + $0x400] sm:$0xff]
        %v2107 = vld [vmem:[#allocation10 + $0x408] sm:$0xff]
        %v2108 = vld [vmem:[#allocation10 + $0x410] sm:$0xff]
        %v2109 = vld [vmem:[#allocation10 + $0x418] sm:$0xff]
        %v2110 = vld [vmem:[#allocation10 + $0x420] sm:$0xff]
        %v2111 = vld [vmem:[#allocation10 + $0x428] sm:$0xff]
        %v2112 = vld [vmem:[#allocation10 + $0x430] sm:$0xff]
        %v2113 = vld [vmem:[#allocation10 + $0x438] sm:$0xff]
        %v2114 = vld [vmem:[#allocation10 + $0x440] sm:$0xff]
        %v2115 = vld [vmem:[#allocation10 + $0x448] sm:$0xff]
        %v2116 = vld [vmem:[#allocation10 + $0x450] sm:$0xff]
        %v2117 = vld [vmem:[#allocation10 + $0x458] sm:$0xff]
        %v2118 = vld [vmem:[#allocation10 + $0x460] sm:$0xff]
        %v2119 = vld [vmem:[#allocation10 + $0x468] sm:$0xff]
        %v2120 = vld [vmem:[#allocation10 + $0x470] sm:$0xff]
        %v2121 = vld [vmem:[#allocation10 + $0x478] sm:$0xff]
        %2122 = vmatprep.subr.mxu0 0.0
        %2123 = vmatpush1.msra.mxu0 %v1978
        %2124 = vmatprep.subr.mxu0 0.0
        %2125 = vmatpush1.msra.mxu0 %v1979
        %2126 = vmatprep.subr.mxu0 0.0
        %2127 = vmatpush1.msra.mxu0 %v1980
        %2128 = vmatprep.subr.mxu0 0.0
        %2129 = vmatpush1.msra.mxu0 %v1981
        %2130 = vmatprep.subr.mxu0 0.0
        %2131 = vmatpush1.msra.mxu0 %v1982
        %2132 = vmatprep.subr.mxu0 0.0
        %2133 = vmatpush1.msra.mxu0 %v1983
        %2134 = vmatprep.subr.mxu0 0.0
        %2135 = vmatpush1.msra.mxu0 %v1984
        %2136 = vmatprep.subr.mxu0 0.0
        %2137 = vmatpush1.msra.mxu0 %v1985
        %2138 = vmatprep.subr.mxu0 0.0
        %2139 = vmatpush1.msra.mxu0 %v1986
        %2140 = vmatprep.subr.mxu0 0.0
        %2141 = vmatpush1.msra.mxu0 %v1987
        %2142 = vmatprep.subr.mxu0 0.0
        %2143 = vmatpush1.msra.mxu0 %v1988
        %2144 = vmatprep.subr.mxu0 0.0
        %2145 = vmatpush1.msra.mxu0 %v1989
        %2146 = vmatprep.subr.mxu0 0.0
        %2147 = vmatpush1.msra.mxu0 %v1990
        %2148 = vmatprep.subr.mxu0 0.0
        %2149 = vmatpush1.msra.mxu0 %v1991
        %2150 = vmatprep.subr.mxu0 0.0
        %2151 = vmatpush1.msra.mxu0 %v1992
        %2152 = vmatprep.subr.mxu0 0.0
        %2153 = vmatpush1.msra.mxu0 %v1993
        %2154 = vmatprep.subr.mxu0 0.0
        %2155 = vmatpush1.msra.mxu0 %v1994
        %2156 = vmatprep.subr.mxu0 0.0
        %2157 = vmatpush1.msra.mxu0 %v1995
        %2158 = vmatprep.subr.mxu0 0.0
        %2159 = vmatpush1.msra.mxu0 %v1996
        %2160 = vmatprep.subr.mxu0 0.0
        %2161 = vmatpush1.msra.mxu0 %v1997
        %2162 = vmatprep.subr.mxu0 0.0
        %2163 = vmatpush1.msra.mxu0 %v1998
        %2164 = vmatprep.subr.mxu0 0.0
        %2165 = vmatpush1.msra.mxu0 %v1999
        %2166 = vmatprep.subr.mxu0 0.0
        %2167 = vmatpush1.msra.mxu0 %v2000
        %2168 = vmatprep.subr.mxu0 0.0
        %2169 = vmatpush1.msra.mxu0 %v2001
        %2170 = vmatprep.subr.mxu0 0.0
        %2171 = vmatpush1.msra.mxu0 %v2002
        %2172 = vmatprep.subr.mxu0 0.0
        %2173 = vmatpush1.msra.mxu0 %v2003
        %2174 = vmatprep.subr.mxu0 0.0
        %2175 = vmatpush1.msra.mxu0 %v2004
        %2176 = vmatprep.subr.mxu0 0.0
        %2177 = vmatpush1.msra.mxu0 %v2005
        %2178 = vmatprep.subr.mxu0 0.0
        %2179 = vmatpush1.msra.mxu0 %v2006
        %2180 = vmatprep.subr.mxu0 0.0
        %2181 = vmatpush1.msra.mxu0 %v2007
        %2182 = vmatprep.subr.mxu0 0.0
        %2183 = vmatpush1.msra.mxu0 %v2008
        %2184 = vmatprep.subr.mxu0 0.0
        %2185 = vmatpush1.msra.mxu0 %v2009
        %2186 = vmatprep.mubr.f32.mxu0 %v1835
        %2187 = vmatmul.mubr.f32.gmra.mrb[0].mxu0 %v1796
        %v2188 = vpop.f32.mrb[0].mxu0
        %v2189 = vadd.f32 0.0, %v2188
        %v2190 = vpop.f32.mrb[0].mxu0
        %2191 = vmatprep.mubr.f32.mxu0 %v1837
        %2192 = vmatmul.mubr.f32.gmra.mrb[0].mxu0 %v1738
        %v2193 = vpop.f32.mrb[0].mxu0
        %v2194 = vadd.f32 0.0, %v2193
        %v2195 = vpop.f32.mrb[0].mxu0
        %2196 = vmatprep.mubr.f32.mxu0 %v1840
        %2197 = vmatmul.mubr.f32.gmra.mrb[0].mxu0 %v1797
        %v2198 = vpop.f32.mrb[0].mxu0
        %v2199 = vadd.f32 0.0, %v2198
        %v2200 = vpop.f32.mrb[0].mxu0
        %2201 = vmatprep.mubr.f32.mxu0 %v1842
        %2202 = vmatmul.mubr.f32.gmra.mrb[0].mxu0 %v1741
        %v2203 = vpop.f32.mrb[0].mxu0
        %v2204 = vadd.f32 0.0, %v2203
        %v2205 = vpop.f32.mrb[0].mxu0
        %2206 = vmatprep.mubr.f32.mxu0 %v1845
        %2207 = vmatmul.mubr.f32.gmra.mrb[0].mxu0 %v1798
        %v2208 = vpop.f32.mrb[0].mxu0
        %v2209 = vadd.f32 0.0, %v2208
        %v2210 = vpop.f32.mrb[0].mxu0
        %2211 = vmatprep.mubr.f32.mxu0 %v1847
        %2212 = vmatmul.mubr.f32.gmra.mrb[0].mxu0 %v1744
        %v2213 = vpop.f32.mrb[0].mxu0
        %v2214 = vadd.f32 0.0, %v2213
        %v2215 = vpop.f32.mrb[0].mxu0
        %2216 = vmatprep.mubr.f32.mxu0 %v1850
        %2217 = vmatmul.mubr.f32.gmra.mrb[0].mxu0 %v1799
        %v2218 = vpop.f32.mrb[0].mxu0
        %v2219 = vadd.f32 0.0, %v2218
        %v2220 = vpop.f32.mrb[0].mxu0
        %2221 = vmatprep.mubr.f32.mxu0 %v1852
        %2222 = vmatmul.mubr.f32.gmra.mrb[0].mxu0 %v1747
        %v2223 = vpop.f32.mrb[0].mxu0
        %v2224 = vadd.f32 0.0, %v2223
        %v2225 = vpop.f32.mrb[0].mxu0
        %2226 = vmatprep.mubr.f32.mxu0 %v1855
        %2227 = vmatmul.mubr.f32.gmra.mrb[0].mxu0 %v1800
        %v2228 = vpop.f32.mrb[0].mxu0
        %v2229 = vadd.f32 0.0, %v2228
        %v2230 = vpop.f32.mrb[0].mxu0
        %2231 = vmatprep.mubr.f32.mxu0 %v1857
        %2232 = vmatmul.mubr.f32.gmra.mrb[0].mxu0 %v1750
        %v2233 = vpop.f32.mrb[0].mxu0
        %v2234 = vadd.f32 0.0, %v2233
        %v2235 = vpop.f32.mrb[0].mxu0
        %2236 = vmatprep.mubr.f32.mxu0 %v1860
        %2237 = vmatmul.mubr.f32.gmra.mrb[0].mxu0 %v1801
        %v2238 = vpop.f32.mrb[0].mxu0
        %v2239 = vadd.f32 0.0, %v2238
        %v2240 = vpop.f32.mrb[0].mxu0
        %2241 = vmatprep.mubr.f32.mxu0 %v1862
        %2242 = vmatmul.mubr.f32.gmra.mrb[0].mxu0 %v1753
        %v2243 = vpop.f32.mrb[0].mxu0
        %v2244 = vadd.f32 0.0, %v2243
        %v2245 = vpop.f32.mrb[0].mxu0
        %2246 = vmatprep.mubr.f32.mxu0 %v1865
        %2247 = vmatmul.mubr.f32.gmra.mrb[0].mxu0 %v1802
        %v2248 = vpop.f32.mrb[0].mxu0
        %v2249 = vadd.f32 0.0, %v2248
        %v2250 = vpop.f32.mrb[0].mxu0
        %2251 = vmatprep.mubr.f32.mxu0 %v1867
        %2252 = vmatmul.mubr.f32.gmra.mrb[0].mxu0 %v1756
        %v2253 = vpop.f32.mrb[0].mxu0
        %v2254 = vadd.f32 0.0, %v2253
        %v2255 = vpop.f32.mrb[0].mxu0
        %2256 = vmatprep.mubr.f32.mxu0 %v1870
        %2257 = vmatmul.mubr.f32.gmra.mrb[0].mxu0 %v1803
        %v2258 = vpop.f32.mrb[0].mxu0
        %v2259 = vadd.f32 0.0, %v2258
        %v2260 = vpop.f32.mrb[0].mxu0
        %2261 = vmatprep.mubr.f32.mxu0 %v1872
        %2262 = vmatmul.mubr.f32.gmra.mrb[0].mxu0 %v1759
        %v2263 = vpop.f32.mrb[0].mxu0
        %v2264 = vadd.f32 0.0, %v2263
        %v2265 = vpop.f32.mrb[0].mxu0
        %2266 = vdwg.mxu0
        %2267 = vmatprep.subr.mxu0 0.0
        %2268 = vmatpush1.msra.mxu0 %v2010
        %2269 = vmatprep.subr.mxu0 0.0
        %2270 = vmatpush1.msra.mxu0 %v2011
        %2271 = vmatprep.subr.mxu0 0.0
        %2272 = vmatpush1.msra.mxu0 %v2012
        %2273 = vmatprep.subr.mxu0 0.0
        %2274 = vmatpush1.msra.mxu0 %v2013
        %2275 = vmatprep.subr.mxu0 0.0
        %2276 = vmatpush1.msra.mxu0 %v2014
        %2277 = vmatprep.subr.mxu0 0.0
        %2278 = vmatpush1.msra.mxu0 %v2015
        %2279 = vmatprep.subr.mxu0 0.0
        %2280 = vmatpush1.msra.mxu0 %v2016
        %2281 = vmatprep.subr.mxu0 0.0
        %2282 = vmatpush1.msra.mxu0 %v2017
        %2283 = vmatprep.subr.mxu0 0.0
        %2284 = vmatpush1.msra.mxu0 %v2018
        %2285 = vmatprep.subr.mxu0 0.0
        %2286 = vmatpush1.msra.mxu0 %v2019
        %2287 = vmatprep.subr.mxu0 0.0
        %2288 = vmatpush1.msra.mxu0 %v2020
        %2289 = vmatprep.subr.mxu0 0.0
        %2290 = vmatpush1.msra.mxu0 %v2021
        %2291 = vmatprep.subr.mxu0 0.0
        %2292 = vmatpush1.msra.mxu0 %v2022
        %2293 = vmatprep.subr.mxu0 0.0
        %2294 = vmatpush1.msra.mxu0 %v2023
        %2295 = vmatprep.subr.mxu0 0.0
        %2296 = vmatpush1.msra.mxu0 %v2024
        %2297 = vmatprep.subr.mxu0 0.0
        %2298 = vmatpush1.msra.mxu0 %v2025
        %2299 = vmatprep.subr.mxu0 0.0
        %2300 = vmatpush1.msra.mxu0 %v2026
        %2301 = vmatprep.subr.mxu0 0.0
        %2302 = vmatpush1.msra.mxu0 %v2027
        %2303 = vmatprep.subr.mxu0 0.0
        %2304 = vmatpush1.msra.mxu0 %v2028
        %2305 = vmatprep.subr.mxu0 0.0
        %2306 = vmatpush1.msra.mxu0 %v2029
        %2307 = vmatprep.subr.mxu0 0.0
        %2308 = vmatpush1.msra.mxu0 %v2030
        %2309 = vmatprep.subr.mxu0 0.0
        %2310 = vmatpush1.msra.mxu0 %v2031
        %2311 = vmatprep.subr.mxu0 0.0
        %2312 = vmatpush1.msra.mxu0 %v2032
        %2313 = vmatprep.subr.mxu0 0.0
        %2314 = vmatpush1.msra.mxu0 %v2033
        %2315 = vmatprep.subr.mxu0 0.0
        %2316 = vmatpush1.msra.mxu0 %v2034
        %2317 = vmatprep.subr.mxu0 0.0
        %2318 = vmatpush1.msra.mxu0 %v2035
        %2319 = vmatprep.subr.mxu0 0.0
        %2320 = vmatpush1.msra.mxu0 %v2036
        %2321 = vmatprep.subr.mxu0 0.0
        %2322 = vmatpush1.msra.mxu0 %v2037
        %2323 = vmatprep.subr.mxu0 0.0
        %2324 = vmatpush1.msra.mxu0 %v2038
        %2325 = vmatprep.subr.mxu0 0.0
        %2326 = vmatpush1.msra.mxu0 %v2039
        %2327 = vmatprep.subr.mxu0 0.0
        %2328 = vmatpush1.msra.mxu0 %v2040
        %2329 = vmatprep.subr.mxu0 0.0
        %2330 = vmatpush1.msra.mxu0 %v2041
        %2331 = vmatprep.mubr.f32.mxu0 %v1797
        %2332 = vmatmul.mubr.f32.gmra.mrb[0].mxu0 %v1892
        %v2333 = vpop.f32.mrb[0].mxu0
        %v2334 = vadd.f32 %v2189, %v2333
        %v2335 = vpop.f32.mrb[0].mxu0
        %2336 = vmatprep.mubr.f32.mxu0 %v1741
        %2337 = vmatmul.mubr.f32.gmra.mrb[0].mxu0 %v1894
        %v2338 = vpop.f32.mrb[0].mxu0
        %v2339 = vadd.f32 %v2194, %v2338
        %v2340 = vpop.f32.mrb[0].mxu0
        %2341 = vmatprep.mubr.f32.mxu0 %v1798
        %2342 = vmatmul.mubr.f32.gmra.mrb[0].mxu0 %v1897
        %v2343 = vpop.f32.mrb[0].mxu0
        %v2344 = vadd.f32 %v2199, %v2343
        %v2345 = vpop.f32.mrb[0].mxu0
        %2346 = vmatprep.mubr.f32.mxu0 %v1744
        %2347 = vmatmul.mubr.f32.gmra.mrb[0].mxu0 %v1899
        %v2348 = vpop.f32.mrb[0].mxu0
        %v2349 = vadd.f32 %v2204, %v2348
        %v2350 = vpop.f32.mrb[0].mxu0
        %2351 = vmatprep.mubr.f32.mxu0 %v1799
        %2352 = vmatmul.mubr.f32.gmra.mrb[0].mxu0 %v1902
        %v2353 = vpop.f32.mrb[0].mxu0
        %v2354 = vadd.f32 %v2209, %v2353
        %v2355 = vpop.f32.mrb[0].mxu0
        %2356 = vmatprep.mubr.f32.mxu0 %v1747
        %2357 = vmatmul.mubr.f32.gmra.mrb[0].mxu0 %v1904
        %v2358 = vpop.f32.mrb[0].mxu0
        %v2359 = vadd.f32 %v2214, %v2358
        %v2360 = vpop.f32.mrb[0].mxu0
        %2361 = vmatprep.mubr.f32.mxu0 %v1800
        %2362 = vmatmul.mubr.f32.gmra.mrb[0].mxu0 %v1907
        %v2363 = vpop.f32.mrb[0].mxu0
        %v2364 = vadd.f32 %v2219, %v2363
        %v2365 = vpop.f32.mrb[0].mxu0
        %2366 = vmatprep.mubr.f32.mxu0 %v1750
        %2367 = vmatmul.mubr.f32.gmra.mrb[0].mxu0 %v1909
        %v2368 = vpop.f32.mrb[0].mxu0
        %v2369 = vadd.f32 %v2224, %v2368
        %v2370 = vpop.f32.mrb[0].mxu0
        %2371 = vmatprep.mubr.f32.mxu0 %v1801
        %2372 = vmatmul.mubr.f32.gmra.mrb[0].mxu0 %v1912
        %v2373 = vpop.f32.mrb[0].mxu0
        %v2374 = vadd.f32 %v2229, %v2373
        %v2375 = vpop.f32.mrb[0].mxu0
        %2376 = vmatprep.mubr.f32.mxu0 %v1753
        %2377 = vmatmul.mubr.f32.gmra.mrb[0].mxu0 %v1914
        %v2378 = vpop.f32.mrb[0].mxu0
        %v2379 = vadd.f32 %v2234, %v2378
        %v2380 = vpop.f32.mrb[0].mxu0
        %2381 = vmatprep.mubr.f32.mxu0 %v1802
        %2382 = vmatmul.mubr.f32.gmra.mrb[0].mxu0 %v1917
        %v2383 = vpop.f32.mrb[0].mxu0
        %v2384 = vadd.f32 %v2239, %v2383
        %v2385 = vpop.f32.mrb[0].mxu0
        %2386 = vmatprep.mubr.f32.mxu0 %v1756
        %2387 = vmatmul.mubr.f32.gmra.mrb[0].mxu0 %v1919
        %v2388 = vpop.f32.mrb[0].mxu0
        %v2389 = vadd.f32 %v2244, %v2388
        %v2390 = vpop.f32.mrb[0].mxu0
        %2391 = vmatprep.mubr.f32.mxu0 %v1803
        %2392 = vmatmul.mubr.f32.gmra.mrb[0].mxu0 %v1922
        %v2393 = vpop.f32.mrb[0].mxu0
        %v2394 = vadd.f32 %v2249, %v2393
        %v2395 = vpop.f32.mrb[0].mxu0
        %2396 = vmatprep.mubr.f32.mxu0 %v1759
        %2397 = vmatmul.mubr.f32.gmra.mrb[0].mxu0 %v1924
        %v2398 = vpop.f32.mrb[0].mxu0
        %v2399 = vadd.f32 %v2254, %v2398
        %v2400 = vpop.f32.mrb[0].mxu0
        %2401 = vmatprep.mubr.f32.mxu0 %v1804
        %2402 = vmatmul.mubr.f32.gmra.mrb[0].mxu0 %v1927
        %v2403 = vpop.f32.mrb[0].mxu0
        %v2404 = vadd.f32 %v2259, %v2403
        %v2405 = vpop.f32.mrb[0].mxu0
        %2406 = vmatprep.mubr.f32.mxu0 %v1762
        %2407 = vmatmul.mubr.f32.gmra.mrb[0].mxu0 %v1929
        %v2408 = vpop.f32.mrb[0].mxu0
        %v2409 = vadd.f32 %v2264, %v2408
        %v2410 = vpop.f32.mrb[0].mxu0
        %2411 = vdwg.mxu0
        %2412 = vmatprep.subr.mxu0 0.0
        %2413 = vmatpush1.msra.mxu0 %v2042
        %2414 = vmatprep.subr.mxu0 0.0
        %2415 = vmatpush1.msra.mxu0 %v2043
        %2416 = vmatprep.subr.mxu0 0.0
        %2417 = vmatpush1.msra.mxu0 %v2044
        %2418 = vmatprep.subr.mxu0 0.0
        %2419 = vmatpush1.msra.mxu0 %v2045
        %2420 = vmatprep.subr.mxu0 0.0
        %2421 = vmatpush1.msra.mxu0 %v2046
        %2422 = vmatprep.subr.mxu0 0.0
        %2423 = vmatpush1.msra.mxu0 %v2047
        %2424 = vmatprep.subr.mxu0 0.0
        %2425 = vmatpush1.msra.mxu0 %v2048
        %2426 = vmatprep.subr.mxu0 0.0
        %2427 = vmatpush1.msra.mxu0 %v2049
        %2428 = vmatprep.subr.mxu0 0.0
        %2429 = vmatpush1.msra.mxu0 %v2050
        %2430 = vmatprep.subr.mxu0 0.0
        %2431 = vmatpush1.msra.mxu0 %v2051
        %2432 = vmatprep.subr.mxu0 0.0
        %2433 = vmatpush1.msra.mxu0 %v2052
        %2434 = vmatprep.subr.mxu0 0.0
        %2435 = vmatpush1.msra.mxu0 %v2053
        %2436 = vmatprep.subr.mxu0 0.0
        %2437 = vmatpush1.msra.mxu0 %v2054
        %2438 = vmatprep.subr.mxu0 0.0
        %2439 = vmatpush1.msra.mxu0 %v2055
        %2440 = vmatprep.subr.mxu0 0.0
        %2441 = vmatpush1.msra.mxu0 %v2056
        %2442 = vmatprep.subr.mxu0 0.0
        %2443 = vmatpush1.msra.mxu0 %v2057
        %2444 = vmatprep.subr.mxu0 0.0
        %2445 = vmatpush1.msra.mxu0 %v2058
        %2446 = vmatprep.subr.mxu0 0.0
        %2447 = vmatpush1.msra.mxu0 %v2059
        %2448 = vmatprep.subr.mxu0 0.0
        %2449 = vmatpush1.msra.mxu0 %v2060
        %2450 = vmatprep.subr.mxu0 0.0
        %2451 = vmatpush1.msra.mxu0 %v2061
        %2452 = vmatprep.subr.mxu0 0.0
        %2453 = vmatpush1.msra.mxu0 %v2062
        %2454 = vmatprep.subr.mxu0 0.0
        %2455 = vmatpush1.msra.mxu0 %v2063
        %2456 = vmatprep.subr.mxu0 0.0
        %2457 = vmatpush1.msra.mxu0 %v2064
        %2458 = vmatprep.subr.mxu0 0.0
        %2459 = vmatpush1.msra.mxu0 %v2065
        %2460 = vmatprep.subr.mxu0 0.0
        %2461 = vmatpush1.msra.mxu0 %v2066
        %2462 = vmatprep.subr.mxu0 0.0
        %2463 = vmatpush1.msra.mxu0 %v2067
        %2464 = vmatprep.subr.mxu0 0.0
        %2465 = vmatpush1.msra.mxu0 %v2068
        %2466 = vmatprep.subr.mxu0 0.0
        %2467 = vmatpush1.msra.mxu0 %v2069
        %2468 = vmatprep.subr.mxu0 0.0
        %2469 = vmatpush1.msra.mxu0 %v2070
        %2470 = vmatprep.subr.mxu0 0.0
        %2471 = vmatpush1.msra.mxu0 %v2071
        %2472 = vmatprep.subr.mxu0 0.0
        %2473 = vmatpush1.msra.mxu0 %v2072
        %2474 = vmatprep.subr.mxu0 0.0
        %2475 = vmatpush1.msra.mxu0 %v2073
        %2476 = vmatprep.mubr.f32.mxu0 %v1897
        %2477 = vmatmul.mubr.f32.gmra.mrb[0].mxu0 %v1840
        %v2478 = vpop.f32.mrb[0].mxu0
        %v2479 = vadd.f32 %v2334, %v2478
        %v2480 = vpop.f32.mrb[0].mxu0
        %2481 = vmatprep.mubr.f32.mxu0 %v1899
        %2482 = vmatmul.mubr.f32.gmra.mrb[0].mxu0 %v1842
        %v2483 = vpop.f32.mrb[0].mxu0
        %v2484 = vadd.f32 %v2339, %v2483
        %v2485 = vpop.f32.mrb[0].mxu0
        %2486 = vmatprep.mubr.f32.mxu0 %v1902
        %2487 = vmatmul.mubr.f32.gmra.mrb[0].mxu0 %v1845
        %v2488 = vpop.f32.mrb[0].mxu0
        %v2489 = vadd.f32 %v2344, %v2488
        %v2490 = vpop.f32.mrb[0].mxu0
        %2491 = vmatprep.mubr.f32.mxu0 %v1904
        %2492 = vmatmul.mubr.f32.gmra.mrb[0].mxu0 %v1847
        %v2493 = vpop.f32.mrb[0].mxu0
        %v2494 = vadd.f32 %v2349, %v2493
        %v2495 = vpop.f32.mrb[0].mxu0
        %2496 = vmatprep.mubr.f32.mxu0 %v1907
        %2497 = vmatmul.mubr.f32.gmra.mrb[0].mxu0 %v1850
        %v2498 = vpop.f32.mrb[0].mxu0
        %v2499 = vadd.f32 %v2354, %v2498
        %v2500 = vpop.f32.mrb[0].mxu0
        %2501 = vmatprep.mubr.f32.mxu0 %v1909
        %2502 = vmatmul.mubr.f32.gmra.mrb[0].mxu0 %v1852
        %v2503 = vpop.f32.mrb[0].mxu0
        %v2504 = vadd.f32 %v2359, %v2503
        %v2505 = vpop.f32.mrb[0].mxu0
        %2506 = vmatprep.mubr.f32.mxu0 %v1912
        %2507 = vmatmul.mubr.f32.gmra.mrb[0].mxu0 %v1855
        %v2508 = vpop.f32.mrb[0].mxu0
        %v2509 = vadd.f32 %v2364, %v2508
        %v2510 = vpop.f32.mrb[0].mxu0
        %2511 = vmatprep.mubr.f32.mxu0 %v1914
        %2512 = vmatmul.mubr.f32.gmra.mrb[0].mxu0 %v1857
        %v2513 = vpop.f32.mrb[0].mxu0
        %v2514 = vadd.f32 %v2369, %v2513
        %v2515 = vpop.f32.mrb[0].mxu0
        %2516 = vmatprep.mubr.f32.mxu0 %v1917
        %2517 = vmatmul.mubr.f32.gmra.mrb[0].mxu0 %v1860
        %v2518 = vpop.f32.mrb[0].mxu0
        %v2519 = vadd.f32 %v2374, %v2518
        %v2520 = vpop.f32.mrb[0].mxu0
        %2521 = vmatprep.mubr.f32.mxu0 %v1919
        %2522 = vmatmul.mubr.f32.gmra.mrb[0].mxu0 %v1862
        %v2523 = vpop.f32.mrb[0].mxu0
        %v2524 = vadd.f32 %v2379, %v2523
        %v2525 = vpop.f32.mrb[0].mxu0
        %2526 = vmatprep.mubr.f32.mxu0 %v1922
        %2527 = vmatmul.mubr.f32.gmra.mrb[0].mxu0 %v1865
        %v2528 = vpop.f32.mrb[0].mxu0
        %v2529 = vadd.f32 %v2384, %v2528
        %v2530 = vpop.f32.mrb[0].mxu0
        %2531 = vmatprep.mubr.f32.mxu0 %v1924
        %2532 = vmatmul.mubr.f32.gmra.mrb[0].mxu0 %v1867
        %v2533 = vpop.f32.mrb[0].mxu0
        %v2534 = vadd.f32 %v2389, %v2533
        %v2535 = vpop.f32.mrb[0].mxu0
        %2536 = vmatprep.mubr.f32.mxu0 %v1927
        %2537 = vmatmul.mubr.f32.gmra.mrb[0].mxu0 %v1870
        %v2538 = vpop.f32.mrb[0].mxu0
        %v2539 = vadd.f32 %v2394, %v2538
        %v2540 = vpop.f32.mrb[0].mxu0
        %2541 = vmatprep.mubr.f32.mxu0 %v1929
        %2542 = vmatmul.mubr.f32.gmra.mrb[0].mxu0 %v1872
        %v2543 = vpop.f32.mrb[0].mxu0
        %v2544 = vadd.f32 %v2399, %v2543
        %v2545 = vpop.f32.mrb[0].mxu0
        %2546 = vmatprep.mubr.f32.mxu0 %v1957
        %2547 = vmatmul.mubr.f32.gmra.mrb[0].mxu0 %v1950
        %v2548 = vpop.f32.mrb[0].mxu0
        %v2549 = vadd.f32 %v2404, %v2548
        %v2550 = vpop.f32.mrb[0].mxu0
        %2551 = vmatprep.mubr.f32.mxu0 %v1959
        %2552 = vmatmul.mubr.f32.gmra.mrb[0].mxu0 %v1952
        %v2553 = vpop.f32.mrb[0].mxu0
        %v2554 = vadd.f32 %v2409, %v2553
        %v2555 = vpop.f32.mrb[0].mxu0
        %2556 = vdwg.mxu0
        %2557 = vmatprep.subr.mxu0 0.0
        %2558 = vmatpush1.msra.mxu0 %v2074
        %2559 = vmatprep.subr.mxu0 0.0
        %2560 = vmatpush1.msra.mxu0 %v2075
        %2561 = vmatprep.subr.mxu0 0.0
        %2562 = vmatpush1.msra.mxu0 %v2076
        %2563 = vmatprep.subr.mxu0 0.0
        %2564 = vmatpush1.msra.mxu0 %v2077
        %2565 = vmatprep.subr.mxu0 0.0
        %2566 = vmatpush1.msra.mxu0 %v2078
        %2567 = vmatprep.subr.mxu0 0.0
        %2568 = vmatpush1.msra.mxu0 %v2079
        %2569 = vmatprep.subr.mxu0 0.0
        %2570 = vmatpush1.msra.mxu0 %v2080
        %2571 = vmatprep.subr.mxu0 0.0
        %2572 = vmatpush1.msra.mxu0 %v2081
        %2573 = vmatprep.subr.mxu0 0.0
        %2574 = vmatpush1.msra.mxu0 %v2082
        %2575 = vmatprep.subr.mxu0 0.0
        %2576 = vmatpush1.msra.mxu0 %v2083
        %2577 = vmatprep.subr.mxu0 0.0
        %2578 = vmatpush1.msra.mxu0 %v2084
        %2579 = vmatprep.subr.mxu0 0.0
        %2580 = vmatpush1.msra.mxu0 %v2085
        %2581 = vmatprep.subr.mxu0 0.0
        %2582 = vmatpush1.msra.mxu0 %v2086
        %2583 = vmatprep.subr.mxu0 0.0
        %2584 = vmatpush1.msra.mxu0 %v2087
        %2585 = vmatprep.subr.mxu0 0.0
        %2586 = vmatpush1.msra.mxu0 %v2088
        %2587 = vmatprep.subr.mxu0 0.0
        %2588 = vmatpush1.msra.mxu0 %v2089
        %2589 = vmatprep.subr.mxu0 0.0
        %2590 = vmatpush1.msra.mxu0 %v2090
        %2591 = vmatprep.subr.mxu0 0.0
        %2592 = vmatpush1.msra.mxu0 %v2091
        %2593 = vmatprep.subr.mxu0 0.0
        %2594 = vmatpush1.msra.mxu0 %v2092
        %2595 = vmatprep.subr.mxu0 0.0
        %2596 = vmatpush1.msra.mxu0 %v2093
        %2597 = vmatprep.subr.mxu0 0.0
        %2598 = vmatpush1.msra.mxu0 %v2094
        %2599 = vmatprep.subr.mxu0 0.0
        %2600 = vmatpush1.msra.mxu0 %v2095
        %2601 = vmatprep.subr.mxu0 0.0
        %2602 = vmatpush1.msra.mxu0 %v2096
        %2603 = vmatprep.subr.mxu0 0.0
        %2604 = vmatpush1.msra.mxu0 %v2097
        %2605 = vmatprep.subr.mxu0 0.0
        %2606 = vmatpush1.msra.mxu0 %v2098
        %2607 = vmatprep.subr.mxu0 0.0
        %2608 = vmatpush1.msra.mxu0 %v2099
        %2609 = vmatprep.subr.mxu0 0.0
        %2610 = vmatpush1.msra.mxu0 %v2100
        %2611 = vmatprep.subr.mxu0 0.0
        %2612 = vmatpush1.msra.mxu0 %v2101
        %2613 = vmatprep.subr.mxu0 0.0
        %2614 = vmatpush1.msra.mxu0 %v2102
        %2615 = vmatprep.subr.mxu0 0.0
        %2616 = vmatpush1.msra.mxu0 %v2103
        %2617 = vmatprep.subr.mxu0 0.0
        %2618 = vmatpush1.msra.mxu0 %v2104
        %2619 = vmatprep.subr.mxu0 0.0
        %2620 = vmatpush1.msra.mxu0 %v2105
        %2621 = vmatprep.mubr.f32.mxu0 %v1845
        %2622 = vmatmul.mubr.f32.gmra.mrb[0].mxu0 %v1798
        %v2623 = vpop.f32.mrb[0].mxu0
        %v2624 = vadd.f32 %v2479, %v2623
        %v2625 = vpop.f32.mrb[0].mxu0
        %2626 = vmatprep.mubr.f32.mxu0 %v1847
        %2627 = vmatmul.mubr.f32.gmra.mrb[0].mxu0 %v1744
        %v2628 = vpop.f32.mrb[0].mxu0
        %v2629 = vadd.f32 %v2484, %v2628
        %v2630 = vpop.f32.mrb[0].mxu0
        %2631 = vmatprep.mubr.f32.mxu0 %v1850
        %2632 = vmatmul.mubr.f32.gmra.mrb[0].mxu0 %v1799
        %v2633 = vpop.f32.mrb[0].mxu0
        %v2634 = vadd.f32 %v2489, %v2633
        %v2635 = vpop.f32.mrb[0].mxu0
        %2636 = vmatprep.mubr.f32.mxu0 %v1852
        %2637 = vmatmul.mubr.f32.gmra.mrb[0].mxu0 %v1747
        %v2638 = vpop.f32.mrb[0].mxu0
        %v2639 = vadd.f32 %v2494, %v2638
        %v2640 = vpop.f32.mrb[0].mxu0
        %2641 = vmatprep.mubr.f32.mxu0 %v1855
        %2642 = vmatmul.mubr.f32.gmra.mrb[0].mxu0 %v1800
        %v2643 = vpop.f32.mrb[0].mxu0
        %v2644 = vadd.f32 %v2499, %v2643
        %v2645 = vpop.f32.mrb[0].mxu0
        %2646 = vmatprep.mubr.f32.mxu0 %v1857
        %2647 = vmatmul.mubr.f32.gmra.mrb[0].mxu0 %v1750
        %v2648 = vpop.f32.mrb[0].mxu0
        %v2649 = vadd.f32 %v2504, %v2648
        %v2650 = vpop.f32.mrb[0].mxu0
        %2651 = vmatprep.mubr.f32.mxu0 %v1860
        %2652 = vmatmul.mubr.f32.gmra.mrb[0].mxu0 %v1801
        %v2653 = vpop.f32.mrb[0].mxu0
        %v2654 = vadd.f32 %v2509, %v2653
        %v2655 = vpop.f32.mrb[0].mxu0
        %2656 = vmatprep.mubr.f32.mxu0 %v1862
        %2657 = vmatmul.mubr.f32.gmra.mrb[0].mxu0 %v1753
        %v2658 = vpop.f32.mrb[0].mxu0
        %v2659 = vadd.f32 %v2514, %v2658
        %v2660 = vpop.f32.mrb[0].mxu0
        %2661 = vmatprep.mubr.f32.mxu0 %v1865
        %2662 = vmatmul.mubr.f32.gmra.mrb[0].mxu0 %v1802
        %v2663 = vpop.f32.mrb[0].mxu0
        %v2664 = vadd.f32 %v2519, %v2663
        %v2665 = vpop.f32.mrb[0].mxu0
        %2666 = vmatprep.mubr.f32.mxu0 %v1867
        %2667 = vmatmul.mubr.f32.gmra.mrb[0].mxu0 %v1756
        %v2668 = vpop.f32.mrb[0].mxu0
        %v2669 = vadd.f32 %v2524, %v2668
        %v2670 = vpop.f32.mrb[0].mxu0
        %2671 = vmatprep.mubr.f32.mxu0 %v1870
        %2672 = vmatmul.mubr.f32.gmra.mrb[0].mxu0 %v1803
        %v2673 = vpop.f32.mrb[0].mxu0
        %v2674 = vadd.f32 %v2529, %v2673
        %v2675 = vpop.f32.mrb[0].mxu0
        %2676 = vmatprep.mubr.f32.mxu0 %v1872
        %2677 = vmatmul.mubr.f32.gmra.mrb[0].mxu0 %v1759
        %v2678 = vpop.f32.mrb[0].mxu0
        %v2679 = vadd.f32 %v2534, %v2678
        %v2680 = vpop.f32.mrb[0].mxu0
        %2681 = vmatprep.mubr.f32.mxu0 %v1950
        %2682 = vmatmul.mubr.f32.gmra.mrb[0].mxu0 %v1804
        %v2683 = vpop.f32.mrb[0].mxu0
        %v2684 = vadd.f32 %v2539, %v2683
        %v2685 = vpop.f32.mrb[0].mxu0
        %2686 = vmatprep.mubr.f32.mxu0 %v1952
        %2687 = vmatmul.mubr.f32.gmra.mrb[0].mxu0 %v1762
        %v2688 = vpop.f32.mrb[0].mxu0
        %v2689 = vadd.f32 %v2544, %v2688
        %v2690 = vpop.f32.mrb[0].mxu0
        %2691 = vmatprep.mubr.f32.mxu0 %v1966
        %2692 = vmatmul.mubr.f32.gmra.mrb[0].mxu0 %v1805
        %v2693 = vpop.f32.mrb[0].mxu0
        %v2694 = vadd.f32 %v2549, %v2693
        %v2695 = vpop.f32.mrb[0].mxu0
        %2696 = vmatprep.mubr.f32.mxu0 %v1968
        %2697 = vmatmul.mubr.f32.gmra.mrb[0].mxu0 %v1765
        %v2698 = vpop.f32.mrb[0].mxu0
        %v2699 = vadd.f32 %v2554, %v2698
        %v2700 = vpop.f32.mrb[0].mxu0
        %2701 = vdwg.mxu0
        %2702 = vmatprep.subr.mxu0 0.0
        %2703 = vmatpush1.msra.mxu0 %v2106
        %2704 = vmatprep.subr.mxu0 0.0
        %2705 = vmatpush1.msra.mxu0 %v2107
        %2706 = vmatprep.subr.mxu0 0.0
        %2707 = vmatpush1.msra.mxu0 %v2108
        %2708 = vmatprep.subr.mxu0 0.0
        %2709 = vmatpush1.msra.mxu0 %v2109
        %2710 = vmatprep.subr.mxu0 0.0
        %2711 = vmatpush1.msra.mxu0 %v2110
        %2712 = vmatprep.subr.mxu0 0.0
        %2713 = vmatpush1.msra.mxu0 %v2111
        %2714 = vmatprep.subr.mxu0 0.0
        %2715 = vmatpush1.msra.mxu0 %v2112
        %2716 = vmatprep.subr.mxu0 0.0
        %2717 = vmatpush1.msra.mxu0 %v2113
        %2718 = vmatprep.subr.mxu0 0.0
        %2719 = vmatpush1.msra.mxu0 %v2114
        %2720 = vmatprep.subr.mxu0 0.0
        %2721 = vmatpush1.msra.mxu0 %v2115
        %2722 = vmatprep.subr.mxu0 0.0
        %2723 = vmatpush1.msra.mxu0 %v2116
        %2724 = vmatprep.subr.mxu0 0.0
        %2725 = vmatpush1.msra.mxu0 %v2117
        %2726 = vmatprep.subr.mxu0 0.0
        %2727 = vmatpush1.msra.mxu0 %v2118
        %2728 = vmatprep.subr.mxu0 0.0
        %2729 = vmatpush1.msra.mxu0 %v2119
        %2730 = vmatprep.subr.mxu0 0.0
        %2731 = vmatpush1.msra.mxu0 %v2120
        %2732 = vmatprep.subr.mxu0 0.0
        %2733 = vmatpush1.msra.mxu0 %v2121
        %2734 = vmatprep.subr.mxu0 0.0
        %2735 = vmatpush1.msra.mxu0 0.0
        %2736 = vmatprep.subr.mxu0 0.0
        %2737 = vmatpush1.msra.mxu0 0.0
        %2738 = vmatprep.subr.mxu0 0.0
        %2739 = vmatpush1.msra.mxu0 0.0
        %2740 = vmatprep.subr.mxu0 0.0
        %2741 = vmatpush1.msra.mxu0 0.0
        %2742 = vmatprep.subr.mxu0 0.0
        %2743 = vmatpush1.msra.mxu0 0.0
        %2744 = vmatprep.subr.mxu0 0.0
        %2745 = vmatpush1.msra.mxu0 0.0
        %2746 = vmatprep.subr.mxu0 0.0
        %2747 = vmatpush1.msra.mxu0 0.0
        %2748 = vmatprep.subr.mxu0 0.0
        %2749 = vmatpush1.msra.mxu0 0.0
        %2750 = vmatprep.subr.mxu0 0.0
        %2751 = vmatpush1.msra.mxu0 0.0
        %2752 = vmatprep.subr.mxu0 0.0
        %2753 = vmatpush1.msra.mxu0 0.0
        %2754 = vmatprep.subr.mxu0 0.0
        %2755 = vmatpush1.msra.mxu0 0.0
        %2756 = vmatprep.subr.mxu0 0.0
        %2757 = vmatpush1.msra.mxu0 0.0
        %2758 = vmatprep.subr.mxu0 0.0
        %2759 = vmatpush1.msra.mxu0 0.0
        %2760 = vmatprep.subr.mxu0 0.0
        %2761 = vmatpush1.msra.mxu0 0.0
        %2762 = vmatprep.subr.mxu0 0.0
        %2763 = vmatpush1.msra.mxu0 0.0
        %2764 = vmatprep.subr.mxu0 0.0
        %2765 = vmatpush1.msra.mxu0 0.0
        %2766 = vmatprep.mubr.f32.mxu0 0.0
        %2767 = vmatmul.mubr.f32.gmra.mrb[0].mxu0 %v1902
        %v2768 = vpop.f32.mrb[0].mxu0
        %v2769 = vadd.f32 %v2624, %v2768
        %v2770 = vpop.f32.mrb[0].mxu0
        %2771 = vmatprep.mubr.f32.mxu0 0.0
        %2772 = vmatmul.mubr.f32.gmra.mrb[0].mxu0 %v1904
        %v2773 = vpop.f32.mrb[0].mxu0
        %v2774 = vadd.f32 %v2629, %v2773
        %v2775 = vpop.f32.mrb[0].mxu0
        %2776 = vmatprep.mubr.f32.mxu0 0.0
        %2777 = vmatmul.mubr.f32.gmra.mrb[0].mxu0 %v1907
        %v2778 = vpop.f32.mrb[0].mxu0
        %v2779 = vadd.f32 %v2634, %v2778
        %v2780 = vpop.f32.mrb[0].mxu0
        %2781 = vmatprep.mubr.f32.mxu0 0.0
        %2782 = vmatmul.mubr.f32.gmra.mrb[0].mxu0 %v1909
        %v2783 = vpop.f32.mrb[0].mxu0
        %v2784 = vadd.f32 %v2639, %v2783
        %v2785 = vpop.f32.mrb[0].mxu0
        %2786 = vmatprep.mubr.f32.mxu0 0.0
        %2787 = vmatmul.mubr.f32.gmra.mrb[0].mxu0 %v1912
        %v2788 = vpop.f32.mrb[0].mxu0
        %v2789 = vadd.f32 %v2644, %v2788
        %v2790 = vpop.f32.mrb[0].mxu0
        %2791 = vmatprep.mubr.f32.mxu0 0.0
        %2792 = vmatmul.mubr.f32.gmra.mrb[0].mxu0 %v1914
        %v2793 = vpop.f32.mrb[0].mxu0
        %v2794 = vadd.f32 %v2649, %v2793
        %v2795 = vpop.f32.mrb[0].mxu0
        %2796 = vmatprep.mubr.f32.mxu0 0.0
        %2797 = vmatmul.mubr.f32.gmra.mrb[0].mxu0 %v1917
        %v2798 = vpop.f32.mrb[0].mxu0
        %v2799 = vadd.f32 %v2654, %v2798
        %v2800 = vpop.f32.mrb[0].mxu0
        %2801 = vmatprep.mubr.f32.mxu0 0.0
        %2802 = vmatmul.mubr.f32.gmra.mrb[0].mxu0 %v1919
        %v2803 = vpop.f32.mrb[0].mxu0
        %v2804 = vadd.f32 %v2659, %v2803
        %v2805 = vpop.f32.mrb[0].mxu0
        %2806 = vmatprep.mubr.f32.mxu0 0.0
        %2807 = vmatmul.mubr.f32.gmra.mrb[0].mxu0 %v1922
        %v2808 = vpop.f32.mrb[0].mxu0
        %v2809 = vadd.f32 %v2664, %v2808
        %v2810 = vpop.f32.mrb[0].mxu0
        %2811 = vmatprep.mubr.f32.mxu0 0.0
        %2812 = vmatmul.mubr.f32.gmra.mrb[0].mxu0 %v1924
        %v2813 = vpop.f32.mrb[0].mxu0
        %v2814 = vadd.f32 %v2669, %v2813
        %v2815 = vpop.f32.mrb[0].mxu0
        %2816 = vmatprep.mubr.f32.mxu0 0.0
        %2817 = vmatmul.mubr.f32.gmra.mrb[0].mxu0 %v1927
        %v2818 = vpop.f32.mrb[0].mxu0
        %v2819 = vadd.f32 %v2674, %v2818
        %v2820 = vpop.f32.mrb[0].mxu0
        %2821 = vmatprep.mubr.f32.mxu0 0.0
        %2822 = vmatmul.mubr.f32.gmra.mrb[0].mxu0 %v1929
        %v2823 = vpop.f32.mrb[0].mxu0
        %v2824 = vadd.f32 %v2679, %v2823
        %v2825 = vpop.f32.mrb[0].mxu0
        %2826 = vmatprep.mubr.f32.mxu0 0.0
        %2827 = vmatmul.mubr.f32.gmra.mrb[0].mxu0 %v1957
        %v2828 = vpop.f32.mrb[0].mxu0
        %v2829 = vadd.f32 %v2684, %v2828
        %v2830 = vpop.f32.mrb[0].mxu0
        %2831 = vmatprep.mubr.f32.mxu0 0.0
        %2832 = vmatmul.mubr.f32.gmra.mrb[0].mxu0 %v1959
        %v2833 = vpop.f32.mrb[0].mxu0
        %v2834 = vadd.f32 %v2689, %v2833
        %v2835 = vpop.f32.mrb[0].mxu0
        %2836 = vmatprep.mubr.f32.mxu0 0.0
        %2837 = vmatmul.mubr.f32.gmra.mrb[0].mxu0 %v1973
        %v2838 = vpop.f32.mrb[0].mxu0
        %v2839 = vadd.f32 %v2694, %v2838
        %v2840 = vpop.f32.mrb[0].mxu0
        %2841 = vmatprep.mubr.f32.mxu0 0.0
        %2842 = vmatmul.mubr.f32.gmra.mrb[0].mxu0 %v1975
        %v2843 = vpop.f32.mrb[0].mxu0
        %v2844 = vadd.f32 %v2699, %v2843
        %v2845 = vpop.f32.mrb[0].mxu0
        %2846 = vdwg.mxu0
        %v2847 = vld [vmem:[#allocation12] sm:$0x1]
        %v2849 = vlaneseq
        %v2850 = vshrl.u32 %v2849, 7
        %v2851 = vsub.s32 0, %v2850
        %v2852 = vrot.slane %v2847, %v2851
        %v2854 = vmul.f32 %v2769, %v2852
        %v2855 = vmul.f32 %v2774, %v2852
        %v2856 = vmul.f32 %v2779, %v2852
        %v2857 = vmul.f32 %v2784, %v2852
        %v2858 = vmul.f32 %v2789, %v2852
        %v2859 = vmul.f32 %v2794, %v2852
        %v2860 = vmul.f32 %v2799, %v2852
        %v2861 = vmul.f32 %v2804, %v2852
        %v2862 = vmul.f32 %v2809, %v2852
        %v2863 = vmul.f32 %v2814, %v2852
        %v2864 = vmul.f32 %v2819, %v2852
        %v2865 = vmul.f32 %v2824, %v2852
        %v2866 = vmul.f32 %v2829, %v2852
        %v2867 = vmul.f32 %v2834, %v2852
        %v2868 = vmul.f32 %v2839, %v2852
        %v2869 = vmul.f32 %v2844, %v2852
        %v2870 = vld [vmem:[#allocation13] sm:$0x1]
        %v2872 = vlaneseq
        %v2873 = vshrl.u32 %v2872, 7
        %v2874 = vsub.s32 0, %v2873
        %v2875 = vrot.slane %v2870, %v2874
        %v2877 = vadd.f32 %v2854, %v2875
        %v2878 = vadd.f32 %v2855, %v2875
        %v2879 = vadd.f32 %v2856, %v2875
        %v2880 = vadd.f32 %v2857, %v2875
        %v2881 = vadd.f32 %v2858, %v2875
        %v2882 = vadd.f32 %v2859, %v2875
        %v2883 = vadd.f32 %v2860, %v2875
        %v2884 = vadd.f32 %v2861, %v2875
        %v2885 = vadd.f32 %v2862, %v2875
        %v2886 = vadd.f32 %v2863, %v2875
        %v2887 = vadd.f32 %v2864, %v2875
        %v2888 = vadd.f32 %v2865, %v2875
        %v2889 = vadd.f32 %v2866, %v2875
        %v2890 = vadd.f32 %v2867, %v2875
        %v2891 = vadd.f32 %v2868, %v2875
        %v2892 = vadd.f32 %v2869, %v2875
        %v2893 = vmax.f32 %v2877, 0.0
        %v2894 = vmax.f32 %v2878, 0.0
        %v2895 = vmax.f32 %v2879, 0.0
        %v2896 = vmax.f32 %v2880, 0.0
        %v2897 = vmax.f32 %v2881, 0.0
        %v2898 = vmax.f32 %v2882, 0.0
        %v2899 = vmax.f32 %v2883, 0.0
        %v2900 = vmax.f32 %v2884, 0.0
        %v2901 = vmax.f32 %v2885, 0.0
        %v2902 = vmax.f32 %v2886, 0.0
        %v2903 = vmax.f32 %v2887, 0.0
        %v2904 = vmax.f32 %v2888, 0.0
        %v2905 = vmax.f32 %v2889, 0.0
        %v2906 = vmax.f32 %v2890, 0.0
        %v2907 = vmax.f32 %v2891, 0.0
        %v2908 = vmax.f32 %v2892, 0.0
        %v2909 = vld [vmem:[%s462 + $0x1] sm:$0xff]
        %v2910 = vld [vmem:[%s462 + $0x9] sm:$0xff]
        %v2911 = vld [vmem:[%s462 + $0x19] sm:$0xff]
        %v2912 = vld [vmem:[%s462 + $0x21] sm:$0xff]
        %v2913 = vld [vmem:[%s462 + $0x31] sm:$0xff]
        %v2914 = vld [vmem:[%s462 + $0x39] sm:$0xff]
        %v2915 = vld [vmem:[%s462 + $0x49] sm:$0xff]
        %v2916 = vld [vmem:[%s462 + $0x51] sm:$0xff]
        %v2917 = vld [vmem:[%s462 + $0x61] sm:$0xff]
        %v2918 = vld [vmem:[%s462 + $0x69] sm:$0xff]
        %v2919 = vld [vmem:[%s462 + $0x79] sm:$0xff]
        %v2920 = vld [vmem:[%s462 + $0x81] sm:$0xff]
        %v2921 = vld [vmem:[%s462 + $0x91] sm:$0xff]
        %v2922 = vld [vmem:[%s462 + $0x99] sm:$0xff]
        %v2923 = vld [vmem:[%s462 + $0xa9] sm:$0xff]
        %v2924 = vld [vmem:[%s462 + $0xb1] sm:$0xff]
        %v2925 = vadd.f32 %v2909, %v2893
        %v2926 = vadd.f32 %v2910, %v2894
        %v2927 = vadd.f32 %v2911, %v2895
        %v2928 = vadd.f32 %v2912, %v2896
        %v2929 = vadd.f32 %v2913, %v2897
        %v2930 = vadd.f32 %v2914, %v2898
        %v2931 = vadd.f32 %v2915, %v2899
        %v2932 = vadd.f32 %v2916, %v2900
        %v2933 = vadd.f32 %v2917, %v2901
        %v2934 = vadd.f32 %v2918, %v2902
        %v2935 = vadd.f32 %v2919, %v2903
        %v2936 = vadd.f32 %v2920, %v2904
        %v2937 = vadd.f32 %v2921, %v2905
        %v2938 = vadd.f32 %v2922, %v2906
        %v2939 = vadd.f32 %v2923, %v2907
        %v2940 = vadd.f32 %v2924, %v2908
        %2941 = vst [vmem:[%s324] sm:$0xff] %v2925
        %2942 = vst [vmem:[%s324 + $0x8] sm:$0xff] %v2926
        %2943 = vst [vmem:[%s324 + $0x10] sm:$0xff] %v2927
        %2944 = vst [vmem:[%s324 + $0x18] sm:$0xff] %v2928
        %2945 = vst [vmem:[%s324 + $0x20] sm:$0xff] %v2929
        %2946 = vst [vmem:[%s324 + $0x28] sm:$0xff] %v2930
        %2947 = vst [vmem:[%s324 + $0x30] sm:$0xff] %v2931
        %2948 = vst [vmem:[%s324 + $0x38] sm:$0xff] %v2932
        %2949 = vst [vmem:[%s324 + $0x40] sm:$0xff] %v2933
        %2950 = vst [vmem:[%s324 + $0x48] sm:$0xff] %v2934
        %2951 = vst [vmem:[%s324 + $0x50] sm:$0xff] %v2935
        %2952 = vst [vmem:[%s324 + $0x58] sm:$0xff] %v2936
        %2953 = vst [vmem:[%s324 + $0x60] sm:$0xff] %v2937
        %2954 = vst [vmem:[%s324 + $0x68] sm:$0xff] %v2938
        %2955 = vst [vmem:[%s324 + $0x70] sm:$0xff] %v2939
        %2956 = vst [vmem:[%s324 + $0x78] sm:$0xff] %v2940
        %s2957 = sand.u32 %s173, 1
        %s2958 = scalar_lea.sflag [#allocation6], %s2957
        %s2959 = sand.u32 %s173, 1
        %s2960 = smul.addr %s2959, 128
        %s2961 = scalar_lea.vmem [#allocation15], %s2960
        // Predicated region
        $region69: #{tpu_custom_call.1} parent=43 // pred_check
          %p2962 = pneg %p183
        $region70: #{tpu_custom_call.1} parent=43 // pred_check_branch
          %2964 = sbr.rel (%p2962) target = $region72
        $region71: #{tpu_custom_call.1} parent=43 // pred_region
          %s2965 = smul.u32 8, %s30
          %s2967 = ssub.s32 2048, 2048
          %2968 = vsyncadd %s2958, %s2967
          %s2969 = smul.addr %s2965, 2
          %s2970 = smul.addr %s29, 32
          %s2971 = sadd.s32 %s2969, %s2970
          %s2972 = smul.addr %s2971, 128
          %s2973 = scalar_lea.hbm %s7, %s2972
          %s2974 = sshll.u32 %s2961, 4
          %s2975 = int_to_ptr.vmem [resolvable:$true] %s2974
          %2980 = dma.vmem_to_hbm [thread:$0]  %s2975, 2048, %s2973, %s2958, 128, 128, 8
        $region72: #{tpu_custom_call.1} parent=43 // pred_fallthru
          _
      $region44: #{tpu_custom_call.1} parent=5 // pred_fallthru
        _
      %p2981 = scmp.le.s32.totalorder 2, %s20
      // Predicated region
      $region73: #{tpu_custom_call.1} parent=5 // pred_check
        %p2982 = pneg %p2981
      $region74: #{tpu_custom_call.1} parent=5 // pred_check_branch
        %2984 = sbr.rel (%p2982) target = $region76
      $region75: #{tpu_custom_call.1} parent=5 // pred_region
        %s2985 = ssub.s32 %s20, 2
        // Predicated region
        $region77: #{tpu_custom_call.1} parent=75 // pred_check
          %p2986 = pneg %p189
        $region78: #{tpu_custom_call.1} parent=75 // pred_check_branch
          %2988 = sbr.rel (%p2986) target = $region80
        $region79: #{tpu_custom_call.1} parent=75 // pred_region
          %s2989 = sand.u32 %s174, 1
          %s2990 = scalar_lea.sflag [#allocation6], %s2989
          %s2991 = sand.u32 %s174, 1
          %s2992 = smul.addr %s2991, 128
          %s2993 = scalar_lea.vmem [#allocation15], %s2992
          %2994 = dma.done %s2990, 2048
        $region80: #{tpu_custom_call.1} parent=75 // pred_fallthru
          _
      $region76: #{tpu_custom_call.1} parent=5 // pred_fallthru
        _
    $region6: #{tpu_custom_call.1} parent=1 // loop_footer
      %s24 = sadd.s32 1, %s20
    $region7: #{tpu_custom_call.1} parent=1 // loop_footer_branch
      %19 = sbr.rel target = $region3
    $region8: #{tpu_custom_call.1} parent=1 // loop_exit
      _
    %2995 = vsyncpa [#allocation5], 1
    %s2996 = scalar_lea.sflag [#allocation5], 1
    %2997 = vsyncpa %s2996, 1
    %2998 = vsyncpa [#allocation8], 1
    %2999 = vsyncpa [#allocation11], 1
    %3000 = vsyncpa [#allocation14], 1
    %3001 = vsyncpa [#allocation6], 1
    %s3002 = scalar_lea.sflag [#allocation6], 1
    %3003 = vsyncpa %s3002, 1
  %3004 = vsyncmov [#allocation3]
  %s3005 = vpop.sfrf %3004
  %p3006 = scmp.eq.s32.totalorder %s3005, 0
  %p3007 = pneg %p3006
  %3009 = shalt.err (%p3007)

</llo_original>
